<compile_context>
chip_gen: v7x
topology: tpu7x:2x2x1
jax: 0.10.0
libtpu: 0.0.40
codegen_flags: <defaults>
</compile_context>

<pallas_src>
import math
import functools

import jax
import jax.numpy as jnp
from jax import lax
from jax.experimental import pallas as pl
from jax.experimental.pallas import tpu as pltpu


# Optional perf knobs. Defaults keep exact f32 semantics so the correctness check below
# can use a tight 1e-4 tolerance. Flip on v6e/v7x for extra MXU throughput (the check
# tolerance is loosened automatically).
USE_BF16_MATMUL = False     # bf16 MXU operands, f32 accumulation
APPROX_RECIPROCAL = False   # softmax denominator via EUP approximate reciprocal


def _mm(a, b):
    """Matmul with optional bf16 operands, always f32 accumulation."""
    if USE_BF16_MATMUL:
        a = a.astype(jnp.bfloat16)
        b = b.astype(jnp.bfloat16)
    return jnp.dot(a, b, preferred_element_type=jnp.float32)


def _mm_t(a, b):
    """a @ b.T via dot_general (contract last dims) — no XLU transpose."""
    if USE_BF16_MATMUL:
        a = a.astype(jnp.bfloat16)
        b = b.astype(jnp.bfloat16)
    return lax.dot_general(a, b, (((1,), (1,)), ((), ())),
                           preferred_element_type=jnp.float32)


# ---------------------------------------------------------------------------
# Fused kernel: one grid step == one batch element, whole block in-VMEM
# ---------------------------------------------------------------------------

def _two_way_block_kernel(q_ref, k_ref, t_ref,
                          wq_ref, bq_ref, wkv_ref, bkv_ref, wo_ref, bo_ref,
                          lng_ref, lnb_ref,
                          w1_ref, b1_ref, w2_ref, b2_ref,
                          q_out_ref, k_out_ref, t_out_ref):

    def softmax_rows(s):
        s = s - jnp.max(s, axis=-1, keepdims=True)
        p = jnp.exp(s)
        denom = jnp.sum(p, axis=-1, keepdims=True)
        return p * pl.reciprocal(denom, approx=APPROX_RECIPROCAL)

    def attend(x_q, x_kv, i):
        # Fused projections: wq is [Wq/sqrt(D) | 0] (D,2D), wkv is [Wk | Wv] (D,2D),
        # wo is [0 ; Wo] (2D,D). The zero halves make every step a plain matmul
        # (no lane-dim slicing/concat needed inside the kernel), and the folded
        # 1/sqrt(D) removes the per-score scale.
        qp = _mm(x_q, wq_ref[i]) + bq_ref[i]         # (Sq, 2D), V half == 0
        kvp = _mm(x_kv, wkv_ref[i]) + bkv_ref[i]     # (Sk, 2D) = [K | V]
        s = _mm_t(qp, kvp)                           # == (Q/sqrt(D)) @ K.T
        p = softmax_rows(s)
        ctx = _mm(p, kvp)                            # (Sq, 2D) = [P@K | P@V]
        return _mm(ctx, wo_ref[i]) + bo_ref[i]       # == (P@V) @ Wo + bo

    def layernorm(x, i):
        mu = jnp.mean(x, axis=-1, keepdims=True)
        var = jnp.mean((x - mu) ** 2, axis=-1, keepdims=True)
        return (x - mu) * lax.rsqrt(var + 1e-5) * lng_ref[i] + lnb_ref[i]

    q = q_ref[0]        # (Nq, D)
    k = k_ref[0]        # (Nk, D)
    t = t_ref[0]        # (Nt, D)

    # 1) self attention on queries (no residual, as in the module) + norm1
    q = layernorm(attend(q, q, 0), 0)

    # 2) cross attention tokens -> image, residual, norm2
    q = layernorm(q + attend(q, k, 1), 1)

    # 3) MLP (fc2(relu(fc1(x)))), residual, norm3
    h = jnp.maximum(_mm(q, w1_ref[...]) + b1_ref[...], 0.0)
    q = layernorm(q + _mm(h, w2_ref[...]) + b2_ref[...], 2)

    # 4) cross attention image -> tokens, residual, norm4
    k = layernorm(k + attend(k, q, 2), 3)

    # 5) query_token attends over concat(queries, keys): split-softmax form so the
    #    concatenation never materializes — score/value contributions of the two
    #    blocks are combined in-register.
    tp = _mm(t, wq_ref[3]) + bq_ref[3]               # (Nt, 2D), V half == 0 (pre-scaled)
    kv_q = _mm(q, wkv_ref[3]) + bkv_ref[3]           # (Nq, 2D)
    kv_k = _mm(k, wkv_ref[3]) + bkv_ref[3]           # (Nk, 2D)
    s_q = _mm_t(tp, kv_q)                            # (Nt, Nq)
    s_k = _mm_t(tp, kv_k)                            # (Nt, Nk)
    m = jnp.maximum(jnp.max(s_q, axis=-1, keepdims=True),
                    jnp.max(s_k, axis=-1, keepdims=True))
    p_q = jnp.exp(s_q - m)
    p_k = jnp.exp(s_k - m)
    denom = (jnp.sum(p_q, axis=-1, keepdims=True)
             + jnp.sum(p_k, axis=-1, keepdims=True))
    inv = pl.reciprocal(denom, approx=APPROX_RECIPROCAL)
    ctx = (_mm(p_q, kv_q) + _mm(p_k, kv_k)) * inv    # (Nt, 2D)
    t = layernorm(_mm(ctx, wo_ref[3]) + bo_ref[3], 4)

    # TODO(synk): outputs keep D=32 lanes (masked vst); a lane-dense (.., S*D/128, 128)
    # store layout would need an in-kernel sublane->lane reshape, skipped for robustness.
    q_out_ref[0] = q
    k_out_ref[0] = k
    t_out_ref[0] = t


# ---------------------------------------------------------------------------
# Wrapper: single pallas_call for the whole block
# ---------------------------------------------------------------------------

def two_way_attention_block(queries, keys, query_token, packed):
    B, Nq, D = queries.shape
    Nk = keys.shape[1]
    Nt = query_token.shape[1]
    H = packed["w1"].shape[1]
    D2 = 2 * D

    def full(shape):
        ndim = len(shape)
        return pl.BlockSpec(shape, lambda b: (0,) * ndim)

    def seq_spec(S):
        return pl.BlockSpec((1, S, D), lambda b: (b, 0, 0))

    out_shapes = (
        jax.ShapeDtypeStruct((B, Nq, D), jnp.float32),
        jax.ShapeDtypeStruct((B, Nk, D), jnp.float32),
        jax.ShapeDtypeStruct((B, Nt, D), jnp.float32),
    )

    return pl.pallas_call(
        _two_way_block_kernel,
        out_shape=out_shapes,
        grid=(B,),
        in_specs=[
            seq_spec(Nq), seq_spec(Nk), seq_spec(Nt),
            full((4, D, D2)), full((4, 1, D2)),     # wq_pad (pre-scaled), bq_pad
            full((4, D, D2)), full((4, 1, D2)),     # wkv,    bkv
            full((4, D2, D)), full((4, 1, D)),      # wo_pad, bo
            full((5, 1, D)), full((5, 1, D)),       # LN gamma, beta
            full((D, H)), full((1, H)),             # MLP fc1
            full((H, D)), full((1, D)),             # MLP fc2
        ],
        out_specs=[seq_spec(Nq), seq_spec(Nk), seq_spec(Nt)],
        compiler_params=pltpu.CompilerParams(
            dimension_semantics=("parallel",)),
    )(queries, keys, query_token,
      packed["wq"], packed["bq"], packed["wkv"], packed["bkv"],
      packed["wo"], packed["bo"], packed["ln_g"], packed["ln_b"],
      packed["w1"], packed["b1"], packed["w2"], packed["b2"])


# ---------------------------------------------------------------------------
# Parameter packing (one-time, outside the kernel)
# ---------------------------------------------------------------------------

_ATTN_ORDER = ("self_attn", "cross_t2i", "cross_i2t", "cross_query")


def pack_params(params):
    D = params["self_attn"][0].shape[0]
    zero_w = jnp.zeros((D, D), jnp.float32)
    zero_b = jnp.zeros((1, D), jnp.float32)
    scale = 1.0 / math.sqrt(D)   # folded into Q projection (one-time)

    wq_l, bq_l, wkv_l, bkv_l, wo_l, bo_l = [], [], [], [], [], []
    for name in _ATTN_ORDER:
        wq, bq, wk, bk, wv, bv, wo, bo = params[name]
        wq_l.append(jnp.concatenate([wq * scale, zero_w], axis=1))   # (D, 2D)
        bq_l.append(jnp.concatenate([bq * scale, zero_b], axis=1))   # (1, 2D)
        wkv_l.append(jnp.concatenate([wk, wv], axis=1))              # (D, 2D)
        bkv_l.append(jnp.concatenate([bk, bv], axis=1))              # (1, 2D)
        wo_l.append(jnp.concatenate([zero_w, wo], axis=0))           # (2D, D)
        bo_l.append(bo)                                              # (1, D)

    w1, b1, w2, b2 = params["mlp"]
    return {
        "wq": jnp.stack(wq_l), "bq": jnp.stack(bq_l),
        "wkv": jnp.stack(wkv_l), "bkv": jnp.stack(bkv_l),
        "wo": jnp.stack(wo_l), "bo": jnp.stack(bo_l),
        "ln_g": jnp.stack([params[f"norm{i}"][0] for i in range(1, 6)]),
        "ln_b": jnp.stack([params[f"norm{i}"][1] for i in range(1, 6)]),
        "w1": w1, "b1": b1, "w2": w2, "b2": b2,
    }


# ---------------------------------------------------------------------------
# Pure-JAX reference (mirrors the PyTorch forward)
# ---------------------------------------------------------------------------

def _attn_ref(q, k, v, params):
    wq, bq, wk, bk, wv, bv, wo, bo = params
    qp = q @ wq + bq
    kp = k @ wk + bk
    vp = v @ wv + bv
    d = q.shape[-1]
    s = jnp.einsum("bqd,bkd->bqk", qp, kp) / math.sqrt(d)
    p = jax.nn.softmax(s, axis=-1)
    return jnp.einsum("bqk,bkd->bqd", p, vp) @ wo + bo


def _ln_ref(x, g, b):
    mu = jnp.mean(x, axis=-1, keepdims=True)
    var = jnp.mean((x - mu) ** 2, axis=-1, keepdims=True)
    return (x - mu) / jnp.sqrt(var + 1e-5) * g + b


def _mlp_ref(x, params):
    w1, b1, w2, b2 = params
    return jnp.maximum(x @ w1 + b1, 0.0) @ w2 + b2


def two_way_ref(queries, keys, query_token, params):
    queries = _ln_ref(_attn_ref(queries, queries, queries, params["self_attn"]), *params["norm1"])
    queries = _ln_ref(queries + _attn_ref(queries, keys, keys, params["cross_t2i"]), *params["norm2"])
    queries = _ln_ref(queries + _mlp_ref(queries, params["mlp"]), *params["norm3"])
    keys = _ln_ref(keys + _attn_ref(keys, queries, queries, params["cross_i2t"]), *params["norm4"])
    kv = jnp.concatenate([queries, keys], axis=1)
    query_token = _ln_ref(_attn_ref(query_token, kv, kv, params["cross_query"]), *params["norm5"])
    return queries, keys, query_token


# ---------------------------------------------------------------------------
# Deterministic parameter construction
# ---------------------------------------------------------------------------

def _init_linear(key, d_in, d_out):
    kw, kb = jax.random.split(key)
    bound = 1.0 / math.sqrt(d_in)
    w = jax.random.uniform(kw, (d_in, d_out), jnp.float32, -bound, bound)
    b = jax.random.uniform(kb, (1, d_out), jnp.float32, -bound, bound)
    return w, b


def _init_attention(key, d):
    keys = jax.random.split(key, 4)
    wq, bq = _init_linear(keys[0], d, d)
    wk, bk = _init_linear(keys[1], d, d)
    wv, bv = _init_linear(keys[2], d, d)
    wo, bo = _init_linear(keys[3], d, d)
    return (wq, bq, wk, bk, wv, bv, wo, bo)


def _init_layernorm(d):
    return (jnp.ones((1, d), jnp.float32), jnp.zeros((1, d), jnp.float32))


def make_params(key, embedding_dim, mlp_dim):
    ks = jax.random.split(key, 7)
    w1, b1 = _init_linear(ks[5], embedding_dim, mlp_dim)
    w2, b2 = _init_linear(ks[6], mlp_dim, embedding_dim)
    return {
        "self_attn":   _init_attention(ks[0], embedding_dim),
        "cross_t2i":   _init_attention(ks[1], embedding_dim),
        "cross_i2t":   _init_attention(ks[2], embedding_dim),
        "cross_query": _init_attention(ks[3], embedding_dim),
        "mlp": (w1, b1, w2, b2),
        "norm1": _init_layernorm(embedding_dim),
        "norm2": _init_layernorm(embedding_dim),
        "norm3": _init_layernorm(embedding_dim),
        "norm4": _init_layernorm(embedding_dim),
        "norm5": _init_layernorm(embedding_dim),
    }


# ---------------------------------------------------------------------------
# Main
# ---------------------------------------------------------------------------

if __name__ == "__main__":
    B = 2
    EMBED_DIM = 32
    NUM_HEADS = 4          # present in the PyTorch __init__ but unused in forward
    MLP_DIM = 64
    N_QUERIES = 8
    N_KEYS = 16
    N_TOKEN = 4

    key = jax.random.PRNGKey(0)
    k_q, k_k, k_t, k_p = jax.random.split(key, 4)

    queries = jax.random.normal(k_q, (B, N_QUERIES, EMBED_DIM), jnp.float32)
    keys = jax.random.normal(k_k, (B, N_KEYS, EMBED_DIM), jnp.float32)
    query_token = jax.random.normal(k_t, (B, N_TOKEN, EMBED_DIM), jnp.float32)

    params = make_params(k_p, EMBED_DIM, MLP_DIM)
    packed = pack_params(params)

    fwd = jax.jit(functools.partial(two_way_attention_block, packed=packed))
    out_q, out_k, out_t = fwd(queries, keys, query_token)
    jax.block_until_ready((out_q, out_k, out_t))

    # correctness check against a pure-JAX reference of the PyTorch forward
    ref_q, ref_k, ref_t = two_way_ref(queries, keys, query_token, params)
    tol = 1e-4 if not (USE_BF16_MATMUL or APPROX_RECIPROCAL) else 2e-2
    assert jnp.allclose(out_q, ref_q, atol=tol, rtol=tol)
    assert jnp.allclose(out_k, ref_k, atol=tol, rtol=tol)
    assert jnp.allclose(out_t, ref_t, atol=tol, rtol=tol)

    print("KERNEL_OK")
</pallas_src>

<mosaic_0001>
module attributes {stable_mosaic.version = 11 : i64} {
  func.func @_two_way_block_kernel(%arg0: i32, %arg1: memref<1x8x32xf32, #tpu.memory_space<vmem>>, %arg2: memref<1x16x32xf32, #tpu.memory_space<vmem>>, %arg3: memref<1x4x32xf32, #tpu.memory_space<vmem>>, %arg4: memref<4x32x64xf32, #tpu.memory_space<vmem>>, %arg5: memref<4x1x64xf32, #tpu.memory_space<vmem>>, %arg6: memref<4x32x64xf32, #tpu.memory_space<vmem>>, %arg7: memref<4x1x64xf32, #tpu.memory_space<vmem>>, %arg8: memref<4x64x32xf32, #tpu.memory_space<vmem>>, %arg9: memref<4x1x32xf32, #tpu.memory_space<vmem>>, %arg10: memref<5x1x32xf32, #tpu.memory_space<vmem>>, %arg11: memref<5x1x32xf32, #tpu.memory_space<vmem>>, %arg12: memref<32x64xf32, #tpu.memory_space<vmem>>, %arg13: memref<1x64xf32, #tpu.memory_space<vmem>>, %arg14: memref<64x32xf32, #tpu.memory_space<vmem>>, %arg15: memref<1x32xf32, #tpu.memory_space<vmem>>, %arg16: memref<1x8x32xf32, #tpu.memory_space<vmem>>, %arg17: memref<1x16x32xf32, #tpu.memory_space<vmem>>, %arg18: memref<1x4x32xf32, #tpu.memory_space<vmem>>) attributes {dimension_semantics = [#tpu.dimension_semantics<parallel>], iteration_bounds = array<i64: 2>, scalar_prefetch = 0 : i64, scratch_operands = 0 : i64, tpu.core_type = #tpu.core_type<tc>, window_params = [{transform_indices = @transform_0, window_bounds = array<i64: 1, 8, 32>}, {transform_indices = @transform_1, window_bounds = array<i64: 1, 16, 32>}, {transform_indices = @transform_2, window_bounds = array<i64: 1, 4, 32>}, {pipeline_mode = #tpu.pipeline_mode<synchronous>, transform_indices = @transform_3, window_bounds = array<i64: 4, 32, 64>}, {pipeline_mode = #tpu.pipeline_mode<synchronous>, transform_indices = @transform_4, window_bounds = array<i64: 4, 1, 64>}, {pipeline_mode = #tpu.pipeline_mode<synchronous>, transform_indices = @transform_5, window_bounds = array<i64: 4, 32, 64>}, {pipeline_mode = #tpu.pipeline_mode<synchronous>, transform_indices = @transform_6, window_bounds = array<i64: 4, 1, 64>}, {pipeline_mode = #tpu.pipeline_mode<synchronous>, transform_indices = @transform_7, window_bounds = array<i64: 4, 64, 32>}, {pipeline_mode = #tpu.pipeline_mode<synchronous>, transform_indices = @transform_8, window_bounds = array<i64: 4, 1, 32>}, {pipeline_mode = #tpu.pipeline_mode<synchronous>, transform_indices = @transform_9, window_bounds = array<i64: 5, 1, 32>}, {pipeline_mode = #tpu.pipeline_mode<synchronous>, transform_indices = @transform_10, window_bounds = array<i64: 5, 1, 32>}, {pipeline_mode = #tpu.pipeline_mode<synchronous>, transform_indices = @transform_11, window_bounds = array<i64: 32, 64>}, {pipeline_mode = #tpu.pipeline_mode<synchronous>, transform_indices = @transform_12, window_bounds = array<i64: 1, 64>}, {pipeline_mode = #tpu.pipeline_mode<synchronous>, transform_indices = @transform_13, window_bounds = array<i64: 64, 32>}, {pipeline_mode = #tpu.pipeline_mode<synchronous>, transform_indices = @transform_14, window_bounds = array<i64: 1, 32>}, {transform_indices = @transform_15, window_bounds = array<i64: 1, 8, 32>}, {transform_indices = @transform_16, window_bounds = array<i64: 1, 16, 32>}, {transform_indices = @transform_17, window_bounds = array<i64: 1, 4, 32>}]} {
    %c0 = arith.constant 0 : index
    %c0_0 = arith.constant 0 : index
    %c0_1 = arith.constant 0 : index
    %0 = vector.load %arg1[%c0, %c0_0, %c0_1] : memref<1x8x32xf32, #tpu.memory_space<vmem>>, vector<1x8x32xf32>
    %1 = vector.shape_cast %0 : vector<1x8x32xf32> to vector<8x32xf32>
    %c0_2 = arith.constant 0 : index
    %c0_3 = arith.constant 0 : index
    %c0_4 = arith.constant 0 : index
    %2 = vector.load %arg2[%c0_2, %c0_3, %c0_4] : memref<1x16x32xf32, #tpu.memory_space<vmem>>, vector<1x16x32xf32>
    %3 = vector.shape_cast %2 : vector<1x16x32xf32> to vector<16x32xf32>
    %c0_5 = arith.constant 0 : index
    %c0_6 = arith.constant 0 : index
    %c0_7 = arith.constant 0 : index
    %4 = vector.load %arg3[%c0_5, %c0_6, %c0_7] : memref<1x4x32xf32, #tpu.memory_space<vmem>>, vector<1x4x32xf32>
    %5 = vector.shape_cast %4 : vector<1x4x32xf32> to vector<4x32xf32>
    %c0_8 = arith.constant 0 : index
    %c0_9 = arith.constant 0 : index
    %c0_10 = arith.constant 0 : index
    %6 = vector.load %arg4[%c0_8, %c0_9, %c0_10] : memref<4x32x64xf32, #tpu.memory_space<vmem>>, vector<1x32x64xf32>
    %7 = vector.shape_cast %6 : vector<1x32x64xf32> to vector<32x64xf32>
    %cst = arith.constant dense<0.000000e+00> : vector<8x64xf32>
    %8 = tpu.matmul %1, %7, %cst {dimension_numbers = #tpu.dot_dimension_numbers<[1], [0], [0], [1], [0, 0, 1, 1], [], []>} : vector<8x32xf32>, vector<32x64xf32>, vector<8x64xf32> -> vector<8x64xf32>
    %c0_11 = arith.constant 0 : index
    %c0_12 = arith.constant 0 : index
    %c0_13 = arith.constant 0 : index
    %9 = vector.load %arg5[%c0_11, %c0_12, %c0_13] : memref<4x1x64xf32, #tpu.memory_space<vmem>>, vector<1x1x64xf32>
    %10 = vector.shape_cast %9 : vector<1x1x64xf32> to vector<1x64xf32>
    %11 = vector.broadcast %10 : vector<1x64xf32> to vector<8x64xf32>
    %12 = arith.addf %8, %11 : vector<8x64xf32>
    %c0_14 = arith.constant 0 : index
    %c0_15 = arith.constant 0 : index
    %c0_16 = arith.constant 0 : index
    %13 = vector.load %arg6[%c0_14, %c0_15, %c0_16] : memref<4x32x64xf32, #tpu.memory_space<vmem>>, vector<1x32x64xf32>
    %14 = vector.shape_cast %13 : vector<1x32x64xf32> to vector<32x64xf32>
    %cst_17 = arith.constant dense<0.000000e+00> : vector<8x64xf32>
    %15 = tpu.matmul %1, %14, %cst_17 {dimension_numbers = #tpu.dot_dimension_numbers<[1], [0], [0], [1], [0, 0, 1, 1], [], []>} : vector<8x32xf32>, vector<32x64xf32>, vector<8x64xf32> -> vector<8x64xf32>
    %c0_18 = arith.constant 0 : index
    %c0_19 = arith.constant 0 : index
    %c0_20 = arith.constant 0 : index
    %16 = vector.load %arg7[%c0_18, %c0_19, %c0_20] : memref<4x1x64xf32, #tpu.memory_space<vmem>>, vector<1x1x64xf32>
    %17 = vector.shape_cast %16 : vector<1x1x64xf32> to vector<1x64xf32>
    %18 = vector.broadcast %17 : vector<1x64xf32> to vector<8x64xf32>
    %19 = arith.addf %15, %18 : vector<8x64xf32>
    %cst_21 = arith.constant dense<0.000000e+00> : vector<8x8xf32>
    %20 = tpu.matmul %12, %19, %cst_21 {dimension_numbers = #tpu.dot_dimension_numbers<[1], [1], [0], [0], [0, 0, 1, 0], [], []>} : vector<8x64xf32>, vector<8x64xf32>, vector<8x8xf32> -> vector<8x8xf32>
    %cst_22 = arith.constant dense<0xFF800000> : vector<8xf32>
    %21 = vector.multi_reduction <maximumf>, %20, %cst_22 [1] : vector<8x8xf32> to vector<8xf32>
    %22 = vector.shape_cast %21 : vector<8xf32> to vector<8x1xf32>
    %23 = vector.broadcast %22 : vector<8x1xf32> to vector<8x8xf32>
    %24 = arith.subf %20, %23 : vector<8x8xf32>
    %25 = math.exp %24 : vector<8x8xf32>
    %cst_23 = arith.constant dense<0.000000e+00> : vector<8xf32>
    %26 = vector.multi_reduction <add>, %25, %cst_23 [1] : vector<8x8xf32> to vector<8xf32>
    %27 = vector.shape_cast %26 : vector<8xf32> to vector<8x1xf32>
    %28 = tpu.reciprocal %27 : vector<8x1xf32> -> vector<8x1xf32>
    %29 = vector.broadcast %28 : vector<8x1xf32> to vector<8x8xf32>
    %30 = arith.mulf %25, %29 : vector<8x8xf32>
    %cst_24 = arith.constant dense<0.000000e+00> : vector<8x64xf32>
    %31 = tpu.matmul %30, %19, %cst_24 {dimension_numbers = #tpu.dot_dimension_numbers<[1], [0], [0], [1], [0, 0, 1, 1], [], []>} : vector<8x8xf32>, vector<8x64xf32>, vector<8x64xf32> -> vector<8x64xf32>
    %c0_25 = arith.constant 0 : index
    %c0_26 = arith.constant 0 : index
    %c0_27 = arith.constant 0 : index
    %32 = vector.load %arg8[%c0_25, %c0_26, %c0_27] : memref<4x64x32xf32, #tpu.memory_space<vmem>>, vector<1x64x32xf32>
    %33 = vector.shape_cast %32 : vector<1x64x32xf32> to vector<64x32xf32>
    %cst_28 = arith.constant dense<0.000000e+00> : vector<8x32xf32>
    %34 = tpu.matmul %31, %33, %cst_28 {dimension_numbers = #tpu.dot_dimension_numbers<[1], [0], [0], [1], [0, 0, 1, 1], [], []>} : vector<8x64xf32>, vector<64x32xf32>, vector<8x32xf32> -> vector<8x32xf32>
    %c0_29 = arith.constant 0 : index
    %c0_30 = arith.constant 0 : index
    %c0_31 = arith.constant 0 : index
    %35 = vector.load %arg9[%c0_29, %c0_30, %c0_31] : memref<4x1x32xf32, #tpu.memory_space<vmem>>, vector<1x1x32xf32>
    %36 = vector.shape_cast %35 : vector<1x1x32xf32> to vector<1x32xf32>
    %37 = vector.broadcast %36 : vector<1x32xf32> to vector<8x32xf32>
    %38 = arith.addf %34, %37 : vector<8x32xf32>
    %cst_32 = arith.constant dense<0.000000e+00> : vector<8xf32>
    %39 = vector.multi_reduction <add>, %38, %cst_32 [1] : vector<8x32xf32> to vector<8xf32>
    %40 = vector.shape_cast %39 : vector<8xf32> to vector<8x1xf32>
    %cst_33 = arith.constant 3.200000e+01 : f32
    %41 = vector.broadcast %cst_33 : f32 to vector<8x1xf32>
    %42 = arith.divf %40, %41 : vector<8x1xf32>
    %43 = vector.broadcast %42 : vector<8x1xf32> to vector<8x32xf32>
    %44 = arith.subf %38, %43 : vector<8x32xf32>
    %45 = arith.mulf %44, %44 : vector<8x32xf32>
    %cst_34 = arith.constant dense<0.000000e+00> : vector<8xf32>
    %46 = vector.multi_reduction <add>, %45, %cst_34 [1] : vector<8x32xf32> to vector<8xf32>
    %47 = vector.shape_cast %46 : vector<8xf32> to vector<8x1xf32>
    %cst_35 = arith.constant 3.200000e+01 : f32
    %48 = vector.broadcast %cst_35 : f32 to vector<8x1xf32>
    %49 = arith.divf %47, %48 : vector<8x1xf32>
    %50 = vector.broadcast %42 : vector<8x1xf32> to vector<8x32xf32>
    %51 = arith.subf %38, %50 : vector<8x32xf32>
    %cst_36 = arith.constant 9.99999974E-6 : f32
    %52 = vector.broadcast %cst_36 : f32 to vector<8x1xf32>
    %53 = arith.addf %49, %52 : vector<8x1xf32>
    %54 = math.rsqrt %53 : vector<8x1xf32>
    %55 = vector.broadcast %54 : vector<8x1xf32> to vector<8x32xf32>
    %56 = arith.mulf %51, %55 : vector<8x32xf32>
    %c0_37 = arith.constant 0 : index
    %c0_38 = arith.constant 0 : index
    %c0_39 = arith.constant 0 : index
    %57 = vector.load %arg10[%c0_37, %c0_38, %c0_39] : memref<5x1x32xf32, #tpu.memory_space<vmem>>, vector<1x1x32xf32>
    %58 = vector.shape_cast %57 : vector<1x1x32xf32> to vector<1x32xf32>
    %59 = vector.broadcast %58 : vector<1x32xf32> to vector<8x32xf32>
    %60 = arith.mulf %56, %59 : vector<8x32xf32>
    %c0_40 = arith.constant 0 : index
    %c0_41 = arith.constant 0 : index
    %c0_42 = arith.constant 0 : index
    %61 = vector.load %arg11[%c0_40, %c0_41, %c0_42] : memref<5x1x32xf32, #tpu.memory_space<vmem>>, vector<1x1x32xf32>
    %62 = vector.shape_cast %61 : vector<1x1x32xf32> to vector<1x32xf32>
    %63 = vector.broadcast %62 : vector<1x32xf32> to vector<8x32xf32>
    %64 = arith.addf %60, %63 : vector<8x32xf32>
    %c1 = arith.constant 1 : index
    %c0_43 = arith.constant 0 : index
    %c0_44 = arith.constant 0 : index
    %65 = vector.load %arg4[%c1, %c0_43, %c0_44] : memref<4x32x64xf32, #tpu.memory_space<vmem>>, vector<1x32x64xf32>
    %66 = vector.shape_cast %65 : vector<1x32x64xf32> to vector<32x64xf32>
    %cst_45 = arith.constant dense<0.000000e+00> : vector<8x64xf32>
    %67 = tpu.matmul %64, %66, %cst_45 {dimension_numbers = #tpu.dot_dimension_numbers<[1], [0], [0], [1], [0, 0, 1, 1], [], []>} : vector<8x32xf32>, vector<32x64xf32>, vector<8x64xf32> -> vector<8x64xf32>
    %c1_46 = arith.constant 1 : index
    %c0_47 = arith.constant 0 : index
    %c0_48 = arith.constant 0 : index
    %68 = vector.load %arg5[%c1_46, %c0_47, %c0_48] : memref<4x1x64xf32, #tpu.memory_space<vmem>>, vector<1x1x64xf32>
    %69 = vector.shape_cast %68 : vector<1x1x64xf32> to vector<1x64xf32>
    %70 = vector.broadcast %69 : vector<1x64xf32> to vector<8x64xf32>
    %71 = arith.addf %67, %70 : vector<8x64xf32>
    %c1_49 = arith.constant 1 : index
    %c0_50 = arith.constant 0 : index
    %c0_51 = arith.constant 0 : index
    %72 = vector.load %arg6[%c1_49, %c0_50, %c0_51] : memref<4x32x64xf32, #tpu.memory_space<vmem>>, vector<1x32x64xf32>
    %73 = vector.shape_cast %72 : vector<1x32x64xf32> to vector<32x64xf32>
    %cst_52 = arith.constant dense<0.000000e+00> : vector<16x64xf32>
    %74 = tpu.matmul %3, %73, %cst_52 {dimension_numbers = #tpu.dot_dimension_numbers<[1], [0], [0], [1], [0, 0, 1, 1], [], []>} : vector<16x32xf32>, vector<32x64xf32>, vector<16x64xf32> -> vector<16x64xf32>
    %c1_53 = arith.constant 1 : index
    %c0_54 = arith.constant 0 : index
    %c0_55 = arith.constant 0 : index
    %75 = vector.load %arg7[%c1_53, %c0_54, %c0_55] : memref<4x1x64xf32, #tpu.memory_space<vmem>>, vector<1x1x64xf32>
    %76 = vector.shape_cast %75 : vector<1x1x64xf32> to vector<1x64xf32>
    %77 = vector.broadcast %76 : vector<1x64xf32> to vector<16x64xf32>
    %78 = arith.addf %74, %77 : vector<16x64xf32>
    %cst_56 = arith.constant dense<0.000000e+00> : vector<8x16xf32>
    %79 = tpu.matmul %71, %78, %cst_56 {dimension_numbers = #tpu.dot_dimension_numbers<[1], [1], [0], [0], [0, 0, 1, 0], [], []>} : vector<8x64xf32>, vector<16x64xf32>, vector<8x16xf32> -> vector<8x16xf32>
    %cst_57 = arith.constant dense<0xFF800000> : vector<8xf32>
    %80 = vector.multi_reduction <maximumf>, %79, %cst_57 [1] : vector<8x16xf32> to vector<8xf32>
    %81 = vector.shape_cast %80 : vector<8xf32> to vector<8x1xf32>
    %82 = vector.broadcast %81 : vector<8x1xf32> to vector<8x16xf32>
    %83 = arith.subf %79, %82 : vector<8x16xf32>
    %84 = math.exp %83 : vector<8x16xf32>
    %cst_58 = arith.constant dense<0.000000e+00> : vector<8xf32>
    %85 = vector.multi_reduction <add>, %84, %cst_58 [1] : vector<8x16xf32> to vector<8xf32>
    %86 = vector.shape_cast %85 : vector<8xf32> to vector<8x1xf32>
    %87 = tpu.reciprocal %86 : vector<8x1xf32> -> vector<8x1xf32>
    %88 = vector.broadcast %87 : vector<8x1xf32> to vector<8x16xf32>
    %89 = arith.mulf %84, %88 : vector<8x16xf32>
    %cst_59 = arith.constant dense<0.000000e+00> : vector<8x64xf32>
    %90 = tpu.matmul %89, %78, %cst_59 {dimension_numbers = #tpu.dot_dimension_numbers<[1], [0], [0], [1], [0, 0, 1, 1], [], []>} : vector<8x16xf32>, vector<16x64xf32>, vector<8x64xf32> -> vector<8x64xf32>
    %c1_60 = arith.constant 1 : index
    %c0_61 = arith.constant 0 : index
    %c0_62 = arith.constant 0 : index
    %91 = vector.load %arg8[%c1_60, %c0_61, %c0_62] : memref<4x64x32xf32, #tpu.memory_space<vmem>>, vector<1x64x32xf32>
    %92 = vector.shape_cast %91 : vector<1x64x32xf32> to vector<64x32xf32>
    %cst_63 = arith.constant dense<0.000000e+00> : vector<8x32xf32>
    %93 = tpu.matmul %90, %92, %cst_63 {dimension_numbers = #tpu.dot_dimension_numbers<[1], [0], [0], [1], [0, 0, 1, 1], [], []>} : vector<8x64xf32>, vector<64x32xf32>, vector<8x32xf32> -> vector<8x32xf32>
    %c1_64 = arith.constant 1 : index
    %c0_65 = arith.constant 0 : index
    %c0_66 = arith.constant 0 : index
    %94 = vector.load %arg9[%c1_64, %c0_65, %c0_66] : memref<4x1x32xf32, #tpu.memory_space<vmem>>, vector<1x1x32xf32>
    %95 = vector.shape_cast %94 : vector<1x1x32xf32> to vector<1x32xf32>
    %96 = vector.broadcast %95 : vector<1x32xf32> to vector<8x32xf32>
    %97 = arith.addf %93, %96 : vector<8x32xf32>
    %98 = arith.addf %64, %97 : vector<8x32xf32>
    %cst_67 = arith.constant dense<0.000000e+00> : vector<8xf32>
    %99 = vector.multi_reduction <add>, %98, %cst_67 [1] : vector<8x32xf32> to vector<8xf32>
    %100 = vector.shape_cast %99 : vector<8xf32> to vector<8x1xf32>
    %cst_68 = arith.constant 3.200000e+01 : f32
    %101 = vector.broadcast %cst_68 : f32 to vector<8x1xf32>
    %102 = arith.divf %100, %101 : vector<8x1xf32>
    %103 = vector.broadcast %102 : vector<8x1xf32> to vector<8x32xf32>
    %104 = arith.subf %98, %103 : vector<8x32xf32>
    %105 = arith.mulf %104, %104 : vector<8x32xf32>
    %cst_69 = arith.constant dense<0.000000e+00> : vector<8xf32>
    %106 = vector.multi_reduction <add>, %105, %cst_69 [1] : vector<8x32xf32> to vector<8xf32>
    %107 = vector.shape_cast %106 : vector<8xf32> to vector<8x1xf32>
    %cst_70 = arith.constant 3.200000e+01 : f32
    %108 = vector.broadcast %cst_70 : f32 to vector<8x1xf32>
    %109 = arith.divf %107, %108 : vector<8x1xf32>
    %110 = vector.broadcast %102 : vector<8x1xf32> to vector<8x32xf32>
    %111 = arith.subf %98, %110 : vector<8x32xf32>
    %cst_71 = arith.constant 9.99999974E-6 : f32
    %112 = vector.broadcast %cst_71 : f32 to vector<8x1xf32>
    %113 = arith.addf %109, %112 : vector<8x1xf32>
    %114 = math.rsqrt %113 : vector<8x1xf32>
    %115 = vector.broadcast %114 : vector<8x1xf32> to vector<8x32xf32>
    %116 = arith.mulf %111, %115 : vector<8x32xf32>
    %c1_72 = arith.constant 1 : index
    %c0_73 = arith.constant 0 : index
    %c0_74 = arith.constant 0 : index
    %117 = vector.load %arg10[%c1_72, %c0_73, %c0_74] : memref<5x1x32xf32, #tpu.memory_space<vmem>>, vector<1x1x32xf32>
    %118 = vector.shape_cast %117 : vector<1x1x32xf32> to vector<1x32xf32>
    %119 = vector.broadcast %118 : vector<1x32xf32> to vector<8x32xf32>
    %120 = arith.mulf %116, %119 : vector<8x32xf32>
    %c1_75 = arith.constant 1 : index
    %c0_76 = arith.constant 0 : index
    %c0_77 = arith.constant 0 : index
    %121 = vector.load %arg11[%c1_75, %c0_76, %c0_77] : memref<5x1x32xf32, #tpu.memory_space<vmem>>, vector<1x1x32xf32>
    %122 = vector.shape_cast %121 : vector<1x1x32xf32> to vector<1x32xf32>
    %123 = vector.broadcast %122 : vector<1x32xf32> to vector<8x32xf32>
    %124 = arith.addf %120, %123 : vector<8x32xf32>
    %c0_78 = arith.constant 0 : index
    %c0_79 = arith.constant 0 : index
    %125 = vector.load %arg12[%c0_78, %c0_79] : memref<32x64xf32, #tpu.memory_space<vmem>>, vector<32x64xf32>
    %cst_80 = arith.constant dense<0.000000e+00> : vector<8x64xf32>
    %126 = tpu.matmul %124, %125, %cst_80 {dimension_numbers = #tpu.dot_dimension_numbers<[1], [0], [0], [1], [0, 0, 1, 1], [], []>} : vector<8x32xf32>, vector<32x64xf32>, vector<8x64xf32> -> vector<8x64xf32>
    %c0_81 = arith.constant 0 : index
    %c0_82 = arith.constant 0 : index
    %127 = vector.load %arg13[%c0_81, %c0_82] : memref<1x64xf32, #tpu.memory_space<vmem>>, vector<1x64xf32>
    %128 = vector.broadcast %127 : vector<1x64xf32> to vector<8x64xf32>
    %129 = arith.addf %126, %128 : vector<8x64xf32>
    %cst_83 = arith.constant 0.000000e+00 : f32
    %130 = vector.broadcast %cst_83 : f32 to vector<8x64xf32>
    %131 = arith.maximumf %129, %130 : vector<8x64xf32>
    %c0_84 = arith.constant 0 : index
    %c0_85 = arith.constant 0 : index
    %132 = vector.load %arg14[%c0_84, %c0_85] : memref<64x32xf32, #tpu.memory_space<vmem>>, vector<64x32xf32>
    %cst_86 = arith.constant dense<0.000000e+00> : vector<8x32xf32>
    %133 = tpu.matmul %131, %132, %cst_86 {dimension_numbers = #tpu.dot_dimension_numbers<[1], [0], [0], [1], [0, 0, 1, 1], [], []>} : vector<8x64xf32>, vector<64x32xf32>, vector<8x32xf32> -> vector<8x32xf32>
    %134 = arith.addf %124, %133 : vector<8x32xf32>
    %c0_87 = arith.constant 0 : index
    %c0_88 = arith.constant 0 : index
    %135 = vector.load %arg15[%c0_87, %c0_88] : memref<1x32xf32, #tpu.memory_space<vmem>>, vector<1x32xf32>
    %136 = vector.broadcast %135 : vector<1x32xf32> to vector<8x32xf32>
    %137 = arith.addf %134, %136 : vector<8x32xf32>
    %cst_89 = arith.constant dense<0.000000e+00> : vector<8xf32>
    %138 = vector.multi_reduction <add>, %137, %cst_89 [1] : vector<8x32xf32> to vector<8xf32>
    %139 = vector.shape_cast %138 : vector<8xf32> to vector<8x1xf32>
    %cst_90 = arith.constant 3.200000e+01 : f32
    %140 = vector.broadcast %cst_90 : f32 to vector<8x1xf32>
    %141 = arith.divf %139, %140 : vector<8x1xf32>
    %142 = vector.broadcast %141 : vector<8x1xf32> to vector<8x32xf32>
    %143 = arith.subf %137, %142 : vector<8x32xf32>
    %144 = arith.mulf %143, %143 : vector<8x32xf32>
    %cst_91 = arith.constant dense<0.000000e+00> : vector<8xf32>
    %145 = vector.multi_reduction <add>, %144, %cst_91 [1] : vector<8x32xf32> to vector<8xf32>
    %146 = vector.shape_cast %145 : vector<8xf32> to vector<8x1xf32>
    %cst_92 = arith.constant 3.200000e+01 : f32
    %147 = vector.broadcast %cst_92 : f32 to vector<8x1xf32>
    %148 = arith.divf %146, %147 : vector<8x1xf32>
    %149 = vector.broadcast %141 : vector<8x1xf32> to vector<8x32xf32>
    %150 = arith.subf %137, %149 : vector<8x32xf32>
    %cst_93 = arith.constant 9.99999974E-6 : f32
    %151 = vector.broadcast %cst_93 : f32 to vector<8x1xf32>
    %152 = arith.addf %148, %151 : vector<8x1xf32>
    %153 = math.rsqrt %152 : vector<8x1xf32>
    %154 = vector.broadcast %153 : vector<8x1xf32> to vector<8x32xf32>
    %155 = arith.mulf %150, %154 : vector<8x32xf32>
    %c2 = arith.constant 2 : index
    %c0_94 = arith.constant 0 : index
    %c0_95 = arith.constant 0 : index
    %156 = vector.load %arg10[%c2, %c0_94, %c0_95] : memref<5x1x32xf32, #tpu.memory_space<vmem>>, vector<1x1x32xf32>
    %157 = vector.shape_cast %156 : vector<1x1x32xf32> to vector<1x32xf32>
    %158 = vector.broadcast %157 : vector<1x32xf32> to vector<8x32xf32>
    %159 = arith.mulf %155, %158 : vector<8x32xf32>
    %c2_96 = arith.constant 2 : index
    %c0_97 = arith.constant 0 : index
    %c0_98 = arith.constant 0 : index
    %160 = vector.load %arg11[%c2_96, %c0_97, %c0_98] : memref<5x1x32xf32, #tpu.memory_space<vmem>>, vector<1x1x32xf32>
    %161 = vector.shape_cast %160 : vector<1x1x32xf32> to vector<1x32xf32>
    %162 = vector.broadcast %161 : vector<1x32xf32> to vector<8x32xf32>
    %163 = arith.addf %159, %162 : vector<8x32xf32>
    %c2_99 = arith.constant 2 : index
    %c0_100 = arith.constant 0 : index
    %c0_101 = arith.constant 0 : index
    %164 = vector.load %arg4[%c2_99, %c0_100, %c0_101] : memref<4x32x64xf32, #tpu.memory_space<vmem>>, vector<1x32x64xf32>
    %165 = vector.shape_cast %164 : vector<1x32x64xf32> to vector<32x64xf32>
    %cst_102 = arith.constant dense<0.000000e+00> : vector<16x64xf32>
    %166 = tpu.matmul %3, %165, %cst_102 {dimension_numbers = #tpu.dot_dimension_numbers<[1], [0], [0], [1], [0, 0, 1, 1], [], []>} : vector<16x32xf32>, vector<32x64xf32>, vector<16x64xf32> -> vector<16x64xf32>
    %c2_103 = arith.constant 2 : index
    %c0_104 = arith.constant 0 : index
    %c0_105 = arith.constant 0 : index
    %167 = vector.load %arg5[%c2_103, %c0_104, %c0_105] : memref<4x1x64xf32, #tpu.memory_space<vmem>>, vector<1x1x64xf32>
    %168 = vector.shape_cast %167 : vector<1x1x64xf32> to vector<1x64xf32>
    %169 = vector.broadcast %168 : vector<1x64xf32> to vector<16x64xf32>
    %170 = arith.addf %166, %169 : vector<16x64xf32>
    %c2_106 = arith.constant 2 : index
    %c0_107 = arith.constant 0 : index
    %c0_108 = arith.constant 0 : index
    %171 = vector.load %arg6[%c2_106, %c0_107, %c0_108] : memref<4x32x64xf32, #tpu.memory_space<vmem>>, vector<1x32x64xf32>
    %172 = vector.shape_cast %171 : vector<1x32x64xf32> to vector<32x64xf32>
    %cst_109 = arith.constant dense<0.000000e+00> : vector<8x64xf32>
    %173 = tpu.matmul %163, %172, %cst_109 {dimension_numbers = #tpu.dot_dimension_numbers<[1], [0], [0], [1], [0, 0, 1, 1], [], []>} : vector<8x32xf32>, vector<32x64xf32>, vector<8x64xf32> -> vector<8x64xf32>
    %c2_110 = arith.constant 2 : index
    %c0_111 = arith.constant 0 : index
    %c0_112 = arith.constant 0 : index
    %174 = vector.load %arg7[%c2_110, %c0_111, %c0_112] : memref<4x1x64xf32, #tpu.memory_space<vmem>>, vector<1x1x64xf32>
    %175 = vector.shape_cast %174 : vector<1x1x64xf32> to vector<1x64xf32>
    %176 = vector.broadcast %175 : vector<1x64xf32> to vector<8x64xf32>
    %177 = arith.addf %173, %176 : vector<8x64xf32>
    %cst_113 = arith.constant dense<0.000000e+00> : vector<16x8xf32>
    %178 = tpu.matmul %170, %177, %cst_113 {dimension_numbers = #tpu.dot_dimension_numbers<[1], [1], [0], [0], [0, 0, 1, 0], [], []>} : vector<16x64xf32>, vector<8x64xf32>, vector<16x8xf32> -> vector<16x8xf32>
    %cst_114 = arith.constant dense<0xFF800000> : vector<16xf32>
    %179 = vector.multi_reduction <maximumf>, %178, %cst_114 [1] : vector<16x8xf32> to vector<16xf32>
    %180 = vector.shape_cast %179 : vector<16xf32> to vector<16x1xf32>
    %181 = vector.broadcast %180 : vector<16x1xf32> to vector<16x8xf32>
    %182 = arith.subf %178, %181 : vector<16x8xf32>
    %183 = math.exp %182 : vector<16x8xf32>
    %cst_115 = arith.constant dense<0.000000e+00> : vector<16xf32>
    %184 = vector.multi_reduction <add>, %183, %cst_115 [1] : vector<16x8xf32> to vector<16xf32>
    %185 = vector.shape_cast %184 : vector<16xf32> to vector<16x1xf32>
    %186 = tpu.reciprocal %185 : vector<16x1xf32> -> vector<16x1xf32>
    %187 = vector.broadcast %186 : vector<16x1xf32> to vector<16x8xf32>
    %188 = arith.mulf %183, %187 : vector<16x8xf32>
    %cst_116 = arith.constant dense<0.000000e+00> : vector<16x64xf32>
    %189 = tpu.matmul %188, %177, %cst_116 {dimension_numbers = #tpu.dot_dimension_numbers<[1], [0], [0], [1], [0, 0, 1, 1], [], []>} : vector<16x8xf32>, vector<8x64xf32>, vector<16x64xf32> -> vector<16x64xf32>
    %c2_117 = arith.constant 2 : index
    %c0_118 = arith.constant 0 : index
    %c0_119 = arith.constant 0 : index
    %190 = vector.load %arg8[%c2_117, %c0_118, %c0_119] : memref<4x64x32xf32, #tpu.memory_space<vmem>>, vector<1x64x32xf32>
    %191 = vector.shape_cast %190 : vector<1x64x32xf32> to vector<64x32xf32>
    %cst_120 = arith.constant dense<0.000000e+00> : vector<16x32xf32>
    %192 = tpu.matmul %189, %191, %cst_120 {dimension_numbers = #tpu.dot_dimension_numbers<[1], [0], [0], [1], [0, 0, 1, 1], [], []>} : vector<16x64xf32>, vector<64x32xf32>, vector<16x32xf32> -> vector<16x32xf32>
    %c2_121 = arith.constant 2 : index
    %c0_122 = arith.constant 0 : index
    %c0_123 = arith.constant 0 : index
    %193 = vector.load %arg9[%c2_121, %c0_122, %c0_123] : memref<4x1x32xf32, #tpu.memory_space<vmem>>, vector<1x1x32xf32>
    %194 = vector.shape_cast %193 : vector<1x1x32xf32> to vector<1x32xf32>
    %195 = vector.broadcast %194 : vector<1x32xf32> to vector<16x32xf32>
    %196 = arith.addf %192, %195 : vector<16x32xf32>
    %197 = arith.addf %3, %196 : vector<16x32xf32>
    %cst_124 = arith.constant dense<0.000000e+00> : vector<16xf32>
    %198 = vector.multi_reduction <add>, %197, %cst_124 [1] : vector<16x32xf32> to vector<16xf32>
    %199 = vector.shape_cast %198 : vector<16xf32> to vector<16x1xf32>
    %cst_125 = arith.constant 3.200000e+01 : f32
    %200 = vector.broadcast %cst_125 : f32 to vector<16x1xf32>
    %201 = arith.divf %199, %200 : vector<16x1xf32>
    %202 = vector.broadcast %201 : vector<16x1xf32> to vector<16x32xf32>
    %203 = arith.subf %197, %202 : vector<16x32xf32>
    %204 = arith.mulf %203, %203 : vector<16x32xf32>
    %cst_126 = arith.constant dense<0.000000e+00> : vector<16xf32>
    %205 = vector.multi_reduction <add>, %204, %cst_126 [1] : vector<16x32xf32> to vector<16xf32>
    %206 = vector.shape_cast %205 : vector<16xf32> to vector<16x1xf32>
    %cst_127 = arith.constant 3.200000e+01 : f32
    %207 = vector.broadcast %cst_127 : f32 to vector<16x1xf32>
    %208 = arith.divf %206, %207 : vector<16x1xf32>
    %209 = vector.broadcast %201 : vector<16x1xf32> to vector<16x32xf32>
    %210 = arith.subf %197, %209 : vector<16x32xf32>
    %cst_128 = arith.constant 9.99999974E-6 : f32
    %211 = vector.broadcast %cst_128 : f32 to vector<16x1xf32>
    %212 = arith.addf %208, %211 : vector<16x1xf32>
    %213 = math.rsqrt %212 : vector<16x1xf32>
    %214 = vector.broadcast %213 : vector<16x1xf32> to vector<16x32xf32>
    %215 = arith.mulf %210, %214 : vector<16x32xf32>
    %c3 = arith.constant 3 : index
    %c0_129 = arith.constant 0 : index
    %c0_130 = arith.constant 0 : index
    %216 = vector.load %arg10[%c3, %c0_129, %c0_130] : memref<5x1x32xf32, #tpu.memory_space<vmem>>, vector<1x1x32xf32>
    %217 = vector.shape_cast %216 : vector<1x1x32xf32> to vector<1x32xf32>
    %218 = vector.broadcast %217 : vector<1x32xf32> to vector<16x32xf32>
    %219 = arith.mulf %215, %218 : vector<16x32xf32>
    %c3_131 = arith.constant 3 : index
    %c0_132 = arith.constant 0 : index
    %c0_133 = arith.constant 0 : index
    %220 = vector.load %arg11[%c3_131, %c0_132, %c0_133] : memref<5x1x32xf32, #tpu.memory_space<vmem>>, vector<1x1x32xf32>
    %221 = vector.shape_cast %220 : vector<1x1x32xf32> to vector<1x32xf32>
    %222 = vector.broadcast %221 : vector<1x32xf32> to vector<16x32xf32>
    %223 = arith.addf %219, %222 : vector<16x32xf32>
    %c3_134 = arith.constant 3 : index
    %c0_135 = arith.constant 0 : index
    %c0_136 = arith.constant 0 : index
    %224 = vector.load %arg4[%c3_134, %c0_135, %c0_136] : memref<4x32x64xf32, #tpu.memory_space<vmem>>, vector<1x32x64xf32>
    %225 = vector.shape_cast %224 : vector<1x32x64xf32> to vector<32x64xf32>
    %cst_137 = arith.constant dense<0.000000e+00> : vector<4x64xf32>
    %226 = tpu.matmul %5, %225, %cst_137 {dimension_numbers = #tpu.dot_dimension_numbers<[1], [0], [0], [1], [0, 0, 1, 1], [], []>} : vector<4x32xf32>, vector<32x64xf32>, vector<4x64xf32> -> vector<4x64xf32>
    %c3_138 = arith.constant 3 : index
    %c0_139 = arith.constant 0 : index
    %c0_140 = arith.constant 0 : index
    %227 = vector.load %arg5[%c3_138, %c0_139, %c0_140] : memref<4x1x64xf32, #tpu.memory_space<vmem>>, vector<1x1x64xf32>
    %228 = vector.shape_cast %227 : vector<1x1x64xf32> to vector<1x64xf32>
    %229 = vector.broadcast %228 : vector<1x64xf32> to vector<4x64xf32>
    %230 = arith.addf %226, %229 : vector<4x64xf32>
    %c3_141 = arith.constant 3 : index
    %c0_142 = arith.constant 0 : index
    %c0_143 = arith.constant 0 : index
    %231 = vector.load %arg6[%c3_141, %c0_142, %c0_143] : memref<4x32x64xf32, #tpu.memory_space<vmem>>, vector<1x32x64xf32>
    %232 = vector.shape_cast %231 : vector<1x32x64xf32> to vector<32x64xf32>
    %cst_144 = arith.constant dense<0.000000e+00> : vector<8x64xf32>
    %233 = tpu.matmul %163, %232, %cst_144 {dimension_numbers = #tpu.dot_dimension_numbers<[1], [0], [0], [1], [0, 0, 1, 1], [], []>} : vector<8x32xf32>, vector<32x64xf32>, vector<8x64xf32> -> vector<8x64xf32>
    %c3_145 = arith.constant 3 : index
    %c0_146 = arith.constant 0 : index
    %c0_147 = arith.constant 0 : index
    %234 = vector.load %arg7[%c3_145, %c0_146, %c0_147] : memref<4x1x64xf32, #tpu.memory_space<vmem>>, vector<1x1x64xf32>
    %235 = vector.shape_cast %234 : vector<1x1x64xf32> to vector<1x64xf32>
    %236 = vector.broadcast %235 : vector<1x64xf32> to vector<8x64xf32>
    %237 = arith.addf %233, %236 : vector<8x64xf32>
    %c3_148 = arith.constant 3 : index
    %c0_149 = arith.constant 0 : index
    %c0_150 = arith.constant 0 : index
    %238 = vector.load %arg6[%c3_148, %c0_149, %c0_150] : memref<4x32x64xf32, #tpu.memory_space<vmem>>, vector<1x32x64xf32>
    %239 = vector.shape_cast %238 : vector<1x32x64xf32> to vector<32x64xf32>
    %cst_151 = arith.constant dense<0.000000e+00> : vector<16x64xf32>
    %240 = tpu.matmul %223, %239, %cst_151 {dimension_numbers = #tpu.dot_dimension_numbers<[1], [0], [0], [1], [0, 0, 1, 1], [], []>} : vector<16x32xf32>, vector<32x64xf32>, vector<16x64xf32> -> vector<16x64xf32>
    %c3_152 = arith.constant 3 : index
    %c0_153 = arith.constant 0 : index
    %c0_154 = arith.constant 0 : index
    %241 = vector.load %arg7[%c3_152, %c0_153, %c0_154] : memref<4x1x64xf32, #tpu.memory_space<vmem>>, vector<1x1x64xf32>
    %242 = vector.shape_cast %241 : vector<1x1x64xf32> to vector<1x64xf32>
    %243 = vector.broadcast %242 : vector<1x64xf32> to vector<16x64xf32>
    %244 = arith.addf %240, %243 : vector<16x64xf32>
    %cst_155 = arith.constant dense<0.000000e+00> : vector<4x8xf32>
    %245 = tpu.matmul %230, %237, %cst_155 {dimension_numbers = #tpu.dot_dimension_numbers<[1], [1], [0], [0], [0, 0, 1, 0], [], []>} : vector<4x64xf32>, vector<8x64xf32>, vector<4x8xf32> -> vector<4x8xf32>
    %cst_156 = arith.constant dense<0.000000e+00> : vector<4x16xf32>
    %246 = tpu.matmul %230, %244, %cst_156 {dimension_numbers = #tpu.dot_dimension_numbers<[1], [1], [0], [0], [0, 0, 1, 0], [], []>} : vector<4x64xf32>, vector<16x64xf32>, vector<4x16xf32> -> vector<4x16xf32>
    %cst_157 = arith.constant dense<0xFF800000> : vector<4xf32>
    %247 = vector.multi_reduction <maximumf>, %245, %cst_157 [1] : vector<4x8xf32> to vector<4xf32>
    %248 = vector.shape_cast %247 : vector<4xf32> to vector<4x1xf32>
    %cst_158 = arith.constant dense<0xFF800000> : vector<4xf32>
    %249 = vector.multi_reduction <maximumf>, %246, %cst_158 [1] : vector<4x16xf32> to vector<4xf32>
    %250 = vector.shape_cast %249 : vector<4xf32> to vector<4x1xf32>
    %251 = arith.maximumf %248, %250 : vector<4x1xf32>
    %252 = vector.broadcast %251 : vector<4x1xf32> to vector<4x8xf32>
    %253 = arith.subf %245, %252 : vector<4x8xf32>
    %254 = math.exp %253 : vector<4x8xf32>
    %255 = vector.broadcast %251 : vector<4x1xf32> to vector<4x16xf32>
    %256 = arith.subf %246, %255 : vector<4x16xf32>
    %257 = math.exp %256 : vector<4x16xf32>
    %cst_159 = arith.constant dense<0.000000e+00> : vector<4xf32>
    %258 = vector.multi_reduction <add>, %254, %cst_159 [1] : vector<4x8xf32> to vector<4xf32>
    %259 = vector.shape_cast %258 : vector<4xf32> to vector<4x1xf32>
    %cst_160 = arith.constant dense<0.000000e+00> : vector<4xf32>
    %260 = vector.multi_reduction <add>, %257, %cst_160 [1] : vector<4x16xf32> to vector<4xf32>
    %261 = vector.shape_cast %260 : vector<4xf32> to vector<4x1xf32>
    %262 = arith.addf %259, %261 : vector<4x1xf32>
    %263 = tpu.reciprocal %262 : vector<4x1xf32> -> vector<4x1xf32>
    %cst_161 = arith.constant dense<0.000000e+00> : vector<4x64xf32>
    %264 = tpu.matmul %254, %237, %cst_161 {dimension_numbers = #tpu.dot_dimension_numbers<[1], [0], [0], [1], [0, 0, 1, 1], [], []>} : vector<4x8xf32>, vector<8x64xf32>, vector<4x64xf32> -> vector<4x64xf32>
    %cst_162 = arith.constant dense<0.000000e+00> : vector<4x64xf32>
    %265 = tpu.matmul %257, %244, %cst_162 {dimension_numbers = #tpu.dot_dimension_numbers<[1], [0], [0], [1], [0, 0, 1, 1], [], []>} : vector<4x16xf32>, vector<16x64xf32>, vector<4x64xf32> -> vector<4x64xf32>
    %266 = arith.addf %264, %265 : vector<4x64xf32>
    %267 = vector.broadcast %263 : vector<4x1xf32> to vector<4x64xf32>
    %268 = arith.mulf %266, %267 : vector<4x64xf32>
    %c3_163 = arith.constant 3 : index
    %c0_164 = arith.constant 0 : index
    %c0_165 = arith.constant 0 : index
    %269 = vector.load %arg8[%c3_163, %c0_164, %c0_165] : memref<4x64x32xf32, #tpu.memory_space<vmem>>, vector<1x64x32xf32>
    %270 = vector.shape_cast %269 : vector<1x64x32xf32> to vector<64x32xf32>
    %cst_166 = arith.constant dense<0.000000e+00> : vector<4x32xf32>
    %271 = tpu.matmul %268, %270, %cst_166 {dimension_numbers = #tpu.dot_dimension_numbers<[1], [0], [0], [1], [0, 0, 1, 1], [], []>} : vector<4x64xf32>, vector<64x32xf32>, vector<4x32xf32> -> vector<4x32xf32>
    %c3_167 = arith.constant 3 : index
    %c0_168 = arith.constant 0 : index
    %c0_169 = arith.constant 0 : index
    %272 = vector.load %arg9[%c3_167, %c0_168, %c0_169] : memref<4x1x32xf32, #tpu.memory_space<vmem>>, vector<1x1x32xf32>
    %273 = vector.shape_cast %272 : vector<1x1x32xf32> to vector<1x32xf32>
    %274 = vector.broadcast %273 : vector<1x32xf32> to vector<4x32xf32>
    %275 = arith.addf %271, %274 : vector<4x32xf32>
    %cst_170 = arith.constant dense<0.000000e+00> : vector<4xf32>
    %276 = vector.multi_reduction <add>, %275, %cst_170 [1] : vector<4x32xf32> to vector<4xf32>
    %277 = vector.shape_cast %276 : vector<4xf32> to vector<4x1xf32>
    %cst_171 = arith.constant 3.200000e+01 : f32
    %278 = vector.broadcast %cst_171 : f32 to vector<4x1xf32>
    %279 = arith.divf %277, %278 : vector<4x1xf32>
    %280 = vector.broadcast %279 : vector<4x1xf32> to vector<4x32xf32>
    %281 = arith.subf %275, %280 : vector<4x32xf32>
    %282 = arith.mulf %281, %281 : vector<4x32xf32>
    %cst_172 = arith.constant dense<0.000000e+00> : vector<4xf32>
    %283 = vector.multi_reduction <add>, %282, %cst_172 [1] : vector<4x32xf32> to vector<4xf32>
    %284 = vector.shape_cast %283 : vector<4xf32> to vector<4x1xf32>
    %cst_173 = arith.constant 3.200000e+01 : f32
    %285 = vector.broadcast %cst_173 : f32 to vector<4x1xf32>
    %286 = arith.divf %284, %285 : vector<4x1xf32>
    %287 = vector.broadcast %279 : vector<4x1xf32> to vector<4x32xf32>
    %288 = arith.subf %275, %287 : vector<4x32xf32>
    %cst_174 = arith.constant 9.99999974E-6 : f32
    %289 = vector.broadcast %cst_174 : f32 to vector<4x1xf32>
    %290 = arith.addf %286, %289 : vector<4x1xf32>
    %291 = math.rsqrt %290 : vector<4x1xf32>
    %292 = vector.broadcast %291 : vector<4x1xf32> to vector<4x32xf32>
    %293 = arith.mulf %288, %292 : vector<4x32xf32>
    %c4 = arith.constant 4 : index
    %c0_175 = arith.constant 0 : index
    %c0_176 = arith.constant 0 : index
    %294 = vector.load %arg10[%c4, %c0_175, %c0_176] : memref<5x1x32xf32, #tpu.memory_space<vmem>>, vector<1x1x32xf32>
    %295 = vector.shape_cast %294 : vector<1x1x32xf32> to vector<1x32xf32>
    %296 = vector.broadcast %295 : vector<1x32xf32> to vector<4x32xf32>
    %297 = arith.mulf %293, %296 : vector<4x32xf32>
    %c4_177 = arith.constant 4 : index
    %c0_178 = arith.constant 0 : index
    %c0_179 = arith.constant 0 : index
    %298 = vector.load %arg11[%c4_177, %c0_178, %c0_179] : memref<5x1x32xf32, #tpu.memory_space<vmem>>, vector<1x1x32xf32>
    %299 = vector.shape_cast %298 : vector<1x1x32xf32> to vector<1x32xf32>
    %300 = vector.broadcast %299 : vector<1x32xf32> to vector<4x32xf32>
    %301 = arith.addf %297, %300 : vector<4x32xf32>
    %c0_180 = arith.constant 0 : index
    %c0_181 = arith.constant 0 : index
    %c0_182 = arith.constant 0 : index
    %302 = vector.load %arg16[%c0_180, %c0_181, %c0_182] : memref<1x8x32xf32, #tpu.memory_space<vmem>>, vector<1x8x32xf32>
    %303 = vector.shape_cast %302 : vector<1x8x32xf32> to vector<8x32xf32>
    %304 = vector.shape_cast %163 : vector<8x32xf32> to vector<1x8x32xf32>
    tpu.vector_store %arg16[%c0_180, %c0_181, %c0_182], %304 {strides = array<i32>} : memref<1x8x32xf32, #tpu.memory_space<vmem>>, vector<1x8x32xf32>,
    %c0_183 = arith.constant 0 : index
    %c0_184 = arith.constant 0 : index
    %c0_185 = arith.constant 0 : index
    %305 = vector.load %arg17[%c0_183, %c0_184, %c0_185] : memref<1x16x32xf32, #tpu.memory_space<vmem>>, vector<1x16x32xf32>
    %306 = vector.shape_cast %305 : vector<1x16x32xf32> to vector<16x32xf32>
    %307 = vector.shape_cast %223 : vector<16x32xf32> to vector<1x16x32xf32>
    tpu.vector_store %arg17[%c0_183, %c0_184, %c0_185], %307 {strides = array<i32>} : memref<1x16x32xf32, #tpu.memory_space<vmem>>, vector<1x16x32xf32>,
    %c0_186 = arith.constant 0 : index
    %c0_187 = arith.constant 0 : index
    %c0_188 = arith.constant 0 : index
    %308 = vector.load %arg18[%c0_186, %c0_187, %c0_188] : memref<1x4x32xf32, #tpu.memory_space<vmem>>, vector<1x4x32xf32>
    %309 = vector.shape_cast %308 : vector<1x4x32xf32> to vector<4x32xf32>
    %310 = vector.shape_cast %301 : vector<4x32xf32> to vector<1x4x32xf32>
    tpu.vector_store %arg18[%c0_186, %c0_187, %c0_188], %310 {strides = array<i32>} : memref<1x4x32xf32, #tpu.memory_space<vmem>>, vector<1x4x32xf32>,
    return
  }
  func.func @transform_0(%arg0: i32) -> (i32, i32, i32) {
    %c0_i32 = arith.constant 0 : i32
    %c0_i32_0 = arith.constant 0 : i32
    %c0_i32_1 = arith.constant 0 : i32
    return %arg0, %c0_i32, %c0_i32_0 : i32, i32, i32
  }
  func.func @transform_1(%arg0: i32) -> (i32, i32, i32) {
    %c0_i32 = arith.constant 0 : i32
    %c0_i32_0 = arith.constant 0 : i32
    %c0_i32_1 = arith.constant 0 : i32
    return %arg0, %c0_i32, %c0_i32_0 : i32, i32, i32
  }
  func.func @transform_2(%arg0: i32) -> (i32, i32, i32) {
    %c0_i32 = arith.constant 0 : i32
    %c0_i32_0 = arith.constant 0 : i32
    %c0_i32_1 = arith.constant 0 : i32
    return %arg0, %c0_i32, %c0_i32_0 : i32, i32, i32
  }
  func.func @transform_3(%arg0: i32) -> (i32, i32, i32) {
    %c0_i32 = arith.constant 0 : i32
    %c0_i32_0 = arith.constant 0 : i32
    %c0_i32_1 = arith.constant 0 : i32
    %c0_i32_2 = arith.constant 0 : i32
    return %c0_i32, %c0_i32_0, %c0_i32_1 : i32, i32, i32
  }
  func.func @transform_4(%arg0: i32) -> (i32, i32, i32) {
    %c0_i32 = arith.constant 0 : i32
    %c0_i32_0 = arith.constant 0 : i32
    %c0_i32_1 = arith.constant 0 : i32
    %c0_i32_2 = arith.constant 0 : i32
    return %c0_i32, %c0_i32_0, %c0_i32_1 : i32, i32, i32
  }
  func.func @transform_5(%arg0: i32) -> (i32, i32, i32) {
    %c0_i32 = arith.constant 0 : i32
    %c0_i32_0 = arith.constant 0 : i32
    %c0_i32_1 = arith.constant 0 : i32
    %c0_i32_2 = arith.constant 0 : i32
    return %c0_i32, %c0_i32_0, %c0_i32_1 : i32, i32, i32
  }
  func.func @transform_6(%arg0: i32) -> (i32, i32, i32) {
    %c0_i32 = arith.constant 0 : i32
    %c0_i32_0 = arith.constant 0 : i32
    %c0_i32_1 = arith.constant 0 : i32
    %c0_i32_2 = arith.constant 0 : i32
    return %c0_i32, %c0_i32_0, %c0_i32_1 : i32, i32, i32
  }
  func.func @transform_7(%arg0: i32) -> (i32, i32, i32) {
    %c0_i32 = arith.constant 0 : i32
    %c0_i32_0 = arith.constant 0 : i32
    %c0_i32_1 = arith.constant 0 : i32
    %c0_i32_2 = arith.constant 0 : i32
    return %c0_i32, %c0_i32_0, %c0_i32_1 : i32, i32, i32
  }
  func.func @transform_8(%arg0: i32) -> (i32, i32, i32) {
    %c0_i32 = arith.constant 0 : i32
    %c0_i32_0 = arith.constant 0 : i32
    %c0_i32_1 = arith.constant 0 : i32
    %c0_i32_2 = arith.constant 0 : i32
    return %c0_i32, %c0_i32_0, %c0_i32_1 : i32, i32, i32
  }
  func.func @transform_9(%arg0: i32) -> (i32, i32, i32) {
    %c0_i32 = arith.constant 0 : i32
    %c0_i32_0 = arith.constant 0 : i32
    %c0_i32_1 = arith.constant 0 : i32
    %c0_i32_2 = arith.constant 0 : i32
    return %c0_i32, %c0_i32_0, %c0_i32_1 : i32, i32, i32
  }
  func.func @transform_10(%arg0: i32) -> (i32, i32, i32) {
    %c0_i32 = arith.constant 0 : i32
    %c0_i32_0 = arith.constant 0 : i32
    %c0_i32_1 = arith.constant 0 : i32
    %c0_i32_2 = arith.constant 0 : i32
    return %c0_i32, %c0_i32_0, %c0_i32_1 : i32, i32, i32
  }
  func.func @transform_11(%arg0: i32) -> (i32, i32) {
    %c0_i32 = arith.constant 0 : i32
    %c0_i32_0 = arith.constant 0 : i32
    %c0_i32_1 = arith.constant 0 : i32
    return %c0_i32, %c0_i32_0 : i32, i32
  }
  func.func @transform_12(%arg0: i32) -> (i32, i32) {
    %c0_i32 = arith.constant 0 : i32
    %c0_i32_0 = arith.constant 0 : i32
    %c0_i32_1 = arith.constant 0 : i32
    return %c0_i32, %c0_i32_0 : i32, i32
  }
  func.func @transform_13(%arg0: i32) -> (i32, i32) {
    %c0_i32 = arith.constant 0 : i32
    %c0_i32_0 = arith.constant 0 : i32
    %c0_i32_1 = arith.constant 0 : i32
    return %c0_i32, %c0_i32_0 : i32, i32
  }
  func.func @transform_14(%arg0: i32) -> (i32, i32) {
    %c0_i32 = arith.constant 0 : i32
    %c0_i32_0 = arith.constant 0 : i32
    %c0_i32_1 = arith.constant 0 : i32
    return %c0_i32, %c0_i32_0 : i32, i32
  }
  func.func @transform_15(%arg0: i32) -> (i32, i32, i32) {
    %c0_i32 = arith.constant 0 : i32
    %c0_i32_0 = arith.constant 0 : i32
    %c0_i32_1 = arith.constant 0 : i32
    return %arg0, %c0_i32, %c0_i32_0 : i32, i32, i32
  }
  func.func @transform_16(%arg0: i32) -> (i32, i32, i32) {
    %c0_i32 = arith.constant 0 : i32
    %c0_i32_0 = arith.constant 0 : i32
    %c0_i32_1 = arith.constant 0 : i32
    return %arg0, %c0_i32, %c0_i32_0 : i32, i32, i32
  }
  func.func @transform_17(%arg0: i32) -> (i32, i32, i32) {
    %c0_i32 = arith.constant 0 : i32
    %c0_i32_0 = arith.constant 0 : i32
    %c0_i32_1 = arith.constant 0 : i32
    return %arg0, %c0_i32, %c0_i32_0 : i32, i32, i32
  }
}

</mosaic_0001>

<llo_original>
// kernel: two_way_attention_block.1
$region0: #{two_way_attention_block.1}
  #allocation0 [shape = 'u32[]', space=smem, size = 0x4, offset = 0x4, fixed_abs, tag = 'smem constant byte address 0x4 - core index']
  #allocation1 [shape = 'u32[144,128]{1,0:T(1,128)}', space=vmem, size = 0x12000, scoped, tag = 'internal scratch']
  %s0 = inlined_call_operand.hbm [shape: f32[2,8,32], index: 0, kind: input, shape index: {}]
  %s1 = inlined_call_operand.hbm [shape: f32[2,16,32], index: 1, kind: input, shape index: {}]
  %s2 = inlined_call_operand.vmem [shape: f32[2,4,32], index: 2, kind: input, shape index: {}]
  %s3 = inlined_call_operand.hbm [shape: f32[4,32,64], index: 3, kind: input, shape index: {}]
  %s4 = inlined_call_operand.vmem [shape: f32[4,1,64], index: 4, kind: input, shape index: {}]
  %s5 = inlined_call_operand.hbm [shape: f32[4,32,64], index: 5, kind: input, shape index: {}]
  %s6 = inlined_call_operand.vmem [shape: f32[4,1,64], index: 6, kind: input, shape index: {}]
  %s7 = inlined_call_operand.hbm [shape: f32[4,64,32], index: 7, kind: input, shape index: {}]
  %s8 = inlined_call_operand.vmem [shape: f32[4,1,32], index: 8, kind: input, shape index: {}]
  %s9 = inlined_call_operand.vmem [shape: f32[5,1,32], index: 9, kind: input, shape index: {}]
  %s10 = inlined_call_operand.vmem [shape: f32[5,1,32], index: 10, kind: input, shape index: {}]
  %s11 = inlined_call_operand.vmem [shape: f32[32,64], index: 11, kind: input, shape index: {}]
  %s12 = inlined_call_operand.vmem [shape: f32[1,64], index: 12, kind: input, shape index: {}]
  %s13 = inlined_call_operand.hbm [shape: f32[64,32], index: 13, kind: input, shape index: {}]
  %s14 = inlined_call_operand.vmem [shape: f32[1,32], index: 14, kind: input, shape index: {}]
  %s15 = inlined_call_operand.hbm [shape: f32[2,8,32], index: 15, kind: output, shape index: {0}]
  %s16 = inlined_call_operand.hbm [shape: f32[2,16,32], index: 16, kind: output, shape index: {1}]
  %s17 = inlined_call_operand.hbm [shape: f32[2,4,32], index: 17, kind: output, shape index: {2}]
  %18 = xla_tuple %s15, %s16, %s17
  %s19 = sld [smem:[#allocation0]]
  $region133: #{two_way_attention_block.1} parent=0
    _
  %s21 = ssub.s32 1, %s19
  %s22 = scalar_select 0, %s21, %s19
  $region1: #{two_way_attention_block.1} parent=0
    #allocation2 [shape = 'u8[8192]{0}', space=vmem, size = 0x2000, scoped, tag = 'input window, operand 0']
    #allocation3 [shape = 's32[2]{0}', space=sflag, size = 0x8, scoped, tag = 'scoped memory for two_way_attention_block.1']
    #allocation4 [shape = 's32[2]{0}', space=sflag, size = 0x8, scoped, tag = 'scoped memory for two_way_attention_block.1']
    #allocation5 [shape = 'u8[16384]{0}', space=vmem, size = 0x4000, scoped, tag = 'input window, operand 1']
    #allocation6 [shape = 's32[2]{0}', space=sflag, size = 0x8, scoped, tag = 'scoped memory for two_way_attention_block.1']
    #allocation7 [shape = 'u8[65536]{0}', space=vmem, size = 0x10000, scoped, tag = 'input window, operand 3, single buffered']
    #allocation8 [shape = 'u8[65536]{0}', space=vmem, size = 0x10000, scoped, tag = 'input window, operand 5, single buffered']
    #allocation9 [shape = 's32[1]{0}', space=sflag, size = 0x4, scoped, tag = 'scoped memory for two_way_attention_block.1']
    #allocation10 [shape = 'u8[131072]{0}', space=vmem, size = 0x20000, scoped, tag = 'input window, operand 7, single buffered']
    #allocation11 [shape = 'u8[32768]{0}', space=vmem, size = 0x8000, scoped, tag = 'input window, operand 13, single buffered']
    #allocation12 [shape = 's32[1]{0}', space=sflag, size = 0x4, scoped, tag = 'scoped memory for two_way_attention_block.1']
    #allocation13 [shape = 'u8[8192]{0}', space=vmem, size = 0x2000, scoped, tag = 'output window, operand 0']
    #allocation14 [shape = 'u8[16384]{0}', space=vmem, size = 0x4000, scoped, tag = 'output window, operand 1']
    #allocation15 [shape = 's32[2]{0}', space=sflag, size = 0x8, scoped, tag = 'scoped memory for two_way_attention_block.1']
    #allocation16 [shape = 'u8[4096]{0}', space=vmem, size = 0x1000, scoped, tag = 'output window, operand 2']
    %23 = vsyncpa [#allocation3], 0
    %s24 = scalar_lea.sflag [#allocation3], 1
    %25 = vsyncpa %s24, 0
    %26 = vsyncpa [#allocation6], 0
    %s27 = scalar_lea.sflag [#allocation6], 1
    %28 = vsyncpa %s27, 0
    %29 = vsyncpa [#allocation9], 0
    %30 = vsyncpa [#allocation12], 0
    %31 = vsyncpa [#allocation4], 0
    %s32 = scalar_lea.sflag [#allocation4], 1
    %33 = vsyncpa %s32, 0
    %34 = vsyncpa [#allocation15], 0
    %s35 = scalar_lea.sflag [#allocation15], 1
    %36 = vsyncpa %s35, 0
    loop: start=0, step=1, limit=4
    $region2: #{two_way_attention_block.1} parent=1 // loop_pre_header
      _
    $region3: #{two_way_attention_block.1} parent=1 // loop_header
      %s38 = sphi 0, %s42
      %p39 = scmp.ge.s32.totalorder %s38, 4
      %s48 = sphi 0, %s50
      %s51 = sphi 0, %s48
      %s52 = sphi 0, %s51
      %s68 = sphi 0, %s52
      %s74 = sphi 0, %s76
      %s77 = sphi 0, %s74
      %s78 = sphi 0, %s77
      %s94 = sphi 0, %s78
      %s100 = sphi 0, %s102
      %s103 = sphi 0, %s100
      %s104 = sphi 0, %s103
      %s120 = sphi 0, %s104
      %s124 = sphi 0, %s124
      %s126 = sphi 0, %s124
      %s127 = sphi 0, %s126
      %s141 = sphi 0, %s127
      %s145 = sphi 0, %s145
      %s147 = sphi 0, %s145
      %s148 = sphi 0, %s147
      %s162 = sphi 0, %s148
      %s166 = sphi 0, %s166
      %s168 = sphi 0, %s166
      %s169 = sphi 0, %s168
      %s183 = sphi 0, %s169
      %s187 = sphi 0, %s187
      %s189 = sphi 0, %s187
      %s190 = sphi 0, %s189
      %s204 = sphi 0, %s190
      %s208 = sphi 0, %s208
      %s210 = sphi 0, %s208
      %s211 = sphi 0, %s210
      %s225 = sphi 0, %s211
      %s229 = sphi 0, %s229
      %s231 = sphi 0, %s229
      %s232 = sphi 0, %s231
      %s246 = sphi 0, %s232
      %s250 = sphi 0, %s250
      %s252 = sphi 0, %s250
      %s253 = sphi 0, %s252
      %s267 = sphi 0, %s253
      %s271 = sphi 0, %s271
      %s273 = sphi 0, %s271
      %s274 = sphi 0, %s273
      %s288 = sphi 0, %s274
      %s292 = sphi 0, %s292
      %s294 = sphi 0, %s292
      %s295 = sphi 0, %s294
      %s309 = sphi 0, %s295
      %s313 = sphi 0, %s313
      %s315 = sphi 0, %s313
      %s316 = sphi 0, %s315
      %s330 = sphi 0, %s316
      %s334 = sphi 0, %s334
      %s336 = sphi 0, %s334
      %s337 = sphi 0, %s336
      %s351 = sphi 0, %s337
      %s355 = sphi 0, %s355
      %s357 = sphi 0, %s355
      %s358 = sphi 0, %s357
      %s372 = sphi 0, %s358
      %s378 = sphi 0, %s380
      %s381 = sphi 0, %s378
      %s382 = sphi 0, %s381
      %s398 = sphi 0, %s382
      %s404 = sphi 0, %s406
      %s407 = sphi 0, %s404
      %s408 = sphi 0, %s407
      %s424 = sphi 0, %s408
      %s430 = sphi 0, %s432
      %s433 = sphi 0, %s430
      %s434 = sphi 0, %s433
      %s450 = sphi 0, %s434
    $region4: #{two_way_attention_block.1} parent=1 // loop_header_branch
      %41 = sbr.rel (%p39) target = $region8
    $region5: #{two_way_attention_block.1} parent=1 // loop_body
      %s43 = ssub.s32 %s38, 1
      %s44 = ssub.s32 %s38, 2
      %s45 = sadd.s32 %s38, 1
      %s46 = ssub.s32 %s38, %s45
      %p47 = scmp.eq.s32.totalorder %s46, 0
      %s49 = sadd.s32 %s48, 1
      %s50 = scalar_select %p47, %s48, %s49
      %p53 = pneg %p47
      %p54 = scmp.eq.s32.totalorder %s38, 1
      %p55 = por %p53, %p54
      %p56 = scmp.ne.s32.totalorder %s48, %s51
      %p57 = scmp.eq.s32.totalorder %s38, 0
      %p58 = por %p56, %p57
      %p59 = scmp.ne.s32.totalorder %s48, %s51
      %p60 = scmp.eq.s32.totalorder %s43, 1
      %p61 = por %p59, %p60
      %p62 = scmp.ne.s32.totalorder %s51, %s52
      %p63 = scmp.eq.s32.totalorder %s43, 0
      %p64 = por %p62, %p63
      %p65 = scmp.ne.s32.totalorder %s51, %s52
      %p66 = scmp.eq.s32.totalorder %s44, 1
      %p67 = por %p65, %p66
      %p69 = scmp.ne.s32.totalorder %s52, %s68
      %p70 = scmp.eq.s32.totalorder %s44, 0
      %p71 = por %p69, %p70
      %s72 = ssub.s32 %s38, %s45
      %p73 = scmp.eq.s32.totalorder %s72, 0
      %s75 = sadd.s32 %s74, 1
      %s76 = scalar_select %p73, %s74, %s75
      %p79 = pneg %p73
      %p80 = scmp.eq.s32.totalorder %s38, 1
      %p81 = por %p79, %p80
      %p82 = scmp.ne.s32.totalorder %s74, %s77
      %p83 = scmp.eq.s32.totalorder %s38, 0
      %p84 = por %p82, %p83
      %p85 = scmp.ne.s32.totalorder %s74, %s77
      %p86 = scmp.eq.s32.totalorder %s43, 1
      %p87 = por %p85, %p86
      %p88 = scmp.ne.s32.totalorder %s77, %s78
      %p89 = scmp.eq.s32.totalorder %s43, 0
      %p90 = por %p88, %p89
      %p91 = scmp.ne.s32.totalorder %s77, %s78
      %p92 = scmp.eq.s32.totalorder %s44, 1
      %p93 = por %p91, %p92
      %p95 = scmp.ne.s32.totalorder %s78, %s94
      %p96 = scmp.eq.s32.totalorder %s44, 0
      %p97 = por %p95, %p96
      %s98 = ssub.s32 %s38, %s45
      %p99 = scmp.eq.s32.totalorder %s98, 0
      %s101 = sadd.s32 %s100, 1
      %s102 = scalar_select %p99, %s100, %s101
      %p105 = pneg %p99
      %p106 = scmp.eq.s32.totalorder %s38, 1
      %p107 = por %p105, %p106
      %p108 = scmp.ne.s32.totalorder %s100, %s103
      %p109 = scmp.eq.s32.totalorder %s38, 0
      %p110 = por %p108, %p109
      %p111 = scmp.ne.s32.totalorder %s100, %s103
      %p112 = scmp.eq.s32.totalorder %s43, 1
      %p113 = por %p111, %p112
      %p114 = scmp.ne.s32.totalorder %s103, %s104
      %p115 = scmp.eq.s32.totalorder %s43, 0
      %p116 = por %p114, %p115
      %p117 = scmp.ne.s32.totalorder %s103, %s104
      %p118 = scmp.eq.s32.totalorder %s44, 1
      %p119 = por %p117, %p118
      %p121 = scmp.ne.s32.totalorder %s104, %s120
      %p122 = scmp.eq.s32.totalorder %s44, 0
      %p123 = por %p121, %p122
      %s125 = sadd.s32 %s124, 1
      %p128 = scmp.eq.s32.totalorder %s38, 1
      %p129 = scmp.ne.s32.totalorder %s124, %s126
      %p130 = scmp.eq.s32.totalorder %s38, 0
      %p131 = por %p129, %p130
      %p132 = scmp.ne.s32.totalorder %s124, %s126
      %p133 = scmp.eq.s32.totalorder %s43, 1
      %p134 = por %p132, %p133
      %p135 = scmp.ne.s32.totalorder %s126, %s127
      %p136 = scmp.eq.s32.totalorder %s43, 0
      %p137 = por %p135, %p136
      %p138 = scmp.ne.s32.totalorder %s126, %s127
      %p139 = scmp.eq.s32.totalorder %s44, 1
      %p140 = por %p138, %p139
      %p142 = scmp.ne.s32.totalorder %s127, %s141
      %p143 = scmp.eq.s32.totalorder %s44, 0
      %p144 = por %p142, %p143
      %s146 = sadd.s32 %s145, 1
      %p149 = scmp.eq.s32.totalorder %s38, 1
      %p150 = scmp.ne.s32.totalorder %s145, %s147
      %p151 = scmp.eq.s32.totalorder %s38, 0
      %p152 = por %p150, %p151
      %p153 = scmp.ne.s32.totalorder %s145, %s147
      %p154 = scmp.eq.s32.totalorder %s43, 1
      %p155 = por %p153, %p154
      %p156 = scmp.ne.s32.totalorder %s147, %s148
      %p157 = scmp.eq.s32.totalorder %s43, 0
      %p158 = por %p156, %p157
      %p159 = scmp.ne.s32.totalorder %s147, %s148
      %p160 = scmp.eq.s32.totalorder %s44, 1
      %p161 = por %p159, %p160
      %p163 = scmp.ne.s32.totalorder %s148, %s162
      %p164 = scmp.eq.s32.totalorder %s44, 0
      %p165 = por %p163, %p164
      %s167 = sadd.s32 %s166, 1
      %p170 = scmp.eq.s32.totalorder %s38, 1
      %p171 = scmp.ne.s32.totalorder %s166, %s168
      %p172 = scmp.eq.s32.totalorder %s38, 0
      %p173 = por %p171, %p172
      %p174 = scmp.ne.s32.totalorder %s166, %s168
      %p175 = scmp.eq.s32.totalorder %s43, 1
      %p176 = por %p174, %p175
      %p177 = scmp.ne.s32.totalorder %s168, %s169
      %p178 = scmp.eq.s32.totalorder %s43, 0
      %p179 = por %p177, %p178
      %p180 = scmp.ne.s32.totalorder %s168, %s169
      %p181 = scmp.eq.s32.totalorder %s44, 1
      %p182 = por %p180, %p181
      %p184 = scmp.ne.s32.totalorder %s169, %s183
      %p185 = scmp.eq.s32.totalorder %s44, 0
      %p186 = por %p184, %p185
      %s188 = sadd.s32 %s187, 1
      %p191 = scmp.eq.s32.totalorder %s38, 1
      %p192 = scmp.ne.s32.totalorder %s187, %s189
      %p193 = scmp.eq.s32.totalorder %s38, 0
      %p194 = por %p192, %p193
      %p195 = scmp.ne.s32.totalorder %s187, %s189
      %p196 = scmp.eq.s32.totalorder %s43, 1
      %p197 = por %p195, %p196
      %p198 = scmp.ne.s32.totalorder %s189, %s190
      %p199 = scmp.eq.s32.totalorder %s43, 0
      %p200 = por %p198, %p199
      %p201 = scmp.ne.s32.totalorder %s189, %s190
      %p202 = scmp.eq.s32.totalorder %s44, 1
      %p203 = por %p201, %p202
      %p205 = scmp.ne.s32.totalorder %s190, %s204
      %p206 = scmp.eq.s32.totalorder %s44, 0
      %p207 = por %p205, %p206
      %s209 = sadd.s32 %s208, 1
      %p212 = scmp.eq.s32.totalorder %s38, 1
      %p213 = scmp.ne.s32.totalorder %s208, %s210
      %p214 = scmp.eq.s32.totalorder %s38, 0
      %p215 = por %p213, %p214
      %p216 = scmp.ne.s32.totalorder %s208, %s210
      %p217 = scmp.eq.s32.totalorder %s43, 1
      %p218 = por %p216, %p217
      %p219 = scmp.ne.s32.totalorder %s210, %s211
      %p220 = scmp.eq.s32.totalorder %s43, 0
      %p221 = por %p219, %p220
      %p222 = scmp.ne.s32.totalorder %s210, %s211
      %p223 = scmp.eq.s32.totalorder %s44, 1
      %p224 = por %p222, %p223
      %p226 = scmp.ne.s32.totalorder %s211, %s225
      %p227 = scmp.eq.s32.totalorder %s44, 0
      %p228 = por %p226, %p227
      %s230 = sadd.s32 %s229, 1
      %p233 = scmp.eq.s32.totalorder %s38, 1
      %p234 = scmp.ne.s32.totalorder %s229, %s231
      %p235 = scmp.eq.s32.totalorder %s38, 0
      %p236 = por %p234, %p235
      %p237 = scmp.ne.s32.totalorder %s229, %s231
      %p238 = scmp.eq.s32.totalorder %s43, 1
      %p239 = por %p237, %p238
      %p240 = scmp.ne.s32.totalorder %s231, %s232
      %p241 = scmp.eq.s32.totalorder %s43, 0
      %p242 = por %p240, %p241
      %p243 = scmp.ne.s32.totalorder %s231, %s232
      %p244 = scmp.eq.s32.totalorder %s44, 1
      %p245 = por %p243, %p244
      %p247 = scmp.ne.s32.totalorder %s232, %s246
      %p248 = scmp.eq.s32.totalorder %s44, 0
      %p249 = por %p247, %p248
      %s251 = sadd.s32 %s250, 1
      %p254 = scmp.eq.s32.totalorder %s38, 1
      %p255 = scmp.ne.s32.totalorder %s250, %s252
      %p256 = scmp.eq.s32.totalorder %s38, 0
      %p257 = por %p255, %p256
      %p258 = scmp.ne.s32.totalorder %s250, %s252
      %p259 = scmp.eq.s32.totalorder %s43, 1
      %p260 = por %p258, %p259
      %p261 = scmp.ne.s32.totalorder %s252, %s253
      %p262 = scmp.eq.s32.totalorder %s43, 0
      %p263 = por %p261, %p262
      %p264 = scmp.ne.s32.totalorder %s252, %s253
      %p265 = scmp.eq.s32.totalorder %s44, 1
      %p266 = por %p264, %p265
      %p268 = scmp.ne.s32.totalorder %s253, %s267
      %p269 = scmp.eq.s32.totalorder %s44, 0
      %p270 = por %p268, %p269
      %s272 = sadd.s32 %s271, 1
      %p275 = scmp.eq.s32.totalorder %s38, 1
      %p276 = scmp.ne.s32.totalorder %s271, %s273
      %p277 = scmp.eq.s32.totalorder %s38, 0
      %p278 = por %p276, %p277
      %p279 = scmp.ne.s32.totalorder %s271, %s273
      %p280 = scmp.eq.s32.totalorder %s43, 1
      %p281 = por %p279, %p280
      %p282 = scmp.ne.s32.totalorder %s273, %s274
      %p283 = scmp.eq.s32.totalorder %s43, 0
      %p284 = por %p282, %p283
      %p285 = scmp.ne.s32.totalorder %s273, %s274
      %p286 = scmp.eq.s32.totalorder %s44, 1
      %p287 = por %p285, %p286
      %p289 = scmp.ne.s32.totalorder %s274, %s288
      %p290 = scmp.eq.s32.totalorder %s44, 0
      %p291 = por %p289, %p290
      %s293 = sadd.s32 %s292, 1
      %p296 = scmp.eq.s32.totalorder %s38, 1
      %p297 = scmp.ne.s32.totalorder %s292, %s294
      %p298 = scmp.eq.s32.totalorder %s38, 0
      %p299 = por %p297, %p298
      %p300 = scmp.ne.s32.totalorder %s292, %s294
      %p301 = scmp.eq.s32.totalorder %s43, 1
      %p302 = por %p300, %p301
      %p303 = scmp.ne.s32.totalorder %s294, %s295
      %p304 = scmp.eq.s32.totalorder %s43, 0
      %p305 = por %p303, %p304
      %p306 = scmp.ne.s32.totalorder %s294, %s295
      %p307 = scmp.eq.s32.totalorder %s44, 1
      %p308 = por %p306, %p307
      %p310 = scmp.ne.s32.totalorder %s295, %s309
      %p311 = scmp.eq.s32.totalorder %s44, 0
      %p312 = por %p310, %p311
      %s314 = sadd.s32 %s313, 1
      %p317 = scmp.eq.s32.totalorder %s38, 1
      %p318 = scmp.ne.s32.totalorder %s313, %s315
      %p319 = scmp.eq.s32.totalorder %s38, 0
      %p320 = por %p318, %p319
      %p321 = scmp.ne.s32.totalorder %s313, %s315
      %p322 = scmp.eq.s32.totalorder %s43, 1
      %p323 = por %p321, %p322
      %p324 = scmp.ne.s32.totalorder %s315, %s316
      %p325 = scmp.eq.s32.totalorder %s43, 0
      %p326 = por %p324, %p325
      %p327 = scmp.ne.s32.totalorder %s315, %s316
      %p328 = scmp.eq.s32.totalorder %s44, 1
      %p329 = por %p327, %p328
      %p331 = scmp.ne.s32.totalorder %s316, %s330
      %p332 = scmp.eq.s32.totalorder %s44, 0
      %p333 = por %p331, %p332
      %s335 = sadd.s32 %s334, 1
      %p338 = scmp.eq.s32.totalorder %s38, 1
      %p339 = scmp.ne.s32.totalorder %s334, %s336
      %p340 = scmp.eq.s32.totalorder %s38, 0
      %p341 = por %p339, %p340
      %p342 = scmp.ne.s32.totalorder %s334, %s336
      %p343 = scmp.eq.s32.totalorder %s43, 1
      %p344 = por %p342, %p343
      %p345 = scmp.ne.s32.totalorder %s336, %s337
      %p346 = scmp.eq.s32.totalorder %s43, 0
      %p347 = por %p345, %p346
      %p348 = scmp.ne.s32.totalorder %s336, %s337
      %p349 = scmp.eq.s32.totalorder %s44, 1
      %p350 = por %p348, %p349
      %p352 = scmp.ne.s32.totalorder %s337, %s351
      %p353 = scmp.eq.s32.totalorder %s44, 0
      %p354 = por %p352, %p353
      %s356 = sadd.s32 %s355, 1
      %p359 = scmp.eq.s32.totalorder %s38, 1
      %p360 = scmp.ne.s32.totalorder %s355, %s357
      %p361 = scmp.eq.s32.totalorder %s38, 0
      %p362 = por %p360, %p361
      %p363 = scmp.ne.s32.totalorder %s355, %s357
      %p364 = scmp.eq.s32.totalorder %s43, 1
      %p365 = por %p363, %p364
      %p366 = scmp.ne.s32.totalorder %s357, %s358
      %p367 = scmp.eq.s32.totalorder %s43, 0
      %p368 = por %p366, %p367
      %p369 = scmp.ne.s32.totalorder %s357, %s358
      %p370 = scmp.eq.s32.totalorder %s44, 1
      %p371 = por %p369, %p370
      %p373 = scmp.ne.s32.totalorder %s358, %s372
      %p374 = scmp.eq.s32.totalorder %s44, 0
      %p375 = por %p373, %p374
      %s376 = ssub.s32 %s38, %s45
      %p377 = scmp.eq.s32.totalorder %s376, 0
      %s379 = sadd.s32 %s378, 1
      %s380 = scalar_select %p377, %s378, %s379
      %p383 = pneg %p377
      %p384 = scmp.eq.s32.totalorder %s38, 1
      %p385 = por %p383, %p384
      %p386 = scmp.ne.s32.totalorder %s378, %s381
      %p387 = scmp.eq.s32.totalorder %s38, 0
      %p388 = por %p386, %p387
      %p389 = scmp.ne.s32.totalorder %s378, %s381
      %p390 = scmp.eq.s32.totalorder %s43, 1
      %p391 = por %p389, %p390
      %p392 = scmp.ne.s32.totalorder %s381, %s382
      %p393 = scmp.eq.s32.totalorder %s43, 0
      %p394 = por %p392, %p393
      %p395 = scmp.ne.s32.totalorder %s381, %s382
      %p396 = scmp.eq.s32.totalorder %s44, 1
      %p397 = por %p395, %p396
      %p399 = scmp.ne.s32.totalorder %s382, %s398
      %p400 = scmp.eq.s32.totalorder %s44, 0
      %p401 = por %p399, %p400
      %s402 = ssub.s32 %s38, %s45
      %p403 = scmp.eq.s32.totalorder %s402, 0
      %s405 = sadd.s32 %s404, 1
      %s406 = scalar_select %p403, %s404, %s405
      %p409 = pneg %p403
      %p410 = scmp.eq.s32.totalorder %s38, 1
      %p411 = por %p409, %p410
      %p412 = scmp.ne.s32.totalorder %s404, %s407
      %p413 = scmp.eq.s32.totalorder %s38, 0
      %p414 = por %p412, %p413
      %p415 = scmp.ne.s32.totalorder %s404, %s407
      %p416 = scmp.eq.s32.totalorder %s43, 1
      %p417 = por %p415, %p416
      %p418 = scmp.ne.s32.totalorder %s407, %s408
      %p419 = scmp.eq.s32.totalorder %s43, 0
      %p420 = por %p418, %p419
      %p421 = scmp.ne.s32.totalorder %s407, %s408
      %p422 = scmp.eq.s32.totalorder %s44, 1
      %p423 = por %p421, %p422
      %p425 = scmp.ne.s32.totalorder %s408, %s424
      %p426 = scmp.eq.s32.totalorder %s44, 0
      %p427 = por %p425, %p426
      %s428 = ssub.s32 %s38, %s45
      %p429 = scmp.eq.s32.totalorder %s428, 0
      %s431 = sadd.s32 %s430, 1
      %s432 = scalar_select %p429, %s430, %s431
      %p435 = pneg %p429
      %p436 = scmp.eq.s32.totalorder %s38, 1
      %p437 = por %p435, %p436
      %p438 = scmp.ne.s32.totalorder %s430, %s433
      %p439 = scmp.eq.s32.totalorder %s38, 0
      %p440 = por %p438, %p439
      %p441 = scmp.ne.s32.totalorder %s430, %s433
      %p442 = scmp.eq.s32.totalorder %s43, 1
      %p443 = por %p441, %p442
      %p444 = scmp.ne.s32.totalorder %s433, %s434
      %p445 = scmp.eq.s32.totalorder %s43, 0
      %p446 = por %p444, %p445
      %p447 = scmp.ne.s32.totalorder %s433, %s434
      %p448 = scmp.eq.s32.totalorder %s44, 1
      %p449 = por %p447, %p448
      %p451 = scmp.ne.s32.totalorder %s434, %s450
      %p452 = scmp.eq.s32.totalorder %s44, 0
      %p453 = por %p451, %p452
      %p454 = scmp.le.s32.totalorder 1, %s38
      %p455 = scmp.lt.s32.totalorder %s38, 3
      %p456 = pnand %p454, %p455
      %p457 = pneg %p456
      // Predicated region
      $region9: #{two_way_attention_block.1} parent=5 // pred_check
        _
      $region10: #{two_way_attention_block.1} parent=5 // pred_check_branch
        %459 = sbr.rel (%p456) target = $region12
      $region11: #{two_way_attention_block.1} parent=5 // pred_region
        %s460 = ssub.s32 %s38, 1
        // Predicated region
        $region13: #{two_way_attention_block.1} parent=11 // pred_check
          %p461 = pneg %p137
        $region14: #{two_way_attention_block.1} parent=11 // pred_check_branch
          %463 = sbr.rel (%p461) target = $region16
        $region15: #{two_way_attention_block.1} parent=11 // pred_region
          %s465 = ssub.s32 2048, 2048
          %466 = vsyncadd [#allocation6], %s465
          %s467 = sshll.u32 [#allocation7], 4
          %s468 = int_to_ptr.vmem [resolvable:$true] %s467
          %473 = dma.hbm_to_vmem [thread:$0]  %s3, 2048, %s468, [#allocation6], 128, 128, 8
        $region16: #{two_way_attention_block.1} parent=11 // pred_fallthru
          _
        // Predicated region
        $region17: #{two_way_attention_block.1} parent=11 // pred_check
          %p474 = pneg %p158
        $region18: #{two_way_attention_block.1} parent=11 // pred_check_branch
          %476 = sbr.rel (%p474) target = $region20
        $region19: #{two_way_attention_block.1} parent=11 // pred_region
          _
        $region20: #{two_way_attention_block.1} parent=11 // pred_fallthru
          _
        // Predicated region
        $region21: #{two_way_attention_block.1} parent=11 // pred_check
          %p477 = pneg %p179
        $region22: #{two_way_attention_block.1} parent=11 // pred_check_branch
          %479 = sbr.rel (%p477) target = $region24
        $region23: #{two_way_attention_block.1} parent=11 // pred_region
          %s481 = ssub.s32 2048, 2048
          %482 = vsyncadd [#allocation9], %s481
          %s483 = sshll.u32 [#allocation8], 4
          %s484 = int_to_ptr.vmem [resolvable:$true] %s483
          %489 = dma.hbm_to_vmem [thread:$0]  %s5, 2048, %s484, [#allocation9], 128, 128, 8
        $region24: #{two_way_attention_block.1} parent=11 // pred_fallthru
          _
        // Predicated region
        $region25: #{two_way_attention_block.1} parent=11 // pred_check
          %p490 = pneg %p200
        $region26: #{two_way_attention_block.1} parent=11 // pred_check_branch
          %492 = sbr.rel (%p490) target = $region28
        $region27: #{two_way_attention_block.1} parent=11 // pred_region
          _
        $region28: #{two_way_attention_block.1} parent=11 // pred_fallthru
          _
        // Predicated region
        $region29: #{two_way_attention_block.1} parent=11 // pred_check
          %p493 = pneg %p221
        $region30: #{two_way_attention_block.1} parent=11 // pred_check_branch
          %495 = sbr.rel (%p493) target = $region32
        $region31: #{two_way_attention_block.1} parent=11 // pred_region
          %s497 = ssub.s32 4096, 4096
          %498 = vsyncadd [#allocation9], %s497
          %s499 = sshll.u32 [#allocation10], 4
          %s500 = int_to_ptr.vmem [resolvable:$true] %s499
          %505 = dma.hbm_to_vmem [thread:$0]  %s7, 4096, %s500, [#allocation9], 128, 128, 8
        $region32: #{two_way_attention_block.1} parent=11 // pred_fallthru
          _
        // Predicated region
        $region33: #{two_way_attention_block.1} parent=11 // pred_check
          %p506 = pneg %p242
        $region34: #{two_way_attention_block.1} parent=11 // pred_check_branch
          %508 = sbr.rel (%p506) target = $region36
        $region35: #{two_way_attention_block.1} parent=11 // pred_region
          _
        $region36: #{two_way_attention_block.1} parent=11 // pred_fallthru
          _
        // Predicated region
        $region37: #{two_way_attention_block.1} parent=11 // pred_check
          %p509 = pneg %p263
        $region38: #{two_way_attention_block.1} parent=11 // pred_check_branch
          %511 = sbr.rel (%p509) target = $region40
        $region39: #{two_way_attention_block.1} parent=11 // pred_region
          _
        $region40: #{two_way_attention_block.1} parent=11 // pred_fallthru
          _
        // Predicated region
        $region41: #{two_way_attention_block.1} parent=11 // pred_check
          %p512 = pneg %p284
        $region42: #{two_way_attention_block.1} parent=11 // pred_check_branch
          %514 = sbr.rel (%p512) target = $region44
        $region43: #{two_way_attention_block.1} parent=11 // pred_region
          _
        $region44: #{two_way_attention_block.1} parent=11 // pred_fallthru
          _
        // Predicated region
        $region45: #{two_way_attention_block.1} parent=11 // pred_check
          %p515 = pneg %p305
        $region46: #{two_way_attention_block.1} parent=11 // pred_check_branch
          %517 = sbr.rel (%p515) target = $region48
        $region47: #{two_way_attention_block.1} parent=11 // pred_region
          _
        $region48: #{two_way_attention_block.1} parent=11 // pred_fallthru
          _
        // Predicated region
        $region49: #{two_way_attention_block.1} parent=11 // pred_check
          %p518 = pneg %p326
        $region50: #{two_way_attention_block.1} parent=11 // pred_check_branch
          %520 = sbr.rel (%p518) target = $region52
        $region51: #{two_way_attention_block.1} parent=11 // pred_region
          _
        $region52: #{two_way_attention_block.1} parent=11 // pred_fallthru
          _
        // Predicated region
        $region53: #{two_way_attention_block.1} parent=11 // pred_check
          %p521 = pneg %p347
        $region54: #{two_way_attention_block.1} parent=11 // pred_check_branch
          %523 = sbr.rel (%p521) target = $region56
        $region55: #{two_way_attention_block.1} parent=11 // pred_region
          %s525 = ssub.s32 1024, 1024
          %526 = vsyncadd [#allocation12], %s525
          %s527 = sshll.u32 [#allocation11], 4
          %s528 = int_to_ptr.vmem [resolvable:$true] %s527
          %533 = dma.hbm_to_vmem [thread:$0]  %s13, 1024, %s528, [#allocation12], 128, 128, 8
        $region56: #{two_way_attention_block.1} parent=11 // pred_fallthru
          _
        // Predicated region
        $region57: #{two_way_attention_block.1} parent=11 // pred_check
          %p534 = pneg %p368
        $region58: #{two_way_attention_block.1} parent=11 // pred_check_branch
          %536 = sbr.rel (%p534) target = $region60
        $region59: #{two_way_attention_block.1} parent=11 // pred_region
          _
        $region60: #{two_way_attention_block.1} parent=11 // pred_fallthru
          _
      $region12: #{two_way_attention_block.1} parent=5 // pred_fallthru
        _
      %p537 = scmp.lt.s32.totalorder %s38, 2
      // Predicated region
      $region61: #{two_way_attention_block.1} parent=5 // pred_check
        %p538 = pneg %p537
      $region62: #{two_way_attention_block.1} parent=5 // pred_check_branch
        %540 = sbr.rel (%p538) target = $region64
      $region63: #{two_way_attention_block.1} parent=5 // pred_region
        // Predicated region
        $region65: #{two_way_attention_block.1} parent=63 // pred_check
          %p541 = pneg %p58
        $region66: #{two_way_attention_block.1} parent=63 // pred_check_branch
          %543 = sbr.rel (%p541) target = $region68
        $region67: #{two_way_attention_block.1} parent=63 // pred_region
          %s544 = sand.u32 %s48, 1
          %s545 = scalar_lea.sflag [#allocation3], %s544
          %s546 = sand.u32 %s48, 1
          %s547 = smul.addr %s546, 8
          %s548 = scalar_lea.vmem [#allocation2], %s547
          %s550 = ssub.s32 128, 128
          %551 = vsyncadd %s545, %s550
          %s552 = smul.addr %s38, 128
          %s553 = scalar_lea.hbm %s0, %s552
          %s555 = sshll.u32 %s548, 4
          %s556 = int_to_ptr.vmem [resolvable:$true] %s555
          %558 = dma.hbm_to_vmem [thread:$0]  %s553, 128, %s556, %s545
        $region68: #{two_way_attention_block.1} parent=63 // pred_fallthru
          _
        // Predicated region
        $region69: #{two_way_attention_block.1} parent=63 // pred_check
          %p559 = pneg %p84
        $region70: #{two_way_attention_block.1} parent=63 // pred_check_branch
          %561 = sbr.rel (%p559) target = $region72
        $region71: #{two_way_attention_block.1} parent=63 // pred_region
          %s562 = sand.u32 %s38, 1
          %s563 = scalar_lea.sflag [#allocation6], %s562
          %s564 = sand.u32 %s74, 1
          %s565 = smul.addr %s564, 16
          %s566 = scalar_lea.vmem [#allocation5], %s565
          %s568 = ssub.s32 256, 256
          %569 = vsyncadd %s563, %s568
          %s570 = smul.addr %s38, 2
          %s571 = smul.addr %s570, 128
          %s572 = scalar_lea.hbm %s1, %s571
          %s573 = sshll.u32 %s566, 4
          %s574 = int_to_ptr.vmem [resolvable:$true] %s573
          %579 = dma.hbm_to_vmem [thread:$0]  %s572, 256, %s574, %s563, 128, 128, 8
        $region72: #{two_way_attention_block.1} parent=63 // pred_fallthru
          _
        // Predicated region
        $region73: #{two_way_attention_block.1} parent=63 // pred_check
          %p580 = pneg %p110
        $region74: #{two_way_attention_block.1} parent=63 // pred_check_branch
          %582 = sbr.rel (%p580) target = $region76
        $region75: #{two_way_attention_block.1} parent=63 // pred_region
          %p583 = scmp.lt.s32.totalorder %s38, 1
          %s584 = scalar_select %p583, %s38, 1
          %s585 = smul.addr %s584, 4
          %s586 = scalar_lea.vmem %s2, %s585
        $region76: #{two_way_attention_block.1} parent=63 // pred_fallthru
          _
      $region64: #{two_way_attention_block.1} parent=5 // pred_fallthru
        _
      %p587 = scmp.le.s32.totalorder 1, %s38
      %p588 = scmp.lt.s32.totalorder %s38, 3
      %p589 = pnand %p587, %p588
      %p590 = pneg %p589
      // Predicated region
      $region77: #{two_way_attention_block.1} parent=5 // pred_check
        _
      $region78: #{two_way_attention_block.1} parent=5 // pred_check_branch
        %592 = sbr.rel (%p589) target = $region80
      $region79: #{two_way_attention_block.1} parent=5 // pred_region
        %s593 = ssub.s32 %s38, 1
        %s594 = sand.u32 %s51, 1
        %s595 = scalar_lea.sflag [#allocation3], %s594
        %s596 = sand.u32 %s51, 1
        %s597 = smul.addr %s596, 8
        %s598 = scalar_lea.vmem [#allocation2], %s597
        // Predicated region
        $region81: #{two_way_attention_block.1} parent=79 // pred_check
          %p599 = pneg %p64
        $region82: #{two_way_attention_block.1} parent=79 // pred_check_branch
          %601 = sbr.rel (%p599) target = $region84
        $region83: #{two_way_attention_block.1} parent=79 // pred_region
          %602 = dma.done %s595, 128
        $region84: #{two_way_attention_block.1} parent=79 // pred_fallthru
          _
        %s603 = sand.u32 %s43, 1
        %s604 = scalar_lea.sflag [#allocation6], %s603
        %s605 = sand.u32 %s77, 1
        %s606 = smul.addr %s605, 16
        %s607 = scalar_lea.vmem [#allocation5], %s606
        // Predicated region
        $region85: #{two_way_attention_block.1} parent=79 // pred_check
          %p608 = pneg %p90
        $region86: #{two_way_attention_block.1} parent=79 // pred_check_branch
          %610 = sbr.rel (%p608) target = $region88
        $region87: #{two_way_attention_block.1} parent=79 // pred_region
          %611 = dma.done %s604, 256
        $region88: #{two_way_attention_block.1} parent=79 // pred_fallthru
          _
        // Predicated region
        $region89: #{two_way_attention_block.1} parent=79 // pred_check
          %p612 = pneg %p137
        $region90: #{two_way_attention_block.1} parent=79 // pred_check_branch
          %614 = sbr.rel (%p612) target = $region92
        $region91: #{two_way_attention_block.1} parent=79 // pred_region
          %615 = dma.done [#allocation6], 2048
        $region92: #{two_way_attention_block.1} parent=79 // pred_fallthru
          _
        // Predicated region
        $region93: #{two_way_attention_block.1} parent=79 // pred_check
          %p616 = pneg %p179
        $region94: #{two_way_attention_block.1} parent=79 // pred_check_branch
          %618 = sbr.rel (%p616) target = $region96
        $region95: #{two_way_attention_block.1} parent=79 // pred_region
          %619 = dma.done [#allocation9], 2048
        $region96: #{two_way_attention_block.1} parent=79 // pred_fallthru
          _
        // Predicated region
        $region97: #{two_way_attention_block.1} parent=79 // pred_check
          %p620 = pneg %p221
        $region98: #{two_way_attention_block.1} parent=79 // pred_check_branch
          %622 = sbr.rel (%p620) target = $region100
        $region99: #{two_way_attention_block.1} parent=79 // pred_region
          %623 = dma.done [#allocation9], 4096
        $region100: #{two_way_attention_block.1} parent=79 // pred_fallthru
          _
        // Predicated region
        $region101: #{two_way_attention_block.1} parent=79 // pred_check
          %p624 = pneg %p347
        $region102: #{two_way_attention_block.1} parent=79 // pred_check_branch
          %626 = sbr.rel (%p624) target = $region104
        $region103: #{two_way_attention_block.1} parent=79 // pred_region
          %627 = dma.done [#allocation12], 1024
        $region104: #{two_way_attention_block.1} parent=79 // pred_fallthru
          _
        %s628 = sand.u32 %s51, 1
        %s629 = scalar_lea.sflag [#allocation3], %s628
        %s630 = sand.u32 %s51, 1
        %s631 = smul.addr %s630, 8
        %s632 = scalar_lea.vmem [#allocation2], %s631
        %p633 = pneg %p64
        %p634 = pneg %p61
        %s635 = sand.u32 %s43, 1
        %s636 = scalar_lea.sflag [#allocation6], %s635
        %s637 = sand.u32 %s77, 1
        %s638 = smul.addr %s637, 16
        %s639 = scalar_lea.vmem [#allocation5], %s638
        %p640 = pneg %p90
        %p641 = pneg %p87
        %p642 = scmp.lt.s32.totalorder %s43, 1
        %s643 = scalar_select %p642, %s43, 1
        %s644 = smul.addr %s643, 4
        %s645 = scalar_lea.vmem %s2, %s644
        %p646 = pneg %p116
        %p647 = pneg %p113
        %p648 = pneg %p137
        %p649 = pneg %p134
        %p650 = pneg %p158
        %p651 = pneg %p155
        %p652 = pneg %p179
        %p653 = pneg %p176
        %p654 = pneg %p200
        %p655 = pneg %p197
        %p656 = pneg %p221
        %p657 = pneg %p218
        %p658 = pneg %p242
        %p659 = pneg %p239
        %p660 = pneg %p263
        %p661 = pneg %p260
        %p662 = pneg %p284
        %p663 = pneg %p281
        %p664 = pneg %p305
        %p665 = pneg %p302
        %p666 = pneg %p326
        %p667 = pneg %p323
        %p668 = pneg %p347
        %p669 = pneg %p344
        %p670 = pneg %p368
        %p671 = pneg %p365
        %p672 = pneg %p394
        %p673 = pneg %p391
        %s674 = sand.u32 %s381, 1
        %s675 = scalar_lea.sflag [#allocation4], %s674
        %s676 = sand.u32 %s381, 1
        %s677 = smul.addr %s676, 8
        %s678 = scalar_lea.vmem [#allocation13], %s677
        %p679 = pneg %p420
        %p680 = pneg %p417
        %s681 = sand.u32 %s43, 1
        %s682 = scalar_lea.sflag [#allocation15], %s681
        %s683 = sand.u32 %s407, 1
        %s684 = smul.addr %s683, 16
        %s685 = scalar_lea.vmem [#allocation14], %s684
        %p686 = pneg %p446
        %p687 = pneg %p443
        %s688 = sand.u32 %s43, 1
        %s689 = scalar_lea.sflag [#allocation15], %s688
        %s690 = sand.u32 %s433, 1
        %s691 = smul.addr %s690, 4
        %s692 = scalar_lea.vmem [#allocation16], %s691
        %p693 = scmp.lt.s32.totalorder %s43, 1
        %s694 = scalar_select %p693, %s43, 1
        %s695 = smul.addr %s694, 4
        %s696 = scalar_lea.vmem %s2, %s695
        %v697 = vld [vmem:[%s598] sm:$0xff]
        %v698 = vld [vmem:[%s607] sm:$0xff]
        %v699 = vld [vmem:[%s607 + $0x8] sm:$0xff]
        %v700 = vld [vmem:[%s696] sm:$0xf]
        %v701 = vld [vmem:[#allocation7] sm:$0xff]
        %v702 = vld [vmem:[#allocation7 + $0x8] sm:$0xff]
        %v703 = vld [vmem:[#allocation7 + $0x10] sm:$0xff]
        %v704 = vld [vmem:[#allocation7 + $0x18] sm:$0xff]
        %v705 = vld [vmem:[%s4] sm:$0x1]
        %v707 = vlaneseq
        %v708 = vshrl.u32 %v707, 7
        %v709 = vsub.s32 0, %v708
        %v710 = vrot.slane %v705, %v709
        %vm712 = vcmask 261120
        %v714 = vsel %vm712, %v697, 0
        %716 = vmatprep.subr.mxu0 0.0
        %717 = vmatpush1.msra.mxu0 %v701
        %718 = vmatprep.subr.mxu0 0.0
        %719 = vmatpush1.msra.mxu0 %v702
        %720 = vmatprep.subr.mxu0 0.0
        %721 = vmatpush1.msra.mxu0 %v703
        %722 = vmatprep.subr.mxu0 0.0
        %723 = vmatpush1.msra.mxu0 %v704
        %724 = vmatprep.subr.mxu0 0.0
        %725 = vmatpush1.msra.mxu0 0.0
        %726 = vmatprep.subr.mxu0 0.0
        %727 = vmatpush1.msra.mxu0 0.0
        %728 = vmatprep.subr.mxu0 0.0
        %729 = vmatpush1.msra.mxu0 0.0
        %730 = vmatprep.subr.mxu0 0.0
        %731 = vmatpush1.msra.mxu0 0.0
        %732 = vmatprep.subr.mxu0 0.0
        %733 = vmatpush1.msra.mxu0 0.0
        %734 = vmatprep.subr.mxu0 0.0
        %735 = vmatpush1.msra.mxu0 0.0
        %736 = vmatprep.subr.mxu0 0.0
        %737 = vmatpush1.msra.mxu0 0.0
        %738 = vmatprep.subr.mxu0 0.0
        %739 = vmatpush1.msra.mxu0 0.0
        %740 = vmatprep.subr.mxu0 0.0
        %741 = vmatpush1.msra.mxu0 0.0
        %742 = vmatprep.subr.mxu0 0.0
        %743 = vmatpush1.msra.mxu0 0.0
        %744 = vmatprep.subr.mxu0 0.0
        %745 = vmatpush1.msra.mxu0 0.0
        %746 = vmatprep.subr.mxu0 0.0
        %747 = vmatpush1.msra.mxu0 0.0
        %748 = vmatprep.subr.mxu0 0.0
        %749 = vmatpush1.msra.mxu0 0.0
        %750 = vmatprep.subr.mxu0 0.0
        %751 = vmatpush1.msra.mxu0 0.0
        %752 = vmatprep.subr.mxu0 0.0
        %753 = vmatpush1.msra.mxu0 0.0
        %754 = vmatprep.subr.mxu0 0.0
        %755 = vmatpush1.msra.mxu0 0.0
        %756 = vmatprep.subr.mxu0 0.0
        %757 = vmatpush1.msra.mxu0 0.0
        %758 = vmatprep.subr.mxu0 0.0
        %759 = vmatpush1.msra.mxu0 0.0
        %760 = vmatprep.subr.mxu0 0.0
        %761 = vmatpush1.msra.mxu0 0.0
        %762 = vmatprep.subr.mxu0 0.0
        %763 = vmatpush1.msra.mxu0 0.0
        %764 = vmatprep.subr.mxu0 0.0
        %765 = vmatpush1.msra.mxu0 0.0
        %766 = vmatprep.subr.mxu0 0.0
        %767 = vmatpush1.msra.mxu0 0.0
        %768 = vmatprep.subr.mxu0 0.0
        %769 = vmatpush1.msra.mxu0 0.0
        %770 = vmatprep.subr.mxu0 0.0
        %771 = vmatpush1.msra.mxu0 0.0
        %772 = vmatprep.subr.mxu0 0.0
        %773 = vmatpush1.msra.mxu0 0.0
        %774 = vmatprep.subr.mxu0 0.0
        %775 = vmatpush1.msra.mxu0 0.0
        %776 = vmatprep.subr.mxu0 0.0
        %777 = vmatpush1.msra.mxu0 0.0
        %778 = vmatprep.subr.mxu0 0.0
        %779 = vmatpush1.msra.mxu0 0.0
        %780 = vmatprep.mubr.f32.mxu0 0.0
        %781 = vmatmul.mubr.f32.gmra.mrb[0].mxu0 %v714
        %v782 = vpop.f32.mrb[0].mxu0
        %v783 = vadd.f32 %v710, %v782
        %v784 = vpop.f32.mrb[0].mxu0
        %785 = vdwg.mxu0
        %v786 = vld [vmem:[#allocation8] sm:$0xff]
        %v787 = vld [vmem:[#allocation8 + $0x8] sm:$0xff]
        %v788 = vld [vmem:[#allocation8 + $0x10] sm:$0xff]
        %v789 = vld [vmem:[#allocation8 + $0x18] sm:$0xff]
        %v790 = vld [vmem:[%s6] sm:$0x1]
        %v792 = vlaneseq
        %v793 = vshrl.u32 %v792, 7
        %v794 = vsub.s32 0, %v793
        %v795 = vrot.slane %v790, %v794
        %797 = vmatprep.subr.mxu0 0.0
        %798 = vmatpush1.msra.mxu0 %v786
        %799 = vmatprep.subr.mxu0 0.0
        %800 = vmatpush1.msra.mxu0 %v787
        %801 = vmatprep.subr.mxu0 0.0
        %802 = vmatpush1.msra.mxu0 %v788
        %803 = vmatprep.subr.mxu0 0.0
        %804 = vmatpush1.msra.mxu0 %v789
        %805 = vmatprep.subr.mxu0 0.0
        %806 = vmatpush1.msra.mxu0 0.0
        %807 = vmatprep.subr.mxu0 0.0
        %808 = vmatpush1.msra.mxu0 0.0
        %809 = vmatprep.subr.mxu0 0.0
        %810 = vmatpush1.msra.mxu0 0.0
        %811 = vmatprep.subr.mxu0 0.0
        %812 = vmatpush1.msra.mxu0 0.0
        %813 = vmatprep.subr.mxu0 0.0
        %814 = vmatpush1.msra.mxu0 0.0
        %815 = vmatprep.subr.mxu0 0.0
        %816 = vmatpush1.msra.mxu0 0.0
        %817 = vmatprep.subr.mxu0 0.0
        %818 = vmatpush1.msra.mxu0 0.0
        %819 = vmatprep.subr.mxu0 0.0
        %820 = vmatpush1.msra.mxu0 0.0
        %821 = vmatprep.subr.mxu0 0.0
        %822 = vmatpush1.msra.mxu0 0.0
        %823 = vmatprep.subr.mxu0 0.0
        %824 = vmatpush1.msra.mxu0 0.0
        %825 = vmatprep.subr.mxu0 0.0
        %826 = vmatpush1.msra.mxu0 0.0
        %827 = vmatprep.subr.mxu0 0.0
        %828 = vmatpush1.msra.mxu0 0.0
        %829 = vmatprep.subr.mxu0 0.0
        %830 = vmatpush1.msra.mxu0 0.0
        %831 = vmatprep.subr.mxu0 0.0
        %832 = vmatpush1.msra.mxu0 0.0
        %833 = vmatprep.subr.mxu0 0.0
        %834 = vmatpush1.msra.mxu0 0.0
        %835 = vmatprep.subr.mxu0 0.0
        %836 = vmatpush1.msra.mxu0 0.0
        %837 = vmatprep.subr.mxu0 0.0
        %838 = vmatpush1.msra.mxu0 0.0
        %839 = vmatprep.subr.mxu0 0.0
        %840 = vmatpush1.msra.mxu0 0.0
        %841 = vmatprep.subr.mxu0 0.0
        %842 = vmatpush1.msra.mxu0 0.0
        %843 = vmatprep.subr.mxu0 0.0
        %844 = vmatpush1.msra.mxu0 0.0
        %845 = vmatprep.subr.mxu0 0.0
        %846 = vmatpush1.msra.mxu0 0.0
        %847 = vmatprep.subr.mxu0 0.0
        %848 = vmatpush1.msra.mxu0 0.0
        %849 = vmatprep.subr.mxu0 0.0
        %850 = vmatpush1.msra.mxu0 0.0
        %851 = vmatprep.subr.mxu0 0.0
        %852 = vmatpush1.msra.mxu0 0.0
        %853 = vmatprep.subr.mxu0 0.0
        %854 = vmatpush1.msra.mxu0 0.0
        %855 = vmatprep.subr.mxu0 0.0
        %856 = vmatpush1.msra.mxu0 0.0
        %857 = vmatprep.subr.mxu0 0.0
        %858 = vmatpush1.msra.mxu0 0.0
        %859 = vmatprep.subr.mxu0 0.0
        %860 = vmatpush1.msra.mxu0 0.0
        %861 = vmatprep.mubr.f32.mxu0 0.0
        %862 = vmatmul.mubr.f32.gmra.mrb[0].mxu0 %v714
        %v863 = vpop.f32.mrb[0].mxu0
        %v864 = vadd.f32 %v795, %v863
        %v865 = vpop.f32.mrb[0].mxu0
        %866 = vdwg.mxu0
        %vm867 = vcmask 523264
        %v869 = vsel %vm867, %v783, 0
        %v872 = vsel %vm867, %v864, 0
        %874 = vmatprep.subr.mxu0 0.0
        %875 = vmatpush1.xpose.msra.mxu0 %v872
        %876 = vmatprep.subr.mxu0 0.0
        %877 = vmatpush1.xpose.msra.mxu0 0.0
        %878 = vmatprep.subr.mxu0 0.0
        %879 = vmatpush1.xpose.msra.mxu0 0.0
        %880 = vmatprep.subr.mxu0 0.0
        %881 = vmatpush1.xpose.msra.mxu0 0.0
        %882 = vmatprep.subr.mxu0 0.0
        %883 = vmatpush1.xpose.msra.mxu0 0.0
        %884 = vmatprep.subr.mxu0 0.0
        %885 = vmatpush1.xpose.msra.mxu0 0.0
        %886 = vmatprep.subr.mxu0 0.0
        %887 = vmatpush1.xpose.msra.mxu0 0.0
        %888 = vmatprep.subr.mxu0 0.0
        %889 = vmatpush1.xpose.msra.mxu0 0.0
        %890 = vmatprep.subr.mxu0 0.0
        %891 = vmatpush1.xpose.msra.mxu0 0.0
        %892 = vmatprep.subr.mxu0 0.0
        %893 = vmatpush1.xpose.msra.mxu0 0.0
        %894 = vmatprep.subr.mxu0 0.0
        %895 = vmatpush1.xpose.msra.mxu0 0.0
        %896 = vmatprep.subr.mxu0 0.0
        %897 = vmatpush1.xpose.msra.mxu0 0.0
        %898 = vmatprep.subr.mxu0 0.0
        %899 = vmatpush1.xpose.msra.mxu0 0.0
        %900 = vmatprep.subr.mxu0 0.0
        %901 = vmatpush1.xpose.msra.mxu0 0.0
        %902 = vmatprep.subr.mxu0 0.0
        %903 = vmatpush1.xpose.msra.mxu0 0.0
        %904 = vmatprep.subr.mxu0 0.0
        %905 = vmatpush1.xpose.msra.mxu0 0.0
        %906 = vmatprep.subr.mxu0 0.0
        %907 = vmatpush1.xpose.msra.mxu0 0.0
        %908 = vmatprep.subr.mxu0 0.0
        %909 = vmatpush1.xpose.msra.mxu0 0.0
        %910 = vmatprep.subr.mxu0 0.0
        %911 = vmatpush1.xpose.msra.mxu0 0.0
        %912 = vmatprep.subr.mxu0 0.0
        %913 = vmatpush1.xpose.msra.mxu0 0.0
        %914 = vmatprep.subr.mxu0 0.0
        %915 = vmatpush1.xpose.msra.mxu0 0.0
        %916 = vmatprep.subr.mxu0 0.0
        %917 = vmatpush1.xpose.msra.mxu0 0.0
        %918 = vmatprep.subr.mxu0 0.0
        %919 = vmatpush1.xpose.msra.mxu0 0.0
        %920 = vmatprep.subr.mxu0 0.0
        %921 = vmatpush1.xpose.msra.mxu0 0.0
        %922 = vmatprep.subr.mxu0 0.0
        %923 = vmatpush1.xpose.msra.mxu0 0.0
        %924 = vmatprep.subr.mxu0 0.0
        %925 = vmatpush1.xpose.msra.mxu0 0.0
        %926 = vmatprep.subr.mxu0 0.0
        %927 = vmatpush1.xpose.msra.mxu0 0.0
        %928 = vmatprep.subr.mxu0 0.0
        %929 = vmatpush1.xpose.msra.mxu0 0.0
        %930 = vmatprep.subr.mxu0 0.0
        %931 = vmatpush1.xpose.msra.mxu0 0.0
        %932 = vmatprep.subr.mxu0 0.0
        %933 = vmatpush1.xpose.msra.mxu0 0.0
        %934 = vmatprep.subr.mxu0 0.0
        %935 = vmatpush1.xpose.msra.mxu0 0.0
        %936 = vmatprep.subr.mxu0 0.0
        %937 = vmatpush1.xpose.msra.mxu0 0.0
        %938 = vmatprep.mubr.f32.mxu0 0.0
        %939 = vmatmul.mubr.f32.gmra.mrb[0].mxu0 %v869
        %v940 = vpop.f32.mrb[0].mxu0
        %v941 = vadd.f32 0.0, %v940
        %v942 = vpop.f32.mrb[0].mxu0
        %943 = vdwg.mxu0
        %vm944 = vcmask 64512
        %v945 = vsel %vm944, %v941, -inf
        %946 = vmax.xlane.f32.xlu0 %v945
        %v947 = vpop.xlane.xlu0 %946
        %v948 = vsub.f32 %v941, %v947
        %v949 = vmul.f32 %v948, 1.442695
        %v950 = vpow.pop %v949
        %v951 = vsel %vm944, %v950, 0.0
        %952 = vadd.xlane.f32.xlu0 %v951
        %v953 = vpop.xlane.xlu0 %952
        %v954 = vrcp.pop %v953
        %v955 = vmul.f32 %v950, %v954
        %v957 = vsel %vm944, %v955, 0
        %959 = vmatprep.subr.mxu0 0.0
        %960 = vmatpush1.msra.mxu0 %v864
        %961 = vmatprep.subr.mxu0 0.0
        %962 = vmatpush1.msra.mxu0 0.0
        %963 = vmatprep.subr.mxu0 0.0
        %964 = vmatpush1.msra.mxu0 0.0
        %965 = vmatprep.subr.mxu0 0.0
        %966 = vmatpush1.msra.mxu0 0.0
        %967 = vmatprep.subr.mxu0 0.0
        %968 = vmatpush1.msra.mxu0 0.0
        %969 = vmatprep.subr.mxu0 0.0
        %970 = vmatpush1.msra.mxu0 0.0
        %971 = vmatprep.subr.mxu0 0.0
        %972 = vmatpush1.msra.mxu0 0.0
        %973 = vmatprep.subr.mxu0 0.0
        %974 = vmatpush1.msra.mxu0 0.0
        %975 = vmatprep.subr.mxu0 0.0
        %976 = vmatpush1.msra.mxu0 0.0
        %977 = vmatprep.subr.mxu0 0.0
        %978 = vmatpush1.msra.mxu0 0.0
        %979 = vmatprep.subr.mxu0 0.0
        %980 = vmatpush1.msra.mxu0 0.0
        %981 = vmatprep.subr.mxu0 0.0
        %982 = vmatpush1.msra.mxu0 0.0
        %983 = vmatprep.subr.mxu0 0.0
        %984 = vmatpush1.msra.mxu0 0.0
        %985 = vmatprep.subr.mxu0 0.0
        %986 = vmatpush1.msra.mxu0 0.0
        %987 = vmatprep.subr.mxu0 0.0
        %988 = vmatpush1.msra.mxu0 0.0
        %989 = vmatprep.subr.mxu0 0.0
        %990 = vmatpush1.msra.mxu0 0.0
        %991 = vmatprep.subr.mxu0 0.0
        %992 = vmatpush1.msra.mxu0 0.0
        %993 = vmatprep.subr.mxu0 0.0
        %994 = vmatpush1.msra.mxu0 0.0
        %995 = vmatprep.subr.mxu0 0.0
        %996 = vmatpush1.msra.mxu0 0.0
        %997 = vmatprep.subr.mxu0 0.0
        %998 = vmatpush1.msra.mxu0 0.0
        %999 = vmatprep.subr.mxu0 0.0
        %1000 = vmatpush1.msra.mxu0 0.0
        %1001 = vmatprep.subr.mxu0 0.0
        %1002 = vmatpush1.msra.mxu0 0.0
        %1003 = vmatprep.subr.mxu0 0.0
        %1004 = vmatpush1.msra.mxu0 0.0
        %1005 = vmatprep.subr.mxu0 0.0
        %1006 = vmatpush1.msra.mxu0 0.0
        %1007 = vmatprep.subr.mxu0 0.0
        %1008 = vmatpush1.msra.mxu0 0.0
        %1009 = vmatprep.subr.mxu0 0.0
        %1010 = vmatpush1.msra.mxu0 0.0
        %1011 = vmatprep.subr.mxu0 0.0
        %1012 = vmatpush1.msra.mxu0 0.0
        %1013 = vmatprep.subr.mxu0 0.0
        %1014 = vmatpush1.msra.mxu0 0.0
        %1015 = vmatprep.subr.mxu0 0.0
        %1016 = vmatpush1.msra.mxu0 0.0
        %1017 = vmatprep.subr.mxu0 0.0
        %1018 = vmatpush1.msra.mxu0 0.0
        %1019 = vmatprep.subr.mxu0 0.0
        %1020 = vmatpush1.msra.mxu0 0.0
        %1021 = vmatprep.subr.mxu0 0.0
        %1022 = vmatpush1.msra.mxu0 0.0
        %1023 = vmatprep.mubr.f32.mxu0 0.0
        %1024 = vmatmul.mubr.f32.gmra.mrb[0].mxu0 %v957
        %v1025 = vpop.f32.mrb[0].mxu0
        %v1026 = vadd.f32 0.0, %v1025
        %v1027 = vpop.f32.mrb[0].mxu0
        %1028 = vdwg.mxu0
        %v1029 = vld [vmem:[#allocation10] sm:$0xff]
        %v1030 = vld [vmem:[#allocation10 + $0x8] sm:$0xff]
        %v1031 = vld [vmem:[#allocation10 + $0x10] sm:$0xff]
        %v1032 = vld [vmem:[#allocation10 + $0x18] sm:$0xff]
        %v1033 = vld [vmem:[#allocation10 + $0x20] sm:$0xff]
        %v1034 = vld [vmem:[#allocation10 + $0x28] sm:$0xff]
        %v1035 = vld [vmem:[#allocation10 + $0x30] sm:$0xff]
        %v1036 = vld [vmem:[#allocation10 + $0x38] sm:$0xff]
        %v1037 = vld [vmem:[%s8] sm:$0x1]
        %v1039 = vlaneseq
        %v1040 = vshrl.u32 %v1039, 7
        %v1041 = vsub.s32 0, %v1040
        %v1042 = vrot.slane %v1037, %v1041
        %v1045 = vsel %vm867, %v1026, 0
        %1047 = vmatprep.subr.mxu0 0.0
        %1048 = vmatpush1.msra.mxu0 %v1029
        %1049 = vmatprep.subr.mxu0 0.0
        %1050 = vmatpush1.msra.mxu0 %v1030
        %1051 = vmatprep.subr.mxu0 0.0
        %1052 = vmatpush1.msra.mxu0 %v1031
        %1053 = vmatprep.subr.mxu0 0.0
        %1054 = vmatpush1.msra.mxu0 %v1032
        %1055 = vmatprep.subr.mxu0 0.0
        %1056 = vmatpush1.msra.mxu0 %v1033
        %1057 = vmatprep.subr.mxu0 0.0
        %1058 = vmatpush1.msra.mxu0 %v1034
        %1059 = vmatprep.subr.mxu0 0.0
        %1060 = vmatpush1.msra.mxu0 %v1035
        %1061 = vmatprep.subr.mxu0 0.0
        %1062 = vmatpush1.msra.mxu0 %v1036
        %1063 = vmatprep.subr.mxu0 0.0
        %1064 = vmatpush1.msra.mxu0 0.0
        %1065 = vmatprep.subr.mxu0 0.0
        %1066 = vmatpush1.msra.mxu0 0.0
        %1067 = vmatprep.subr.mxu0 0.0
        %1068 = vmatpush1.msra.mxu0 0.0
        %1069 = vmatprep.subr.mxu0 0.0
        %1070 = vmatpush1.msra.mxu0 0.0
        %1071 = vmatprep.subr.mxu0 0.0
        %1072 = vmatpush1.msra.mxu0 0.0
        %1073 = vmatprep.subr.mxu0 0.0
        %1074 = vmatpush1.msra.mxu0 0.0
        %1075 = vmatprep.subr.mxu0 0.0
        %1076 = vmatpush1.msra.mxu0 0.0
        %1077 = vmatprep.subr.mxu0 0.0
        %1078 = vmatpush1.msra.mxu0 0.0
        %1079 = vmatprep.subr.mxu0 0.0
        %1080 = vmatpush1.msra.mxu0 0.0
        %1081 = vmatprep.subr.mxu0 0.0
        %1082 = vmatpush1.msra.mxu0 0.0
        %1083 = vmatprep.subr.mxu0 0.0
        %1084 = vmatpush1.msra.mxu0 0.0
        %1085 = vmatprep.subr.mxu0 0.0
        %1086 = vmatpush1.msra.mxu0 0.0
        %1087 = vmatprep.subr.mxu0 0.0
        %1088 = vmatpush1.msra.mxu0 0.0
        %1089 = vmatprep.subr.mxu0 0.0
        %1090 = vmatpush1.msra.mxu0 0.0
        %1091 = vmatprep.subr.mxu0 0.0
        %1092 = vmatpush1.msra.mxu0 0.0
        %1093 = vmatprep.subr.mxu0 0.0
        %1094 = vmatpush1.msra.mxu0 0.0
        %1095 = vmatprep.subr.mxu0 0.0
        %1096 = vmatpush1.msra.mxu0 0.0
        %1097 = vmatprep.subr.mxu0 0.0
        %1098 = vmatpush1.msra.mxu0 0.0
        %1099 = vmatprep.subr.mxu0 0.0
        %1100 = vmatpush1.msra.mxu0 0.0
        %1101 = vmatprep.subr.mxu0 0.0
        %1102 = vmatpush1.msra.mxu0 0.0
        %1103 = vmatprep.subr.mxu0 0.0
        %1104 = vmatpush1.msra.mxu0 0.0
        %1105 = vmatprep.subr.mxu0 0.0
        %1106 = vmatpush1.msra.mxu0 0.0
        %1107 = vmatprep.subr.mxu0 0.0
        %1108 = vmatpush1.msra.mxu0 0.0
        %1109 = vmatprep.subr.mxu0 0.0
        %1110 = vmatpush1.msra.mxu0 0.0
        %1111 = vmatprep.mubr.f32.mxu0 0.0
        %1112 = vmatmul.mubr.f32.gmra.mrb[0].mxu0 %v1045
        %v1113 = vpop.f32.mrb[0].mxu0
        %v1114 = vadd.f32 %v1042, %v1113
        %v1115 = vpop.f32.mrb[0].mxu0
        %1116 = vdwg.mxu0
        %v1117 = vsel %vm712, %v1114, 0.0
        %1118 = vadd.xlane.f32.xlu0 %v1117
        %v1119 = vpop.xlane.xlu0 %1118
        %v1120 = vrcp.pop 32.0
        %v1121 = vmul.f32 %v1119, %v1120
        %v1122 = vsub.f32 %v1114, %v1121
        %v1123 = vmul.f32 %v1122, %v1122
        %v1124 = vsel %vm712, %v1123, 0.0
        %1125 = vadd.xlane.f32.xlu0 %v1124
        %v1126 = vpop.xlane.xlu0 %1125
        %v1127 = vmul.f32 %v1126, %v1120
        %v1128 = vadd.f32 %v1127, 1e-05
        %v1129 = vrsqrt.pop %v1128
        %v1130 = vmul.f32 %v1122, %v1129
        %v1131 = vld [vmem:[%s9] sm:$0x1]
        %v1133 = vlaneseq
        %v1134 = vshrl.u32 %v1133, 7
        %v1135 = vsub.s32 0, %v1134
        %v1136 = vrot.slane %v1131, %v1135
        %v1138 = vmul.f32 %v1130, %v1136
        %v1139 = vld [vmem:[%s10] sm:$0x1]
        %v1141 = vlaneseq
        %v1142 = vshrl.u32 %v1141, 7
        %v1143 = vsub.s32 0, %v1142
        %v1144 = vrot.slane %v1139, %v1143
        %v1146 = vadd.f32 %v1138, %v1144
        %s1147 = scalar_lea.vmem [#allocation7], 32
        %v1148 = vld [vmem:[%s1147] sm:$0xff]
        %v1149 = vld [vmem:[%s1147 + $0x8] sm:$0xff]
        %v1150 = vld [vmem:[%s1147 + $0x10] sm:$0xff]
        %v1151 = vld [vmem:[%s1147 + $0x18] sm:$0xff]
        %s1152 = scalar_lea.vmem %s4, 1
        %v1153 = vld [vmem:[%s1152] sm:$0x1]
        %v1155 = vlaneseq
        %v1156 = vshrl.u32 %v1155, 7
        %v1157 = vsub.s32 0, %v1156
        %v1158 = vrot.slane %v1153, %v1157
        %v1161 = vsel %vm712, %v1146, 0
        %1163 = vmatprep.subr.mxu0 0.0
        %1164 = vmatpush1.msra.mxu0 %v1148
        %1165 = vmatprep.subr.mxu0 0.0
        %1166 = vmatpush1.msra.mxu0 %v1149
        %1167 = vmatprep.subr.mxu0 0.0
        %1168 = vmatpush1.msra.mxu0 %v1150
        %1169 = vmatprep.subr.mxu0 0.0
        %1170 = vmatpush1.msra.mxu0 %v1151
        %1171 = vmatprep.subr.mxu0 0.0
        %1172 = vmatpush1.msra.mxu0 0.0
        %1173 = vmatprep.subr.mxu0 0.0
        %1174 = vmatpush1.msra.mxu0 0.0
        %1175 = vmatprep.subr.mxu0 0.0
        %1176 = vmatpush1.msra.mxu0 0.0
        %1177 = vmatprep.subr.mxu0 0.0
        %1178 = vmatpush1.msra.mxu0 0.0
        %1179 = vmatprep.subr.mxu0 0.0
        %1180 = vmatpush1.msra.mxu0 0.0
        %1181 = vmatprep.subr.mxu0 0.0
        %1182 = vmatpush1.msra.mxu0 0.0
        %1183 = vmatprep.subr.mxu0 0.0
        %1184 = vmatpush1.msra.mxu0 0.0
        %1185 = vmatprep.subr.mxu0 0.0
        %1186 = vmatpush1.msra.mxu0 0.0
        %1187 = vmatprep.subr.mxu0 0.0
        %1188 = vmatpush1.msra.mxu0 0.0
        %1189 = vmatprep.subr.mxu0 0.0
        %1190 = vmatpush1.msra.mxu0 0.0
        %1191 = vmatprep.subr.mxu0 0.0
        %1192 = vmatpush1.msra.mxu0 0.0
        %1193 = vmatprep.subr.mxu0 0.0
        %1194 = vmatpush1.msra.mxu0 0.0
        %1195 = vmatprep.subr.mxu0 0.0
        %1196 = vmatpush1.msra.mxu0 0.0
        %1197 = vmatprep.subr.mxu0 0.0
        %1198 = vmatpush1.msra.mxu0 0.0
        %1199 = vmatprep.subr.mxu0 0.0
        %1200 = vmatpush1.msra.mxu0 0.0
        %1201 = vmatprep.subr.mxu0 0.0
        %1202 = vmatpush1.msra.mxu0 0.0
        %1203 = vmatprep.subr.mxu0 0.0
        %1204 = vmatpush1.msra.mxu0 0.0
        %1205 = vmatprep.subr.mxu0 0.0
        %1206 = vmatpush1.msra.mxu0 0.0
        %1207 = vmatprep.subr.mxu0 0.0
        %1208 = vmatpush1.msra.mxu0 0.0
        %1209 = vmatprep.subr.mxu0 0.0
        %1210 = vmatpush1.msra.mxu0 0.0
        %1211 = vmatprep.subr.mxu0 0.0
        %1212 = vmatpush1.msra.mxu0 0.0
        %1213 = vmatprep.subr.mxu0 0.0
        %1214 = vmatpush1.msra.mxu0 0.0
        %1215 = vmatprep.subr.mxu0 0.0
        %1216 = vmatpush1.msra.mxu0 0.0
        %1217 = vmatprep.subr.mxu0 0.0
        %1218 = vmatpush1.msra.mxu0 0.0
        %1219 = vmatprep.subr.mxu0 0.0
        %1220 = vmatpush1.msra.mxu0 0.0
        %1221 = vmatprep.subr.mxu0 0.0
        %1222 = vmatpush1.msra.mxu0 0.0
        %1223 = vmatprep.subr.mxu0 0.0
        %1224 = vmatpush1.msra.mxu0 0.0
        %1225 = vmatprep.subr.mxu0 0.0
        %1226 = vmatpush1.msra.mxu0 0.0
        %1227 = vmatprep.mubr.f32.mxu0 0.0
        %1228 = vmatmul.mubr.f32.gmra.mrb[0].mxu0 %v1161
        %v1229 = vpop.f32.mrb[0].mxu0
        %v1230 = vadd.f32 %v1158, %v1229
        %v1231 = vpop.f32.mrb[0].mxu0
        %1232 = vdwg.mxu0
        %s1233 = scalar_lea.vmem [#allocation8], 32
        %v1234 = vld [vmem:[%s1233] sm:$0xff]
        %v1235 = vld [vmem:[%s1233 + $0x8] sm:$0xff]
        %v1236 = vld [vmem:[%s1233 + $0x10] sm:$0xff]
        %v1237 = vld [vmem:[%s1233 + $0x18] sm:$0xff]
        %s1238 = scalar_lea.vmem %s6, 1
        %v1239 = vld [vmem:[%s1238] sm:$0x1]
        %v1241 = vlaneseq
        %v1242 = vshrl.u32 %v1241, 7
        %v1243 = vsub.s32 0, %v1242
        %v1244 = vrot.slane %v1239, %v1243
        %v1247 = vsel %vm712, %v698, 0
        %v1250 = vsel %vm712, %v699, 0
        %1252 = vmatprep.subr.mxu0 0.0
        %1253 = vmatpush1.msra.mxu0 %v1234
        %1254 = vmatprep.subr.mxu0 0.0
        %1255 = vmatpush1.msra.mxu0 %v1235
        %1256 = vmatprep.subr.mxu0 0.0
        %1257 = vmatpush1.msra.mxu0 %v1236
        %1258 = vmatprep.subr.mxu0 0.0
        %1259 = vmatpush1.msra.mxu0 %v1237
        %1260 = vmatprep.subr.mxu0 0.0
        %1261 = vmatpush1.msra.mxu0 0.0
        %1262 = vmatprep.subr.mxu0 0.0
        %1263 = vmatpush1.msra.mxu0 0.0
        %1264 = vmatprep.subr.mxu0 0.0
        %1265 = vmatpush1.msra.mxu0 0.0
        %1266 = vmatprep.subr.mxu0 0.0
        %1267 = vmatpush1.msra.mxu0 0.0
        %1268 = vmatprep.subr.mxu0 0.0
        %1269 = vmatpush1.msra.mxu0 0.0
        %1270 = vmatprep.subr.mxu0 0.0
        %1271 = vmatpush1.msra.mxu0 0.0
        %1272 = vmatprep.subr.mxu0 0.0
        %1273 = vmatpush1.msra.mxu0 0.0
        %1274 = vmatprep.subr.mxu0 0.0
        %1275 = vmatpush1.msra.mxu0 0.0
        %1276 = vmatprep.subr.mxu0 0.0
        %1277 = vmatpush1.msra.mxu0 0.0
        %1278 = vmatprep.subr.mxu0 0.0
        %1279 = vmatpush1.msra.mxu0 0.0
        %1280 = vmatprep.subr.mxu0 0.0
        %1281 = vmatpush1.msra.mxu0 0.0
        %1282 = vmatprep.subr.mxu0 0.0
        %1283 = vmatpush1.msra.mxu0 0.0
        %1284 = vmatprep.subr.mxu0 0.0
        %1285 = vmatpush1.msra.mxu0 0.0
        %1286 = vmatprep.subr.mxu0 0.0
        %1287 = vmatpush1.msra.mxu0 0.0
        %1288 = vmatprep.subr.mxu0 0.0
        %1289 = vmatpush1.msra.mxu0 0.0
        %1290 = vmatprep.subr.mxu0 0.0
        %1291 = vmatpush1.msra.mxu0 0.0
        %1292 = vmatprep.subr.mxu0 0.0
        %1293 = vmatpush1.msra.mxu0 0.0
        %1294 = vmatprep.subr.mxu0 0.0
        %1295 = vmatpush1.msra.mxu0 0.0
        %1296 = vmatprep.subr.mxu0 0.0
        %1297 = vmatpush1.msra.mxu0 0.0
        %1298 = vmatprep.subr.mxu0 0.0
        %1299 = vmatpush1.msra.mxu0 0.0
        %1300 = vmatprep.subr.mxu0 0.0
        %1301 = vmatpush1.msra.mxu0 0.0
        %1302 = vmatprep.subr.mxu0 0.0
        %1303 = vmatpush1.msra.mxu0 0.0
        %1304 = vmatprep.subr.mxu0 0.0
        %1305 = vmatpush1.msra.mxu0 0.0
        %1306 = vmatprep.subr.mxu0 0.0
        %1307 = vmatpush1.msra.mxu0 0.0
        %1308 = vmatprep.subr.mxu0 0.0
        %1309 = vmatpush1.msra.mxu0 0.0
        %1310 = vmatprep.subr.mxu0 0.0
        %1311 = vmatpush1.msra.mxu0 0.0
        %1312 = vmatprep.subr.mxu0 0.0
        %1313 = vmatpush1.msra.mxu0 0.0
        %1314 = vmatprep.subr.mxu0 0.0
        %1315 = vmatpush1.msra.mxu0 0.0
        %1316 = vmatprep.mubr.f32.mxu0 0.0
        %1317 = vmatmul.mubr.f32.gmra.mrb[0].mxu0 %v1247
        %v1318 = vpop.f32.mrb[0].mxu0
        %v1319 = vadd.f32 %v1244, %v1318
        %v1320 = vpop.f32.mrb[0].mxu0
        %1321 = vmatprep.mubr.f32.mxu0 0.0
        %1322 = vmatmul.mubr.f32.gmra.mrb[0].mxu0 %v1250
        %v1323 = vpop.f32.mrb[0].mxu0
        %v1324 = vadd.f32 %v1244, %v1323
        %v1325 = vpop.f32.mrb[0].mxu0
        %1326 = vdwg.mxu0
        %v1328 = vsel %vm867, %v1230, 0
        %v1331 = vsel %vm867, %v1319, 0
        %v1334 = vsel %vm867, %v1324, 0
        %1336 = vmatprep.subr.mxu0 0.0
        %1337 = vmatpush1.xpose.msra.mxu0 %v1331
        %1338 = vmatprep.subr.mxu0 0.0
        %1339 = vmatpush1.xpose.msra.mxu0 %v1334
        %1340 = vmatprep.subr.mxu0 0.0
        %1341 = vmatpush1.xpose.msra.mxu0 0.0
        %1342 = vmatprep.subr.mxu0 0.0
        %1343 = vmatpush1.xpose.msra.mxu0 0.0
        %1344 = vmatprep.subr.mxu0 0.0
        %1345 = vmatpush1.xpose.msra.mxu0 0.0
        %1346 = vmatprep.subr.mxu0 0.0
        %1347 = vmatpush1.xpose.msra.mxu0 0.0
        %1348 = vmatprep.subr.mxu0 0.0
        %1349 = vmatpush1.xpose.msra.mxu0 0.0
        %1350 = vmatprep.subr.mxu0 0.0
        %1351 = vmatpush1.xpose.msra.mxu0 0.0
        %1352 = vmatprep.subr.mxu0 0.0
        %1353 = vmatpush1.xpose.msra.mxu0 0.0
        %1354 = vmatprep.subr.mxu0 0.0
        %1355 = vmatpush1.xpose.msra.mxu0 0.0
        %1356 = vmatprep.subr.mxu0 0.0
        %1357 = vmatpush1.xpose.msra.mxu0 0.0
        %1358 = vmatprep.subr.mxu0 0.0
        %1359 = vmatpush1.xpose.msra.mxu0 0.0
        %1360 = vmatprep.subr.mxu0 0.0
        %1361 = vmatpush1.xpose.msra.mxu0 0.0
        %1362 = vmatprep.subr.mxu0 0.0
        %1363 = vmatpush1.xpose.msra.mxu0 0.0
        %1364 = vmatprep.subr.mxu0 0.0
        %1365 = vmatpush1.xpose.msra.mxu0 0.0
        %1366 = vmatprep.subr.mxu0 0.0
        %1367 = vmatpush1.xpose.msra.mxu0 0.0
        %1368 = vmatprep.subr.mxu0 0.0
        %1369 = vmatpush1.xpose.msra.mxu0 0.0
        %1370 = vmatprep.subr.mxu0 0.0
        %1371 = vmatpush1.xpose.msra.mxu0 0.0
        %1372 = vmatprep.subr.mxu0 0.0
        %1373 = vmatpush1.xpose.msra.mxu0 0.0
        %1374 = vmatprep.subr.mxu0 0.0
        %1375 = vmatpush1.xpose.msra.mxu0 0.0
        %1376 = vmatprep.subr.mxu0 0.0
        %1377 = vmatpush1.xpose.msra.mxu0 0.0
        %1378 = vmatprep.subr.mxu0 0.0
        %1379 = vmatpush1.xpose.msra.mxu0 0.0
        %1380 = vmatprep.subr.mxu0 0.0
        %1381 = vmatpush1.xpose.msra.mxu0 0.0
        %1382 = vmatprep.subr.mxu0 0.0
        %1383 = vmatpush1.xpose.msra.mxu0 0.0
        %1384 = vmatprep.subr.mxu0 0.0
        %1385 = vmatpush1.xpose.msra.mxu0 0.0
        %1386 = vmatprep.subr.mxu0 0.0
        %1387 = vmatpush1.xpose.msra.mxu0 0.0
        %1388 = vmatprep.subr.mxu0 0.0
        %1389 = vmatpush1.xpose.msra.mxu0 0.0
        %1390 = vmatprep.subr.mxu0 0.0
        %1391 = vmatpush1.xpose.msra.mxu0 0.0
        %1392 = vmatprep.subr.mxu0 0.0
        %1393 = vmatpush1.xpose.msra.mxu0 0.0
        %1394 = vmatprep.subr.mxu0 0.0
        %1395 = vmatpush1.xpose.msra.mxu0 0.0
        %1396 = vmatprep.subr.mxu0 0.0
        %1397 = vmatpush1.xpose.msra.mxu0 0.0
        %1398 = vmatprep.subr.mxu0 0.0
        %1399 = vmatpush1.xpose.msra.mxu0 0.0
        %1400 = vmatprep.mubr.f32.mxu0 0.0
        %1401 = vmatmul.mubr.f32.gmra.mrb[0].mxu0 %v1328
        %v1402 = vpop.f32.mrb[0].mxu0
        %v1403 = vadd.f32 0.0, %v1402
        %v1404 = vpop.f32.mrb[0].mxu0
        %1405 = vdwg.mxu0
        %vm1406 = vcmask 130048
        %v1407 = vsel %vm1406, %v1403, -inf
        %1408 = vmax.xlane.f32.xlu0 %v1407
        %v1409 = vpop.xlane.xlu0 %1408
        %v1410 = vsub.f32 %v1403, %v1409
        %v1411 = vmul.f32 %v1410, 1.442695
        %v1412 = vpow.pop %v1411
        %v1413 = vsel %vm1406, %v1412, 0.0
        %1414 = vadd.xlane.f32.xlu0 %v1413
        %v1415 = vpop.xlane.xlu0 %1414
        %v1416 = vrcp.pop %v1415
        %v1417 = vmul.f32 %v1412, %v1416
        %v1419 = vsel %vm1406, %v1417, 0
        %1421 = vmatprep.subr.mxu0 0.0
        %1422 = vmatpush1.msra.mxu0 %v1319
        %1423 = vmatprep.subr.mxu0 0.0
        %1424 = vmatpush1.msra.mxu0 %v1324
        %1425 = vmatprep.subr.mxu0 0.0
        %1426 = vmatpush1.msra.mxu0 0.0
        %1427 = vmatprep.subr.mxu0 0.0
        %1428 = vmatpush1.msra.mxu0 0.0
        %1429 = vmatprep.subr.mxu0 0.0
        %1430 = vmatpush1.msra.mxu0 0.0
        %1431 = vmatprep.subr.mxu0 0.0
        %1432 = vmatpush1.msra.mxu0 0.0
        %1433 = vmatprep.subr.mxu0 0.0
        %1434 = vmatpush1.msra.mxu0 0.0
        %1435 = vmatprep.subr.mxu0 0.0
        %1436 = vmatpush1.msra.mxu0 0.0
        %1437 = vmatprep.subr.mxu0 0.0
        %1438 = vmatpush1.msra.mxu0 0.0
        %1439 = vmatprep.subr.mxu0 0.0
        %1440 = vmatpush1.msra.mxu0 0.0
        %1441 = vmatprep.subr.mxu0 0.0
        %1442 = vmatpush1.msra.mxu0 0.0
        %1443 = vmatprep.subr.mxu0 0.0
        %1444 = vmatpush1.msra.mxu0 0.0
        %1445 = vmatprep.subr.mxu0 0.0
        %1446 = vmatpush1.msra.mxu0 0.0
        %1447 = vmatprep.subr.mxu0 0.0
        %1448 = vmatpush1.msra.mxu0 0.0
        %1449 = vmatprep.subr.mxu0 0.0
        %1450 = vmatpush1.msra.mxu0 0.0
        %1451 = vmatprep.subr.mxu0 0.0
        %1452 = vmatpush1.msra.mxu0 0.0
        %1453 = vmatprep.subr.mxu0 0.0
        %1454 = vmatpush1.msra.mxu0 0.0
        %1455 = vmatprep.subr.mxu0 0.0
        %1456 = vmatpush1.msra.mxu0 0.0
        %1457 = vmatprep.subr.mxu0 0.0
        %1458 = vmatpush1.msra.mxu0 0.0
        %1459 = vmatprep.subr.mxu0 0.0
        %1460 = vmatpush1.msra.mxu0 0.0
        %1461 = vmatprep.subr.mxu0 0.0
        %1462 = vmatpush1.msra.mxu0 0.0
        %1463 = vmatprep.subr.mxu0 0.0
        %1464 = vmatpush1.msra.mxu0 0.0
        %1465 = vmatprep.subr.mxu0 0.0
        %1466 = vmatpush1.msra.mxu0 0.0
        %1467 = vmatprep.subr.mxu0 0.0
        %1468 = vmatpush1.msra.mxu0 0.0
        %1469 = vmatprep.subr.mxu0 0.0
        %1470 = vmatpush1.msra.mxu0 0.0
        %1471 = vmatprep.subr.mxu0 0.0
        %1472 = vmatpush1.msra.mxu0 0.0
        %1473 = vmatprep.subr.mxu0 0.0
        %1474 = vmatpush1.msra.mxu0 0.0
        %1475 = vmatprep.subr.mxu0 0.0
        %1476 = vmatpush1.msra.mxu0 0.0
        %1477 = vmatprep.subr.mxu0 0.0
        %1478 = vmatpush1.msra.mxu0 0.0
        %1479 = vmatprep.subr.mxu0 0.0
        %1480 = vmatpush1.msra.mxu0 0.0
        %1481 = vmatprep.subr.mxu0 0.0
        %1482 = vmatpush1.msra.mxu0 0.0
        %1483 = vmatprep.subr.mxu0 0.0
        %1484 = vmatpush1.msra.mxu0 0.0
        %1485 = vmatprep.mubr.f32.mxu0 0.0
        %1486 = vmatmul.mubr.f32.gmra.mrb[0].mxu0 %v1419
        %v1487 = vpop.f32.mrb[0].mxu0
        %v1488 = vadd.f32 0.0, %v1487
        %v1489 = vpop.f32.mrb[0].mxu0
        %1490 = vdwg.mxu0
        %s1491 = scalar_lea.vmem [#allocation10], 64
        %v1492 = vld [vmem:[%s1491] sm:$0xff]
        %v1493 = vld [vmem:[%s1491 + $0x8] sm:$0xff]
        %v1494 = vld [vmem:[%s1491 + $0x10] sm:$0xff]
        %v1495 = vld [vmem:[%s1491 + $0x18] sm:$0xff]
        %v1496 = vld [vmem:[%s1491 + $0x20] sm:$0xff]
        %v1497 = vld [vmem:[%s1491 + $0x28] sm:$0xff]
        %v1498 = vld [vmem:[%s1491 + $0x30] sm:$0xff]
        %v1499 = vld [vmem:[%s1491 + $0x38] sm:$0xff]
        %s1500 = scalar_lea.vmem %s8, 1
        %v1501 = vld [vmem:[%s1500] sm:$0x1]
        %v1503 = vlaneseq
        %v1504 = vshrl.u32 %v1503, 7
        %v1505 = vsub.s32 0, %v1504
        %v1506 = vrot.slane %v1501, %v1505
        %v1509 = vsel %vm867, %v1488, 0
        %1511 = vmatprep.subr.mxu0 0.0
        %1512 = vmatpush1.msra.mxu0 %v1492
        %1513 = vmatprep.subr.mxu0 0.0
        %1514 = vmatpush1.msra.mxu0 %v1493
        %1515 = vmatprep.subr.mxu0 0.0
        %1516 = vmatpush1.msra.mxu0 %v1494
        %1517 = vmatprep.subr.mxu0 0.0
        %1518 = vmatpush1.msra.mxu0 %v1495
        %1519 = vmatprep.subr.mxu0 0.0
        %1520 = vmatpush1.msra.mxu0 %v1496
        %1521 = vmatprep.subr.mxu0 0.0
        %1522 = vmatpush1.msra.mxu0 %v1497
        %1523 = vmatprep.subr.mxu0 0.0
        %1524 = vmatpush1.msra.mxu0 %v1498
        %1525 = vmatprep.subr.mxu0 0.0
        %1526 = vmatpush1.msra.mxu0 %v1499
        %1527 = vmatprep.subr.mxu0 0.0
        %1528 = vmatpush1.msra.mxu0 0.0
        %1529 = vmatprep.subr.mxu0 0.0
        %1530 = vmatpush1.msra.mxu0 0.0
        %1531 = vmatprep.subr.mxu0 0.0
        %1532 = vmatpush1.msra.mxu0 0.0
        %1533 = vmatprep.subr.mxu0 0.0
        %1534 = vmatpush1.msra.mxu0 0.0
        %1535 = vmatprep.subr.mxu0 0.0
        %1536 = vmatpush1.msra.mxu0 0.0
        %1537 = vmatprep.subr.mxu0 0.0
        %1538 = vmatpush1.msra.mxu0 0.0
        %1539 = vmatprep.subr.mxu0 0.0
        %1540 = vmatpush1.msra.mxu0 0.0
        %1541 = vmatprep.subr.mxu0 0.0
        %1542 = vmatpush1.msra.mxu0 0.0
        %1543 = vmatprep.subr.mxu0 0.0
        %1544 = vmatpush1.msra.mxu0 0.0
        %1545 = vmatprep.subr.mxu0 0.0
        %1546 = vmatpush1.msra.mxu0 0.0
        %1547 = vmatprep.subr.mxu0 0.0
        %1548 = vmatpush1.msra.mxu0 0.0
        %1549 = vmatprep.subr.mxu0 0.0
        %1550 = vmatpush1.msra.mxu0 0.0
        %1551 = vmatprep.subr.mxu0 0.0
        %1552 = vmatpush1.msra.mxu0 0.0
        %1553 = vmatprep.subr.mxu0 0.0
        %1554 = vmatpush1.msra.mxu0 0.0
        %1555 = vmatprep.subr.mxu0 0.0
        %1556 = vmatpush1.msra.mxu0 0.0
        %1557 = vmatprep.subr.mxu0 0.0
        %1558 = vmatpush1.msra.mxu0 0.0
        %1559 = vmatprep.subr.mxu0 0.0
        %1560 = vmatpush1.msra.mxu0 0.0
        %1561 = vmatprep.subr.mxu0 0.0
        %1562 = vmatpush1.msra.mxu0 0.0
        %1563 = vmatprep.subr.mxu0 0.0
        %1564 = vmatpush1.msra.mxu0 0.0
        %1565 = vmatprep.subr.mxu0 0.0
        %1566 = vmatpush1.msra.mxu0 0.0
        %1567 = vmatprep.subr.mxu0 0.0
        %1568 = vmatpush1.msra.mxu0 0.0
        %1569 = vmatprep.subr.mxu0 0.0
        %1570 = vmatpush1.msra.mxu0 0.0
        %1571 = vmatprep.subr.mxu0 0.0
        %1572 = vmatpush1.msra.mxu0 0.0
        %1573 = vmatprep.subr.mxu0 0.0
        %1574 = vmatpush1.msra.mxu0 0.0
        %1575 = vmatprep.mubr.f32.mxu0 0.0
        %1576 = vmatmul.mubr.f32.gmra.mrb[0].mxu0 %v1509
        %v1577 = vpop.f32.mrb[0].mxu0
        %v1578 = vadd.f32 %v1506, %v1577
        %v1579 = vpop.f32.mrb[0].mxu0
        %1580 = vdwg.mxu0
        %v1581 = vadd.f32 %v1146, %v1578
        %v1582 = vsel %vm712, %v1581, 0.0
        %1583 = vadd.xlane.f32.xlu0 %v1582
        %v1584 = vpop.xlane.xlu0 %1583
        %v1585 = vmul.f32 %v1584, %v1120
        %v1586 = vsub.f32 %v1581, %v1585
        %v1587 = vmul.f32 %v1586, %v1586
        %v1588 = vsel %vm712, %v1587, 0.0
        %1589 = vadd.xlane.f32.xlu0 %v1588
        %v1590 = vpop.xlane.xlu0 %1589
        %v1591 = vmul.f32 %v1590, %v1120
        %v1592 = vadd.f32 %v1591, 1e-05
        %v1593 = vrsqrt.pop %v1592
        %v1594 = vmul.f32 %v1586, %v1593
        %s1595 = scalar_lea.vmem %s9, 1
        %v1596 = vld [vmem:[%s1595] sm:$0x1]
        %v1598 = vlaneseq
        %v1599 = vshrl.u32 %v1598, 7
        %v1600 = vsub.s32 0, %v1599
        %v1601 = vrot.slane %v1596, %v1600
        %v1603 = vmul.f32 %v1594, %v1601
        %s1604 = scalar_lea.vmem %s10, 1
        %v1605 = vld [vmem:[%s1604] sm:$0x1]
        %v1607 = vlaneseq
        %v1608 = vshrl.u32 %v1607, 7
        %v1609 = vsub.s32 0, %v1608
        %v1610 = vrot.slane %v1605, %v1609
        %v1612 = vadd.f32 %v1603, %v1610
        %v1613 = vld [vmem:[%s11] sm:$0xff]
        %v1614 = vld [vmem:[%s11 + $0x8] sm:$0xff]
        %v1615 = vld [vmem:[%s11 + $0x10] sm:$0xff]
        %v1616 = vld [vmem:[%s11 + $0x18] sm:$0xff]
        %v1617 = vld [vmem:[%s12] sm:$0x1]
        %v1619 = vlaneseq
        %v1620 = vshrl.u32 %v1619, 7
        %v1621 = vsub.s32 0, %v1620
        %v1622 = vrot.slane %v1617, %v1621
        %v1625 = vsel %vm712, %v1612, 0
        %1627 = vmatprep.subr.mxu0 0.0
        %1628 = vmatpush1.msra.mxu0 %v1613
        %1629 = vmatprep.subr.mxu0 0.0
        %1630 = vmatpush1.msra.mxu0 %v1614
        %1631 = vmatprep.subr.mxu0 0.0
        %1632 = vmatpush1.msra.mxu0 %v1615
        %1633 = vmatprep.subr.mxu0 0.0
        %1634 = vmatpush1.msra.mxu0 %v1616
        %1635 = vmatprep.subr.mxu0 0.0
        %1636 = vmatpush1.msra.mxu0 0.0
        %1637 = vmatprep.subr.mxu0 0.0
        %1638 = vmatpush1.msra.mxu0 0.0
        %1639 = vmatprep.subr.mxu0 0.0
        %1640 = vmatpush1.msra.mxu0 0.0
        %1641 = vmatprep.subr.mxu0 0.0
        %1642 = vmatpush1.msra.mxu0 0.0
        %1643 = vmatprep.subr.mxu0 0.0
        %1644 = vmatpush1.msra.mxu0 0.0
        %1645 = vmatprep.subr.mxu0 0.0
        %1646 = vmatpush1.msra.mxu0 0.0
        %1647 = vmatprep.subr.mxu0 0.0
        %1648 = vmatpush1.msra.mxu0 0.0
        %1649 = vmatprep.subr.mxu0 0.0
        %1650 = vmatpush1.msra.mxu0 0.0
        %1651 = vmatprep.subr.mxu0 0.0
        %1652 = vmatpush1.msra.mxu0 0.0
        %1653 = vmatprep.subr.mxu0 0.0
        %1654 = vmatpush1.msra.mxu0 0.0
        %1655 = vmatprep.subr.mxu0 0.0
        %1656 = vmatpush1.msra.mxu0 0.0
        %1657 = vmatprep.subr.mxu0 0.0
        %1658 = vmatpush1.msra.mxu0 0.0
        %1659 = vmatprep.subr.mxu0 0.0
        %1660 = vmatpush1.msra.mxu0 0.0
        %1661 = vmatprep.subr.mxu0 0.0
        %1662 = vmatpush1.msra.mxu0 0.0
        %1663 = vmatprep.subr.mxu0 0.0
        %1664 = vmatpush1.msra.mxu0 0.0
        %1665 = vmatprep.subr.mxu0 0.0
        %1666 = vmatpush1.msra.mxu0 0.0
        %1667 = vmatprep.subr.mxu0 0.0
        %1668 = vmatpush1.msra.mxu0 0.0
        %1669 = vmatprep.subr.mxu0 0.0
        %1670 = vmatpush1.msra.mxu0 0.0
        %1671 = vmatprep.subr.mxu0 0.0
        %1672 = vmatpush1.msra.mxu0 0.0
        %1673 = vmatprep.subr.mxu0 0.0
        %1674 = vmatpush1.msra.mxu0 0.0
        %1675 = vmatprep.subr.mxu0 0.0
        %1676 = vmatpush1.msra.mxu0 0.0
        %1677 = vmatprep.subr.mxu0 0.0
        %1678 = vmatpush1.msra.mxu0 0.0
        %1679 = vmatprep.subr.mxu0 0.0
        %1680 = vmatpush1.msra.mxu0 0.0
        %1681 = vmatprep.subr.mxu0 0.0
        %1682 = vmatpush1.msra.mxu0 0.0
        %1683 = vmatprep.subr.mxu0 0.0
        %1684 = vmatpush1.msra.mxu0 0.0
        %1685 = vmatprep.subr.mxu0 0.0
        %1686 = vmatpush1.msra.mxu0 0.0
        %1687 = vmatprep.subr.mxu0 0.0
        %1688 = vmatpush1.msra.mxu0 0.0
        %1689 = vmatprep.subr.mxu0 0.0
        %1690 = vmatpush1.msra.mxu0 0.0
        %1691 = vmatprep.mubr.f32.mxu0 0.0
        %1692 = vmatmul.mubr.f32.gmra.mrb[0].mxu0 %v1625
        %v1693 = vpop.f32.mrb[0].mxu0
        %v1694 = vadd.f32 %v1622, %v1693
        %v1695 = vpop.f32.mrb[0].mxu0
        %1696 = vdwg.mxu0
        %v1697 = vmax.f32 %v1694, 0.0
        %v1698 = vld [vmem:[#allocation11] sm:$0xff]
        %v1699 = vld [vmem:[#allocation11 + $0x8] sm:$0xff]
        %v1700 = vld [vmem:[#allocation11 + $0x10] sm:$0xff]
        %v1701 = vld [vmem:[#allocation11 + $0x18] sm:$0xff]
        %v1702 = vld [vmem:[#allocation11 + $0x20] sm:$0xff]
        %v1703 = vld [vmem:[#allocation11 + $0x28] sm:$0xff]
        %v1704 = vld [vmem:[#allocation11 + $0x30] sm:$0xff]
        %v1705 = vld [vmem:[#allocation11 + $0x38] sm:$0xff]
        %v1707 = vsel %vm867, %v1697, 0
        %1709 = vmatprep.subr.mxu0 0.0
        %1710 = vmatpush1.msra.mxu0 %v1698
        %1711 = vmatprep.subr.mxu0 0.0
        %1712 = vmatpush1.msra.mxu0 %v1699
        %1713 = vmatprep.subr.mxu0 0.0
        %1714 = vmatpush1.msra.mxu0 %v1700
        %1715 = vmatprep.subr.mxu0 0.0
        %1716 = vmatpush1.msra.mxu0 %v1701
        %1717 = vmatprep.subr.mxu0 0.0
        %1718 = vmatpush1.msra.mxu0 %v1702
        %1719 = vmatprep.subr.mxu0 0.0
        %1720 = vmatpush1.msra.mxu0 %v1703
        %1721 = vmatprep.subr.mxu0 0.0
        %1722 = vmatpush1.msra.mxu0 %v1704
        %1723 = vmatprep.subr.mxu0 0.0
        %1724 = vmatpush1.msra.mxu0 %v1705
        %1725 = vmatprep.subr.mxu0 0.0
        %1726 = vmatpush1.msra.mxu0 0.0
        %1727 = vmatprep.subr.mxu0 0.0
        %1728 = vmatpush1.msra.mxu0 0.0
        %1729 = vmatprep.subr.mxu0 0.0
        %1730 = vmatpush1.msra.mxu0 0.0
        %1731 = vmatprep.subr.mxu0 0.0
        %1732 = vmatpush1.msra.mxu0 0.0
        %1733 = vmatprep.subr.mxu0 0.0
        %1734 = vmatpush1.msra.mxu0 0.0
        %1735 = vmatprep.subr.mxu0 0.0
        %1736 = vmatpush1.msra.mxu0 0.0
        %1737 = vmatprep.subr.mxu0 0.0
        %1738 = vmatpush1.msra.mxu0 0.0
        %1739 = vmatprep.subr.mxu0 0.0
        %1740 = vmatpush1.msra.mxu0 0.0
        %1741 = vmatprep.subr.mxu0 0.0
        %1742 = vmatpush1.msra.mxu0 0.0
        %1743 = vmatprep.subr.mxu0 0.0
        %1744 = vmatpush1.msra.mxu0 0.0
        %1745 = vmatprep.subr.mxu0 0.0
        %1746 = vmatpush1.msra.mxu0 0.0
        %1747 = vmatprep.subr.mxu0 0.0
        %1748 = vmatpush1.msra.mxu0 0.0
        %1749 = vmatprep.subr.mxu0 0.0
        %1750 = vmatpush1.msra.mxu0 0.0
        %1751 = vmatprep.subr.mxu0 0.0
        %1752 = vmatpush1.msra.mxu0 0.0
        %1753 = vmatprep.subr.mxu0 0.0
        %1754 = vmatpush1.msra.mxu0 0.0
        %1755 = vmatprep.subr.mxu0 0.0
        %1756 = vmatpush1.msra.mxu0 0.0
        %1757 = vmatprep.subr.mxu0 0.0
        %1758 = vmatpush1.msra.mxu0 0.0
        %1759 = vmatprep.subr.mxu0 0.0
        %1760 = vmatpush1.msra.mxu0 0.0
        %1761 = vmatprep.subr.mxu0 0.0
        %1762 = vmatpush1.msra.mxu0 0.0
        %1763 = vmatprep.subr.mxu0 0.0
        %1764 = vmatpush1.msra.mxu0 0.0
        %1765 = vmatprep.subr.mxu0 0.0
        %1766 = vmatpush1.msra.mxu0 0.0
        %1767 = vmatprep.subr.mxu0 0.0
        %1768 = vmatpush1.msra.mxu0 0.0
        %1769 = vmatprep.subr.mxu0 0.0
        %1770 = vmatpush1.msra.mxu0 0.0
        %1771 = vmatprep.subr.mxu0 0.0
        %1772 = vmatpush1.msra.mxu0 0.0
        %1773 = vmatprep.mubr.f32.mxu0 0.0
        %1774 = vmatmul.mubr.f32.gmra.mrb[0].mxu0 %v1707
        %v1775 = vpop.f32.mrb[0].mxu0
        %v1776 = vadd.f32 0.0, %v1775
        %v1777 = vpop.f32.mrb[0].mxu0
        %1778 = vdwg.mxu0
        %v1779 = vadd.f32 %v1612, %v1776
        %v1780 = vld [vmem:[%s14] sm:$0x1]
        %v1782 = vlaneseq
        %v1783 = vshrl.u32 %v1782, 7
        %v1784 = vsub.s32 0, %v1783
        %v1785 = vrot.slane %v1780, %v1784
        %v1787 = vadd.f32 %v1779, %v1785
        %v1788 = vsel %vm712, %v1787, 0.0
        %1789 = vadd.xlane.f32.xlu0 %v1788
        %v1790 = vpop.xlane.xlu0 %1789
        %v1791 = vmul.f32 %v1790, %v1120
        %v1792 = vsub.f32 %v1787, %v1791
        %v1793 = vmul.f32 %v1792, %v1792
        %v1794 = vsel %vm712, %v1793, 0.0
        %1795 = vadd.xlane.f32.xlu0 %v1794
        %v1796 = vpop.xlane.xlu0 %1795
        %v1797 = vmul.f32 %v1796, %v1120
        %v1798 = vadd.f32 %v1797, 1e-05
        %v1799 = vrsqrt.pop %v1798
        %v1800 = vmul.f32 %v1792, %v1799
        %s1801 = scalar_lea.vmem %s9, 2
        %v1802 = vld [vmem:[%s1801] sm:$0x1]
        %v1804 = vlaneseq
        %v1805 = vshrl.u32 %v1804, 7
        %v1806 = vsub.s32 0, %v1805
        %v1807 = vrot.slane %v1802, %v1806
        %v1809 = vmul.f32 %v1800, %v1807
        %s1810 = scalar_lea.vmem %s10, 2
        %v1811 = vld [vmem:[%s1810] sm:$0x1]
        %v1813 = vlaneseq
        %v1814 = vshrl.u32 %v1813, 7
        %v1815 = vsub.s32 0, %v1814
        %v1816 = vrot.slane %v1811, %v1815
        %v1818 = vadd.f32 %v1809, %v1816
        %s1819 = scalar_lea.vmem [#allocation7], 64
        %v1820 = vld [vmem:[%s1819] sm:$0xff]
        %v1821 = vld [vmem:[%s1819 + $0x8] sm:$0xff]
        %v1822 = vld [vmem:[%s1819 + $0x10] sm:$0xff]
        %v1823 = vld [vmem:[%s1819 + $0x18] sm:$0xff]
        %s1824 = scalar_lea.vmem %s4, 2
        %v1825 = vld [vmem:[%s1824] sm:$0x1]
        %v1827 = vlaneseq
        %v1828 = vshrl.u32 %v1827, 7
        %v1829 = vsub.s32 0, %v1828
        %v1830 = vrot.slane %v1825, %v1829
        %1832 = vmatprep.subr.mxu0 0.0
        %1833 = vmatpush1.msra.mxu0 %v1820
        %1834 = vmatprep.subr.mxu0 0.0
        %1835 = vmatpush1.msra.mxu0 %v1821
        %1836 = vmatprep.subr.mxu0 0.0
        %1837 = vmatpush1.msra.mxu0 %v1822
        %1838 = vmatprep.subr.mxu0 0.0
        %1839 = vmatpush1.msra.mxu0 %v1823
        %1840 = vmatprep.subr.mxu0 0.0
        %1841 = vmatpush1.msra.mxu0 0.0
        %1842 = vmatprep.subr.mxu0 0.0
        %1843 = vmatpush1.msra.mxu0 0.0
        %1844 = vmatprep.subr.mxu0 0.0
        %1845 = vmatpush1.msra.mxu0 0.0
        %1846 = vmatprep.subr.mxu0 0.0
        %1847 = vmatpush1.msra.mxu0 0.0
        %1848 = vmatprep.subr.mxu0 0.0
        %1849 = vmatpush1.msra.mxu0 0.0
        %1850 = vmatprep.subr.mxu0 0.0
        %1851 = vmatpush1.msra.mxu0 0.0
        %1852 = vmatprep.subr.mxu0 0.0
        %1853 = vmatpush1.msra.mxu0 0.0
        %1854 = vmatprep.subr.mxu0 0.0
        %1855 = vmatpush1.msra.mxu0 0.0
        %1856 = vmatprep.subr.mxu0 0.0
        %1857 = vmatpush1.msra.mxu0 0.0
        %1858 = vmatprep.subr.mxu0 0.0
        %1859 = vmatpush1.msra.mxu0 0.0
        %1860 = vmatprep.subr.mxu0 0.0
        %1861 = vmatpush1.msra.mxu0 0.0
        %1862 = vmatprep.subr.mxu0 0.0
        %1863 = vmatpush1.msra.mxu0 0.0
        %1864 = vmatprep.subr.mxu0 0.0
        %1865 = vmatpush1.msra.mxu0 0.0
        %1866 = vmatprep.subr.mxu0 0.0
        %1867 = vmatpush1.msra.mxu0 0.0
        %1868 = vmatprep.subr.mxu0 0.0
        %1869 = vmatpush1.msra.mxu0 0.0
        %1870 = vmatprep.subr.mxu0 0.0
        %1871 = vmatpush1.msra.mxu0 0.0
        %1872 = vmatprep.subr.mxu0 0.0
        %1873 = vmatpush1.msra.mxu0 0.0
        %1874 = vmatprep.subr.mxu0 0.0
        %1875 = vmatpush1.msra.mxu0 0.0
        %1876 = vmatprep.subr.mxu0 0.0
        %1877 = vmatpush1.msra.mxu0 0.0
        %1878 = vmatprep.subr.mxu0 0.0
        %1879 = vmatpush1.msra.mxu0 0.0
        %1880 = vmatprep.subr.mxu0 0.0
        %1881 = vmatpush1.msra.mxu0 0.0
        %1882 = vmatprep.subr.mxu0 0.0
        %1883 = vmatpush1.msra.mxu0 0.0
        %1884 = vmatprep.subr.mxu0 0.0
        %1885 = vmatpush1.msra.mxu0 0.0
        %1886 = vmatprep.subr.mxu0 0.0
        %1887 = vmatpush1.msra.mxu0 0.0
        %1888 = vmatprep.subr.mxu0 0.0
        %1889 = vmatpush1.msra.mxu0 0.0
        %1890 = vmatprep.subr.mxu0 0.0
        %1891 = vmatpush1.msra.mxu0 0.0
        %1892 = vmatprep.subr.mxu0 0.0
        %1893 = vmatpush1.msra.mxu0 0.0
        %1894 = vmatprep.subr.mxu0 0.0
        %1895 = vmatpush1.msra.mxu0 0.0
        %1896 = vmatprep.mubr.f32.mxu0 0.0
        %1897 = vmatmul.mubr.f32.gmra.mrb[0].mxu0 %v1247
        %v1898 = vpop.f32.mrb[0].mxu0
        %v1899 = vadd.f32 %v1830, %v1898
        %v1900 = vpop.f32.mrb[0].mxu0
        %1901 = vmatprep.mubr.f32.mxu0 0.0
        %1902 = vmatmul.mubr.f32.gmra.mrb[0].mxu0 %v1250
        %v1903 = vpop.f32.mrb[0].mxu0
        %v1904 = vadd.f32 %v1830, %v1903
        %v1905 = vpop.f32.mrb[0].mxu0
        %1906 = vdwg.mxu0
        %s1907 = scalar_lea.vmem [#allocation8], 64
        %v1908 = vld [vmem:[%s1907] sm:$0xff]
        %v1909 = vld [vmem:[%s1907 + $0x8] sm:$0xff]
        %v1910 = vld [vmem:[%s1907 + $0x10] sm:$0xff]
        %v1911 = vld [vmem:[%s1907 + $0x18] sm:$0xff]
        %s1912 = scalar_lea.vmem %s6, 2
        %v1913 = vld [vmem:[%s1912] sm:$0x1]
        %v1915 = vlaneseq
        %v1916 = vshrl.u32 %v1915, 7
        %v1917 = vsub.s32 0, %v1916
        %v1918 = vrot.slane %v1913, %v1917
        %v1921 = vsel %vm712, %v1818, 0
        %1923 = vmatprep.subr.mxu0 0.0
        %1924 = vmatpush1.msra.mxu0 %v1908
        %1925 = vmatprep.subr.mxu0 0.0
        %1926 = vmatpush1.msra.mxu0 %v1909
        %1927 = vmatprep.subr.mxu0 0.0
        %1928 = vmatpush1.msra.mxu0 %v1910
        %1929 = vmatprep.subr.mxu0 0.0
        %1930 = vmatpush1.msra.mxu0 %v1911
        %1931 = vmatprep.subr.mxu0 0.0
        %1932 = vmatpush1.msra.mxu0 0.0
        %1933 = vmatprep.subr.mxu0 0.0
        %1934 = vmatpush1.msra.mxu0 0.0
        %1935 = vmatprep.subr.mxu0 0.0
        %1936 = vmatpush1.msra.mxu0 0.0
        %1937 = vmatprep.subr.mxu0 0.0
        %1938 = vmatpush1.msra.mxu0 0.0
        %1939 = vmatprep.subr.mxu0 0.0
        %1940 = vmatpush1.msra.mxu0 0.0
        %1941 = vmatprep.subr.mxu0 0.0
        %1942 = vmatpush1.msra.mxu0 0.0
        %1943 = vmatprep.subr.mxu0 0.0
        %1944 = vmatpush1.msra.mxu0 0.0
        %1945 = vmatprep.subr.mxu0 0.0
        %1946 = vmatpush1.msra.mxu0 0.0
        %1947 = vmatprep.subr.mxu0 0.0
        %1948 = vmatpush1.msra.mxu0 0.0
        %1949 = vmatprep.subr.mxu0 0.0
        %1950 = vmatpush1.msra.mxu0 0.0
        %1951 = vmatprep.subr.mxu0 0.0
        %1952 = vmatpush1.msra.mxu0 0.0
        %1953 = vmatprep.subr.mxu0 0.0
        %1954 = vmatpush1.msra.mxu0 0.0
        %1955 = vmatprep.subr.mxu0 0.0
        %1956 = vmatpush1.msra.mxu0 0.0
        %1957 = vmatprep.subr.mxu0 0.0
        %1958 = vmatpush1.msra.mxu0 0.0
        %1959 = vmatprep.subr.mxu0 0.0
        %1960 = vmatpush1.msra.mxu0 0.0
        %1961 = vmatprep.subr.mxu0 0.0
        %1962 = vmatpush1.msra.mxu0 0.0
        %1963 = vmatprep.subr.mxu0 0.0
        %1964 = vmatpush1.msra.mxu0 0.0
        %1965 = vmatprep.subr.mxu0 0.0
        %1966 = vmatpush1.msra.mxu0 0.0
        %1967 = vmatprep.subr.mxu0 0.0
        %1968 = vmatpush1.msra.mxu0 0.0
        %1969 = vmatprep.subr.mxu0 0.0
        %1970 = vmatpush1.msra.mxu0 0.0
        %1971 = vmatprep.subr.mxu0 0.0
        %1972 = vmatpush1.msra.mxu0 0.0
        %1973 = vmatprep.subr.mxu0 0.0
        %1974 = vmatpush1.msra.mxu0 0.0
        %1975 = vmatprep.subr.mxu0 0.0
        %1976 = vmatpush1.msra.mxu0 0.0
        %1977 = vmatprep.subr.mxu0 0.0
        %1978 = vmatpush1.msra.mxu0 0.0
        %1979 = vmatprep.subr.mxu0 0.0
        %1980 = vmatpush1.msra.mxu0 0.0
        %1981 = vmatprep.subr.mxu0 0.0
        %1982 = vmatpush1.msra.mxu0 0.0
        %1983 = vmatprep.subr.mxu0 0.0
        %1984 = vmatpush1.msra.mxu0 0.0
        %1985 = vmatprep.subr.mxu0 0.0
        %1986 = vmatpush1.msra.mxu0 0.0
        %1987 = vmatprep.mubr.f32.mxu0 0.0
        %1988 = vmatmul.mubr.f32.gmra.mrb[0].mxu0 %v1921
        %v1989 = vpop.f32.mrb[0].mxu0
        %v1990 = vadd.f32 %v1918, %v1989
        %v1991 = vpop.f32.mrb[0].mxu0
        %1992 = vdwg.mxu0
        %v1994 = vsel %vm867, %v1899, 0
        %v1997 = vsel %vm867, %v1904, 0
        %v2000 = vsel %vm867, %v1990, 0
        %2002 = vmatprep.subr.mxu0 0.0
        %2003 = vmatpush1.xpose.msra.mxu0 %v2000
        %2004 = vmatprep.subr.mxu0 0.0
        %2005 = vmatpush1.xpose.msra.mxu0 0.0
        %2006 = vmatprep.subr.mxu0 0.0
        %2007 = vmatpush1.xpose.msra.mxu0 0.0
        %2008 = vmatprep.subr.mxu0 0.0
        %2009 = vmatpush1.xpose.msra.mxu0 0.0
        %2010 = vmatprep.subr.mxu0 0.0
        %2011 = vmatpush1.xpose.msra.mxu0 0.0
        %2012 = vmatprep.subr.mxu0 0.0
        %2013 = vmatpush1.xpose.msra.mxu0 0.0
        %2014 = vmatprep.subr.mxu0 0.0
        %2015 = vmatpush1.xpose.msra.mxu0 0.0
        %2016 = vmatprep.subr.mxu0 0.0
        %2017 = vmatpush1.xpose.msra.mxu0 0.0
        %2018 = vmatprep.subr.mxu0 0.0
        %2019 = vmatpush1.xpose.msra.mxu0 0.0
        %2020 = vmatprep.subr.mxu0 0.0
        %2021 = vmatpush1.xpose.msra.mxu0 0.0
        %2022 = vmatprep.subr.mxu0 0.0
        %2023 = vmatpush1.xpose.msra.mxu0 0.0
        %2024 = vmatprep.subr.mxu0 0.0
        %2025 = vmatpush1.xpose.msra.mxu0 0.0
        %2026 = vmatprep.subr.mxu0 0.0
        %2027 = vmatpush1.xpose.msra.mxu0 0.0
        %2028 = vmatprep.subr.mxu0 0.0
        %2029 = vmatpush1.xpose.msra.mxu0 0.0
        %2030 = vmatprep.subr.mxu0 0.0
        %2031 = vmatpush1.xpose.msra.mxu0 0.0
        %2032 = vmatprep.subr.mxu0 0.0
        %2033 = vmatpush1.xpose.msra.mxu0 0.0
        %2034 = vmatprep.subr.mxu0 0.0
        %2035 = vmatpush1.xpose.msra.mxu0 0.0
        %2036 = vmatprep.subr.mxu0 0.0
        %2037 = vmatpush1.xpose.msra.mxu0 0.0
        %2038 = vmatprep.subr.mxu0 0.0
        %2039 = vmatpush1.xpose.msra.mxu0 0.0
        %2040 = vmatprep.subr.mxu0 0.0
        %2041 = vmatpush1.xpose.msra.mxu0 0.0
        %2042 = vmatprep.subr.mxu0 0.0
        %2043 = vmatpush1.xpose.msra.mxu0 0.0
        %2044 = vmatprep.subr.mxu0 0.0
        %2045 = vmatpush1.xpose.msra.mxu0 0.0
        %2046 = vmatprep.subr.mxu0 0.0
        %2047 = vmatpush1.xpose.msra.mxu0 0.0
        %2048 = vmatprep.subr.mxu0 0.0
        %2049 = vmatpush1.xpose.msra.mxu0 0.0
        %2050 = vmatprep.subr.mxu0 0.0
        %2051 = vmatpush1.xpose.msra.mxu0 0.0
        %2052 = vmatprep.subr.mxu0 0.0
        %2053 = vmatpush1.xpose.msra.mxu0 0.0
        %2054 = vmatprep.subr.mxu0 0.0
        %2055 = vmatpush1.xpose.msra.mxu0 0.0
        %2056 = vmatprep.subr.mxu0 0.0
        %2057 = vmatpush1.xpose.msra.mxu0 0.0
        %2058 = vmatprep.subr.mxu0 0.0
        %2059 = vmatpush1.xpose.msra.mxu0 0.0
        %2060 = vmatprep.subr.mxu0 0.0
        %2061 = vmatpush1.xpose.msra.mxu0 0.0
        %2062 = vmatprep.subr.mxu0 0.0
        %2063 = vmatpush1.xpose.msra.mxu0 0.0
        %2064 = vmatprep.subr.mxu0 0.0
        %2065 = vmatpush1.xpose.msra.mxu0 0.0
        %2066 = vmatprep.mubr.f32.mxu0 0.0
        %2067 = vmatmul.mubr.f32.gmra.mrb[0].mxu0 %v1994
        %v2068 = vpop.f32.mrb[0].mxu0
        %v2069 = vadd.f32 0.0, %v2068
        %v2070 = vpop.f32.mrb[0].mxu0
        %2071 = vmatprep.mubr.f32.mxu0 0.0
        %2072 = vmatmul.mubr.f32.gmra.mrb[0].mxu0 %v1997
        %v2073 = vpop.f32.mrb[0].mxu0
        %v2074 = vadd.f32 0.0, %v2073
        %v2075 = vpop.f32.mrb[0].mxu0
        %2076 = vdwg.mxu0
        %v2077 = vsel %vm944, %v2069, -inf
        %2078 = vmax.xlane.f32.xlu0 %v2077
        %v2079 = vpop.xlane.xlu0 %2078
        %v2080 = vsel %vm944, %v2074, -inf
        %2081 = vmax.xlane.f32.xlu0 %v2080
        %v2082 = vpop.xlane.xlu0 %2081
        %v2083 = vsub.f32 %v2069, %v2079
        %v2084 = vsub.f32 %v2074, %v2082
        %v2085 = vmul.f32 %v2083, 1.442695
        %v2086 = vpow.pop %v2085
        %v2087 = vmul.f32 %v2084, 1.442695
        %v2088 = vpow.pop %v2087
        %v2089 = vsel %vm944, %v2086, 0.0
        %2090 = vadd.xlane.f32.xlu0 %v2089
        %v2091 = vpop.xlane.xlu0 %2090
        %v2092 = vsel %vm944, %v2088, 0.0
        %2093 = vadd.xlane.f32.xlu0 %v2092
        %v2094 = vpop.xlane.xlu0 %2093
        %v2095 = vrcp.pop %v2091
        %v2096 = vrcp.pop %v2094
        %v2097 = vmul.f32 %v2086, %v2095
        %v2098 = vmul.f32 %v2088, %v2096
        %v2100 = vsel %vm944, %v2097, 0
        %v2103 = vsel %vm944, %v2098, 0
        %2105 = vmatprep.subr.mxu0 0.0
        %2106 = vmatpush1.msra.mxu0 %v1990
        %2107 = vmatprep.subr.mxu0 0.0
        %2108 = vmatpush1.msra.mxu0 0.0
        %2109 = vmatprep.subr.mxu0 0.0
        %2110 = vmatpush1.msra.mxu0 0.0
        %2111 = vmatprep.subr.mxu0 0.0
        %2112 = vmatpush1.msra.mxu0 0.0
        %2113 = vmatprep.subr.mxu0 0.0
        %2114 = vmatpush1.msra.mxu0 0.0
        %2115 = vmatprep.subr.mxu0 0.0
        %2116 = vmatpush1.msra.mxu0 0.0
        %2117 = vmatprep.subr.mxu0 0.0
        %2118 = vmatpush1.msra.mxu0 0.0
        %2119 = vmatprep.subr.mxu0 0.0
        %2120 = vmatpush1.msra.mxu0 0.0
        %2121 = vmatprep.subr.mxu0 0.0
        %2122 = vmatpush1.msra.mxu0 0.0
        %2123 = vmatprep.subr.mxu0 0.0
        %2124 = vmatpush1.msra.mxu0 0.0
        %2125 = vmatprep.subr.mxu0 0.0
        %2126 = vmatpush1.msra.mxu0 0.0
        %2127 = vmatprep.subr.mxu0 0.0
        %2128 = vmatpush1.msra.mxu0 0.0
        %2129 = vmatprep.subr.mxu0 0.0
        %2130 = vmatpush1.msra.mxu0 0.0
        %2131 = vmatprep.subr.mxu0 0.0
        %2132 = vmatpush1.msra.mxu0 0.0
        %2133 = vmatprep.subr.mxu0 0.0
        %2134 = vmatpush1.msra.mxu0 0.0
        %2135 = vmatprep.subr.mxu0 0.0
        %2136 = vmatpush1.msra.mxu0 0.0
        %2137 = vmatprep.subr.mxu0 0.0
        %2138 = vmatpush1.msra.mxu0 0.0
        %2139 = vmatprep.subr.mxu0 0.0
        %2140 = vmatpush1.msra.mxu0 0.0
        %2141 = vmatprep.subr.mxu0 0.0
        %2142 = vmatpush1.msra.mxu0 0.0
        %2143 = vmatprep.subr.mxu0 0.0
        %2144 = vmatpush1.msra.mxu0 0.0
        %2145 = vmatprep.subr.mxu0 0.0
        %2146 = vmatpush1.msra.mxu0 0.0
        %2147 = vmatprep.subr.mxu0 0.0
        %2148 = vmatpush1.msra.mxu0 0.0
        %2149 = vmatprep.subr.mxu0 0.0
        %2150 = vmatpush1.msra.mxu0 0.0
        %2151 = vmatprep.subr.mxu0 0.0
        %2152 = vmatpush1.msra.mxu0 0.0
        %2153 = vmatprep.subr.mxu0 0.0
        %2154 = vmatpush1.msra.mxu0 0.0
        %2155 = vmatprep.subr.mxu0 0.0
        %2156 = vmatpush1.msra.mxu0 0.0
        %2157 = vmatprep.subr.mxu0 0.0
        %2158 = vmatpush1.msra.mxu0 0.0
        %2159 = vmatprep.subr.mxu0 0.0
        %2160 = vmatpush1.msra.mxu0 0.0
        %2161 = vmatprep.subr.mxu0 0.0
        %2162 = vmatpush1.msra.mxu0 0.0
        %2163 = vmatprep.subr.mxu0 0.0
        %2164 = vmatpush1.msra.mxu0 0.0
        %2165 = vmatprep.subr.mxu0 0.0
        %2166 = vmatpush1.msra.mxu0 0.0
        %2167 = vmatprep.subr.mxu0 0.0
        %2168 = vmatpush1.msra.mxu0 0.0
        %2169 = vmatprep.mubr.f32.mxu0 0.0
        %2170 = vmatmul.mubr.f32.gmra.mrb[0].mxu0 %v2100
        %v2171 = vpop.f32.mrb[0].mxu0
        %v2172 = vadd.f32 0.0, %v2171
        %v2173 = vpop.f32.mrb[0].mxu0
        %2174 = vmatprep.mubr.f32.mxu0 0.0
        %2175 = vmatmul.mubr.f32.gmra.mrb[0].mxu0 %v2103
        %v2176 = vpop.f32.mrb[0].mxu0
        %v2177 = vadd.f32 0.0, %v2176
        %v2178 = vpop.f32.mrb[0].mxu0
        %2179 = vdwg.mxu0
        %s2180 = scalar_lea.vmem [#allocation10], 128
        %v2181 = vld [vmem:[%s2180] sm:$0xff]
        %v2182 = vld [vmem:[%s2180 + $0x8] sm:$0xff]
        %v2183 = vld [vmem:[%s2180 + $0x10] sm:$0xff]
        %v2184 = vld [vmem:[%s2180 + $0x18] sm:$0xff]
        %v2185 = vld [vmem:[%s2180 + $0x20] sm:$0xff]
        %v2186 = vld [vmem:[%s2180 + $0x28] sm:$0xff]
        %v2187 = vld [vmem:[%s2180 + $0x30] sm:$0xff]
        %v2188 = vld [vmem:[%s2180 + $0x38] sm:$0xff]
        %s2189 = scalar_lea.vmem %s8, 2
        %v2190 = vld [vmem:[%s2189] sm:$0x1]
        %v2192 = vlaneseq
        %v2193 = vshrl.u32 %v2192, 7
        %v2194 = vsub.s32 0, %v2193
        %v2195 = vrot.slane %v2190, %v2194
        %v2198 = vsel %vm867, %v2172, 0
        %v2201 = vsel %vm867, %v2177, 0
        %2203 = vmatprep.subr.mxu0 0.0
        %2204 = vmatpush1.msra.mxu0 %v2181
        %2205 = vmatprep.subr.mxu0 0.0
        %2206 = vmatpush1.msra.mxu0 %v2182
        %2207 = vmatprep.subr.mxu0 0.0
        %2208 = vmatpush1.msra.mxu0 %v2183
        %2209 = vmatprep.subr.mxu0 0.0
        %2210 = vmatpush1.msra.mxu0 %v2184
        %2211 = vmatprep.subr.mxu0 0.0
        %2212 = vmatpush1.msra.mxu0 %v2185
        %2213 = vmatprep.subr.mxu0 0.0
        %2214 = vmatpush1.msra.mxu0 %v2186
        %2215 = vmatprep.subr.mxu0 0.0
        %2216 = vmatpush1.msra.mxu0 %v2187
        %2217 = vmatprep.subr.mxu0 0.0
        %2218 = vmatpush1.msra.mxu0 %v2188
        %2219 = vmatprep.subr.mxu0 0.0
        %2220 = vmatpush1.msra.mxu0 0.0
        %2221 = vmatprep.subr.mxu0 0.0
        %2222 = vmatpush1.msra.mxu0 0.0
        %2223 = vmatprep.subr.mxu0 0.0
        %2224 = vmatpush1.msra.mxu0 0.0
        %2225 = vmatprep.subr.mxu0 0.0
        %2226 = vmatpush1.msra.mxu0 0.0
        %2227 = vmatprep.subr.mxu0 0.0
        %2228 = vmatpush1.msra.mxu0 0.0
        %2229 = vmatprep.subr.mxu0 0.0
        %2230 = vmatpush1.msra.mxu0 0.0
        %2231 = vmatprep.subr.mxu0 0.0
        %2232 = vmatpush1.msra.mxu0 0.0
        %2233 = vmatprep.subr.mxu0 0.0
        %2234 = vmatpush1.msra.mxu0 0.0
        %2235 = vmatprep.subr.mxu0 0.0
        %2236 = vmatpush1.msra.mxu0 0.0
        %2237 = vmatprep.subr.mxu0 0.0
        %2238 = vmatpush1.msra.mxu0 0.0
        %2239 = vmatprep.subr.mxu0 0.0
        %2240 = vmatpush1.msra.mxu0 0.0
        %2241 = vmatprep.subr.mxu0 0.0
        %2242 = vmatpush1.msra.mxu0 0.0
        %2243 = vmatprep.subr.mxu0 0.0
        %2244 = vmatpush1.msra.mxu0 0.0
        %2245 = vmatprep.subr.mxu0 0.0
        %2246 = vmatpush1.msra.mxu0 0.0
        %2247 = vmatprep.subr.mxu0 0.0
        %2248 = vmatpush1.msra.mxu0 0.0
        %2249 = vmatprep.subr.mxu0 0.0
        %2250 = vmatpush1.msra.mxu0 0.0
        %2251 = vmatprep.subr.mxu0 0.0
        %2252 = vmatpush1.msra.mxu0 0.0
        %2253 = vmatprep.subr.mxu0 0.0
        %2254 = vmatpush1.msra.mxu0 0.0
        %2255 = vmatprep.subr.mxu0 0.0
        %2256 = vmatpush1.msra.mxu0 0.0
        %2257 = vmatprep.subr.mxu0 0.0
        %2258 = vmatpush1.msra.mxu0 0.0
        %2259 = vmatprep.subr.mxu0 0.0
        %2260 = vmatpush1.msra.mxu0 0.0
        %2261 = vmatprep.subr.mxu0 0.0
        %2262 = vmatpush1.msra.mxu0 0.0
        %2263 = vmatprep.subr.mxu0 0.0
        %2264 = vmatpush1.msra.mxu0 0.0
        %2265 = vmatprep.subr.mxu0 0.0
        %2266 = vmatpush1.msra.mxu0 0.0
        %2267 = vmatprep.mubr.f32.mxu0 0.0
        %2268 = vmatmul.mubr.f32.gmra.mrb[0].mxu0 %v2198
        %v2269 = vpop.f32.mrb[0].mxu0
        %v2270 = vadd.f32 %v2195, %v2269
        %v2271 = vpop.f32.mrb[0].mxu0
        %2272 = vmatprep.mubr.f32.mxu0 0.0
        %2273 = vmatmul.mubr.f32.gmra.mrb[0].mxu0 %v2201
        %v2274 = vpop.f32.mrb[0].mxu0
        %v2275 = vadd.f32 %v2195, %v2274
        %v2276 = vpop.f32.mrb[0].mxu0
        %2277 = vdwg.mxu0
        %v2278 = vadd.f32 %v698, %v2270
        %v2279 = vadd.f32 %v699, %v2275
        %v2280 = vsel %vm712, %v2278, 0.0
        %2281 = vadd.xlane.f32.xlu0 %v2280
        %v2282 = vpop.xlane.xlu0 %2281
        %v2283 = vsel %vm712, %v2279, 0.0
        %2284 = vadd.xlane.f32.xlu0 %v2283
        %v2285 = vpop.xlane.xlu0 %2284
        %v2286 = vmul.f32 %v2282, %v1120
        %v2287 = vmul.f32 %v2285, %v1120
        %v2288 = vsub.f32 %v2278, %v2286
        %v2289 = vsub.f32 %v2279, %v2287
        %v2290 = vmul.f32 %v2288, %v2288
        %v2291 = vmul.f32 %v2289, %v2289
        %v2292 = vsel %vm712, %v2290, 0.0
        %2293 = vadd.xlane.f32.xlu0 %v2292
        %v2294 = vpop.xlane.xlu0 %2293
        %v2295 = vsel %vm712, %v2291, 0.0
        %2296 = vadd.xlane.f32.xlu0 %v2295
        %v2297 = vpop.xlane.xlu0 %2296
        %v2298 = vmul.f32 %v2294, %v1120
        %v2299 = vmul.f32 %v2297, %v1120
        %v2300 = vadd.f32 %v2298, 1e-05
        %v2301 = vadd.f32 %v2299, 1e-05
        %v2302 = vrsqrt.pop %v2300
        %v2303 = vrsqrt.pop %v2301
        %v2304 = vmul.f32 %v2288, %v2302
        %v2305 = vmul.f32 %v2289, %v2303
        %s2306 = scalar_lea.vmem %s9, 3
        %v2307 = vld [vmem:[%s2306] sm:$0x1]
        %v2309 = vlaneseq
        %v2310 = vshrl.u32 %v2309, 7
        %v2311 = vsub.s32 0, %v2310
        %v2312 = vrot.slane %v2307, %v2311
        %v2314 = vmul.f32 %v2304, %v2312
        %v2315 = vmul.f32 %v2305, %v2312
        %s2316 = scalar_lea.vmem %s10, 3
        %v2317 = vld [vmem:[%s2316] sm:$0x1]
        %v2319 = vlaneseq
        %v2320 = vshrl.u32 %v2319, 7
        %v2321 = vsub.s32 0, %v2320
        %v2322 = vrot.slane %v2317, %v2321
        %v2324 = vadd.f32 %v2314, %v2322
        %v2325 = vadd.f32 %v2315, %v2322
        %s2326 = scalar_lea.vmem [#allocation7], 96
        %v2327 = vld [vmem:[%s2326] sm:$0xff]
        %v2328 = vld [vmem:[%s2326 + $0x8] sm:$0xff]
        %v2329 = vld [vmem:[%s2326 + $0x10] sm:$0xff]
        %v2330 = vld [vmem:[%s2326 + $0x18] sm:$0xff]
        %s2331 = scalar_lea.vmem %s4, 3
        %v2332 = vld [vmem:[%s2331] sm:$0x1]
        %v2334 = vlaneseq
        %v2335 = vshrl.u32 %v2334, 7
        %v2336 = vsub.s32 0, %v2335
        %v2337 = vrot.slane %v2332, %v2336
        %v2340 = vsel %vm712, %v700, 0
        %2342 = vmatprep.subr.mxu0 0.0
        %2343 = vmatpush1.msra.mxu0 %v2327
        %2344 = vmatprep.subr.mxu0 0.0
        %2345 = vmatpush1.msra.mxu0 %v2328
        %2346 = vmatprep.subr.mxu0 0.0
        %2347 = vmatpush1.msra.mxu0 %v2329
        %2348 = vmatprep.subr.mxu0 0.0
        %2349 = vmatpush1.msra.mxu0 %v2330
        %2350 = vmatprep.subr.mxu0 0.0
        %2351 = vmatpush1.msra.mxu0 0.0
        %2352 = vmatprep.subr.mxu0 0.0
        %2353 = vmatpush1.msra.mxu0 0.0
        %2354 = vmatprep.subr.mxu0 0.0
        %2355 = vmatpush1.msra.mxu0 0.0
        %2356 = vmatprep.subr.mxu0 0.0
        %2357 = vmatpush1.msra.mxu0 0.0
        %2358 = vmatprep.subr.mxu0 0.0
        %2359 = vmatpush1.msra.mxu0 0.0
        %2360 = vmatprep.subr.mxu0 0.0
        %2361 = vmatpush1.msra.mxu0 0.0
        %2362 = vmatprep.subr.mxu0 0.0
        %2363 = vmatpush1.msra.mxu0 0.0
        %2364 = vmatprep.subr.mxu0 0.0
        %2365 = vmatpush1.msra.mxu0 0.0
        %2366 = vmatprep.subr.mxu0 0.0
        %2367 = vmatpush1.msra.mxu0 0.0
        %2368 = vmatprep.subr.mxu0 0.0
        %2369 = vmatpush1.msra.mxu0 0.0
        %2370 = vmatprep.subr.mxu0 0.0
        %2371 = vmatpush1.msra.mxu0 0.0
        %2372 = vmatprep.subr.mxu0 0.0
        %2373 = vmatpush1.msra.mxu0 0.0
        %2374 = vmatprep.subr.mxu0 0.0
        %2375 = vmatpush1.msra.mxu0 0.0
        %2376 = vmatprep.subr.mxu0 0.0
        %2377 = vmatpush1.msra.mxu0 0.0
        %2378 = vmatprep.subr.mxu0 0.0
        %2379 = vmatpush1.msra.mxu0 0.0
        %2380 = vmatprep.subr.mxu0 0.0
        %2381 = vmatpush1.msra.mxu0 0.0
        %2382 = vmatprep.subr.mxu0 0.0
        %2383 = vmatpush1.msra.mxu0 0.0
        %2384 = vmatprep.subr.mxu0 0.0
        %2385 = vmatpush1.msra.mxu0 0.0
        %2386 = vmatprep.subr.mxu0 0.0
        %2387 = vmatpush1.msra.mxu0 0.0
        %2388 = vmatprep.subr.mxu0 0.0
        %2389 = vmatpush1.msra.mxu0 0.0
        %2390 = vmatprep.subr.mxu0 0.0
        %2391 = vmatpush1.msra.mxu0 0.0
        %2392 = vmatprep.subr.mxu0 0.0
        %2393 = vmatpush1.msra.mxu0 0.0
        %2394 = vmatprep.subr.mxu0 0.0
        %2395 = vmatpush1.msra.mxu0 0.0
        %2396 = vmatprep.subr.mxu0 0.0
        %2397 = vmatpush1.msra.mxu0 0.0
        %2398 = vmatprep.subr.mxu0 0.0
        %2399 = vmatpush1.msra.mxu0 0.0
        %2400 = vmatprep.subr.mxu0 0.0
        %2401 = vmatpush1.msra.mxu0 0.0
        %2402 = vmatprep.subr.mxu0 0.0
        %2403 = vmatpush1.msra.mxu0 0.0
        %2404 = vmatprep.subr.mxu0 0.0
        %2405 = vmatpush1.msra.mxu0 0.0
        %2406 = vmatprep.mubr.f32.mxu0 0.0
        %2407 = vmatmul.mubr.f32.gmra.mrb[0].mxu0 %v2340
        %v2408 = vpop.f32.mrb[0].mxu0
        %v2409 = vadd.f32 %v2337, %v2408
        %v2410 = vpop.f32.mrb[0].mxu0
        %2411 = vdwg.mxu0
        %s2412 = scalar_lea.vmem [#allocation8], 96
        %v2413 = vld [vmem:[%s2412] sm:$0xff]
        %v2414 = vld [vmem:[%s2412 + $0x8] sm:$0xff]
        %v2415 = vld [vmem:[%s2412 + $0x10] sm:$0xff]
        %v2416 = vld [vmem:[%s2412 + $0x18] sm:$0xff]
        %s2417 = scalar_lea.vmem %s6, 3
        %v2418 = vld [vmem:[%s2417] sm:$0x1]
        %v2420 = vlaneseq
        %v2421 = vshrl.u32 %v2420, 7
        %v2422 = vsub.s32 0, %v2421
        %v2423 = vrot.slane %v2418, %v2422
        %2425 = vmatprep.subr.mxu0 0.0
        %2426 = vmatpush1.msra.mxu0 %v2413
        %2427 = vmatprep.subr.mxu0 0.0
        %2428 = vmatpush1.msra.mxu0 %v2414
        %2429 = vmatprep.subr.mxu0 0.0
        %2430 = vmatpush1.msra.mxu0 %v2415
        %2431 = vmatprep.subr.mxu0 0.0
        %2432 = vmatpush1.msra.mxu0 %v2416
        %2433 = vmatprep.subr.mxu0 0.0
        %2434 = vmatpush1.msra.mxu0 0.0
        %2435 = vmatprep.subr.mxu0 0.0
        %2436 = vmatpush1.msra.mxu0 0.0
        %2437 = vmatprep.subr.mxu0 0.0
        %2438 = vmatpush1.msra.mxu0 0.0
        %2439 = vmatprep.subr.mxu0 0.0
        %2440 = vmatpush1.msra.mxu0 0.0
        %2441 = vmatprep.subr.mxu0 0.0
        %2442 = vmatpush1.msra.mxu0 0.0
        %2443 = vmatprep.subr.mxu0 0.0
        %2444 = vmatpush1.msra.mxu0 0.0
        %2445 = vmatprep.subr.mxu0 0.0
        %2446 = vmatpush1.msra.mxu0 0.0
        %2447 = vmatprep.subr.mxu0 0.0
        %2448 = vmatpush1.msra.mxu0 0.0
        %2449 = vmatprep.subr.mxu0 0.0
        %2450 = vmatpush1.msra.mxu0 0.0
        %2451 = vmatprep.subr.mxu0 0.0
        %2452 = vmatpush1.msra.mxu0 0.0
        %2453 = vmatprep.subr.mxu0 0.0
        %2454 = vmatpush1.msra.mxu0 0.0
        %2455 = vmatprep.subr.mxu0 0.0
        %2456 = vmatpush1.msra.mxu0 0.0
        %2457 = vmatprep.subr.mxu0 0.0
        %2458 = vmatpush1.msra.mxu0 0.0
        %2459 = vmatprep.subr.mxu0 0.0
        %2460 = vmatpush1.msra.mxu0 0.0
        %2461 = vmatprep.subr.mxu0 0.0
        %2462 = vmatpush1.msra.mxu0 0.0
        %2463 = vmatprep.subr.mxu0 0.0
        %2464 = vmatpush1.msra.mxu0 0.0
        %2465 = vmatprep.subr.mxu0 0.0
        %2466 = vmatpush1.msra.mxu0 0.0
        %2467 = vmatprep.subr.mxu0 0.0
        %2468 = vmatpush1.msra.mxu0 0.0
        %2469 = vmatprep.subr.mxu0 0.0
        %2470 = vmatpush1.msra.mxu0 0.0
        %2471 = vmatprep.subr.mxu0 0.0
        %2472 = vmatpush1.msra.mxu0 0.0
        %2473 = vmatprep.subr.mxu0 0.0
        %2474 = vmatpush1.msra.mxu0 0.0
        %2475 = vmatprep.subr.mxu0 0.0
        %2476 = vmatpush1.msra.mxu0 0.0
        %2477 = vmatprep.subr.mxu0 0.0
        %2478 = vmatpush1.msra.mxu0 0.0
        %2479 = vmatprep.subr.mxu0 0.0
        %2480 = vmatpush1.msra.mxu0 0.0
        %2481 = vmatprep.subr.mxu0 0.0
        %2482 = vmatpush1.msra.mxu0 0.0
        %2483 = vmatprep.subr.mxu0 0.0
        %2484 = vmatpush1.msra.mxu0 0.0
        %2485 = vmatprep.subr.mxu0 0.0
        %2486 = vmatpush1.msra.mxu0 0.0
        %2487 = vmatprep.subr.mxu0 0.0
        %2488 = vmatpush1.msra.mxu0 0.0
        %2489 = vmatprep.mubr.f32.mxu0 0.0
        %2490 = vmatmul.mubr.f32.gmra.mrb[0].mxu0 %v1921
        %v2491 = vpop.f32.mrb[0].mxu0
        %v2492 = vadd.f32 %v2423, %v2491
        %v2493 = vpop.f32.mrb[0].mxu0
        %2494 = vdwg.mxu0
        %v2496 = vsel %vm712, %v2324, 0
        %v2499 = vsel %vm712, %v2325, 0
        %2501 = vmatprep.subr.mxu0 0.0
        %2502 = vmatpush1.msra.mxu0 %v2413
        %2503 = vmatprep.subr.mxu0 0.0
        %2504 = vmatpush1.msra.mxu0 %v2414
        %2505 = vmatprep.subr.mxu0 0.0
        %2506 = vmatpush1.msra.mxu0 %v2415
        %2507 = vmatprep.subr.mxu0 0.0
        %2508 = vmatpush1.msra.mxu0 %v2416
        %2509 = vmatprep.subr.mxu0 0.0
        %2510 = vmatpush1.msra.mxu0 0.0
        %2511 = vmatprep.subr.mxu0 0.0
        %2512 = vmatpush1.msra.mxu0 0.0
        %2513 = vmatprep.subr.mxu0 0.0
        %2514 = vmatpush1.msra.mxu0 0.0
        %2515 = vmatprep.subr.mxu0 0.0
        %2516 = vmatpush1.msra.mxu0 0.0
        %2517 = vmatprep.subr.mxu0 0.0
        %2518 = vmatpush1.msra.mxu0 0.0
        %2519 = vmatprep.subr.mxu0 0.0
        %2520 = vmatpush1.msra.mxu0 0.0
        %2521 = vmatprep.subr.mxu0 0.0
        %2522 = vmatpush1.msra.mxu0 0.0
        %2523 = vmatprep.subr.mxu0 0.0
        %2524 = vmatpush1.msra.mxu0 0.0
        %2525 = vmatprep.subr.mxu0 0.0
        %2526 = vmatpush1.msra.mxu0 0.0
        %2527 = vmatprep.subr.mxu0 0.0
        %2528 = vmatpush1.msra.mxu0 0.0
        %2529 = vmatprep.subr.mxu0 0.0
        %2530 = vmatpush1.msra.mxu0 0.0
        %2531 = vmatprep.subr.mxu0 0.0
        %2532 = vmatpush1.msra.mxu0 0.0
        %2533 = vmatprep.subr.mxu0 0.0
        %2534 = vmatpush1.msra.mxu0 0.0
        %2535 = vmatprep.subr.mxu0 0.0
        %2536 = vmatpush1.msra.mxu0 0.0
        %2537 = vmatprep.subr.mxu0 0.0
        %2538 = vmatpush1.msra.mxu0 0.0
        %2539 = vmatprep.subr.mxu0 0.0
        %2540 = vmatpush1.msra.mxu0 0.0
        %2541 = vmatprep.subr.mxu0 0.0
        %2542 = vmatpush1.msra.mxu0 0.0
        %2543 = vmatprep.subr.mxu0 0.0
        %2544 = vmatpush1.msra.mxu0 0.0
        %2545 = vmatprep.subr.mxu0 0.0
        %2546 = vmatpush1.msra.mxu0 0.0
        %2547 = vmatprep.subr.mxu0 0.0
        %2548 = vmatpush1.msra.mxu0 0.0
        %2549 = vmatprep.subr.mxu0 0.0
        %2550 = vmatpush1.msra.mxu0 0.0
        %2551 = vmatprep.subr.mxu0 0.0
        %2552 = vmatpush1.msra.mxu0 0.0
        %2553 = vmatprep.subr.mxu0 0.0
        %2554 = vmatpush1.msra.mxu0 0.0
        %2555 = vmatprep.subr.mxu0 0.0
        %2556 = vmatpush1.msra.mxu0 0.0
        %2557 = vmatprep.subr.mxu0 0.0
        %2558 = vmatpush1.msra.mxu0 0.0
        %2559 = vmatprep.subr.mxu0 0.0
        %2560 = vmatpush1.msra.mxu0 0.0
        %2561 = vmatprep.subr.mxu0 0.0
        %2562 = vmatpush1.msra.mxu0 0.0
        %2563 = vmatprep.subr.mxu0 0.0
        %2564 = vmatpush1.msra.mxu0 0.0
        %2565 = vmatprep.mubr.f32.mxu0 0.0
        %2566 = vmatmul.mubr.f32.gmra.mrb[0].mxu0 %v2496
        %v2567 = vpop.f32.mrb[0].mxu0
        %v2568 = vadd.f32 %v2423, %v2567
        %v2569 = vpop.f32.mrb[0].mxu0
        %2570 = vmatprep.mubr.f32.mxu0 0.0
        %2571 = vmatmul.mubr.f32.gmra.mrb[0].mxu0 %v2499
        %v2572 = vpop.f32.mrb[0].mxu0
        %v2573 = vadd.f32 %v2423, %v2572
        %v2574 = vpop.f32.mrb[0].mxu0
        %2575 = vdwg.mxu0
        %v2577 = vsel %vm867, %v2409, 0
        %v2580 = vsel %vm867, %v2492, 0
        %2582 = vmatprep.subr.mxu0 0.0
        %2583 = vmatpush1.xpose.msra.mxu0 %v2580
        %2584 = vmatprep.subr.mxu0 0.0
        %2585 = vmatpush1.xpose.msra.mxu0 0.0
        %2586 = vmatprep.subr.mxu0 0.0
        %2587 = vmatpush1.xpose.msra.mxu0 0.0
        %2588 = vmatprep.subr.mxu0 0.0
        %2589 = vmatpush1.xpose.msra.mxu0 0.0
        %2590 = vmatprep.subr.mxu0 0.0
        %2591 = vmatpush1.xpose.msra.mxu0 0.0
        %2592 = vmatprep.subr.mxu0 0.0
        %2593 = vmatpush1.xpose.msra.mxu0 0.0
        %2594 = vmatprep.subr.mxu0 0.0
        %2595 = vmatpush1.xpose.msra.mxu0 0.0
        %2596 = vmatprep.subr.mxu0 0.0
        %2597 = vmatpush1.xpose.msra.mxu0 0.0
        %2598 = vmatprep.subr.mxu0 0.0
        %2599 = vmatpush1.xpose.msra.mxu0 0.0
        %2600 = vmatprep.subr.mxu0 0.0
        %2601 = vmatpush1.xpose.msra.mxu0 0.0
        %2602 = vmatprep.subr.mxu0 0.0
        %2603 = vmatpush1.xpose.msra.mxu0 0.0
        %2604 = vmatprep.subr.mxu0 0.0
        %2605 = vmatpush1.xpose.msra.mxu0 0.0
        %2606 = vmatprep.subr.mxu0 0.0
        %2607 = vmatpush1.xpose.msra.mxu0 0.0
        %2608 = vmatprep.subr.mxu0 0.0
        %2609 = vmatpush1.xpose.msra.mxu0 0.0
        %2610 = vmatprep.subr.mxu0 0.0
        %2611 = vmatpush1.xpose.msra.mxu0 0.0
        %2612 = vmatprep.subr.mxu0 0.0
        %2613 = vmatpush1.xpose.msra.mxu0 0.0
        %2614 = vmatprep.subr.mxu0 0.0
        %2615 = vmatpush1.xpose.msra.mxu0 0.0
        %2616 = vmatprep.subr.mxu0 0.0
        %2617 = vmatpush1.xpose.msra.mxu0 0.0
        %2618 = vmatprep.subr.mxu0 0.0
        %2619 = vmatpush1.xpose.msra.mxu0 0.0
        %2620 = vmatprep.subr.mxu0 0.0
        %2621 = vmatpush1.xpose.msra.mxu0 0.0
        %2622 = vmatprep.subr.mxu0 0.0
        %2623 = vmatpush1.xpose.msra.mxu0 0.0
        %2624 = vmatprep.subr.mxu0 0.0
        %2625 = vmatpush1.xpose.msra.mxu0 0.0
        %2626 = vmatprep.subr.mxu0 0.0
        %2627 = vmatpush1.xpose.msra.mxu0 0.0
        %2628 = vmatprep.subr.mxu0 0.0
        %2629 = vmatpush1.xpose.msra.mxu0 0.0
        %2630 = vmatprep.subr.mxu0 0.0
        %2631 = vmatpush1.xpose.msra.mxu0 0.0
        %2632 = vmatprep.subr.mxu0 0.0
        %2633 = vmatpush1.xpose.msra.mxu0 0.0
        %2634 = vmatprep.subr.mxu0 0.0
        %2635 = vmatpush1.xpose.msra.mxu0 0.0
        %2636 = vmatprep.subr.mxu0 0.0
        %2637 = vmatpush1.xpose.msra.mxu0 0.0
        %2638 = vmatprep.subr.mxu0 0.0
        %2639 = vmatpush1.xpose.msra.mxu0 0.0
        %2640 = vmatprep.subr.mxu0 0.0
        %2641 = vmatpush1.xpose.msra.mxu0 0.0
        %2642 = vmatprep.subr.mxu0 0.0
        %2643 = vmatpush1.xpose.msra.mxu0 0.0
        %2644 = vmatprep.subr.mxu0 0.0
        %2645 = vmatpush1.xpose.msra.mxu0 0.0
        %2646 = vmatprep.mubr.f32.mxu0 0.0
        %2647 = vmatmul.mubr.f32.gmra.mrb[0].mxu0 %v2577
        %v2648 = vpop.f32.mrb[0].mxu0
        %v2649 = vadd.f32 0.0, %v2648
        %v2650 = vpop.f32.mrb[0].mxu0
        %2651 = vdwg.mxu0
        %v2653 = vsel %vm867, %v2568, 0
        %v2656 = vsel %vm867, %v2573, 0
        %2658 = vmatprep.subr.mxu0 0.0
        %2659 = vmatpush1.xpose.msra.mxu0 %v2653
        %2660 = vmatprep.subr.mxu0 0.0
        %2661 = vmatpush1.xpose.msra.mxu0 %v2656
        %2662 = vmatprep.subr.mxu0 0.0
        %2663 = vmatpush1.xpose.msra.mxu0 0.0
        %2664 = vmatprep.subr.mxu0 0.0
        %2665 = vmatpush1.xpose.msra.mxu0 0.0
        %2666 = vmatprep.subr.mxu0 0.0
        %2667 = vmatpush1.xpose.msra.mxu0 0.0
        %2668 = vmatprep.subr.mxu0 0.0
        %2669 = vmatpush1.xpose.msra.mxu0 0.0
        %2670 = vmatprep.subr.mxu0 0.0
        %2671 = vmatpush1.xpose.msra.mxu0 0.0
        %2672 = vmatprep.subr.mxu0 0.0
        %2673 = vmatpush1.xpose.msra.mxu0 0.0
        %2674 = vmatprep.subr.mxu0 0.0
        %2675 = vmatpush1.xpose.msra.mxu0 0.0
        %2676 = vmatprep.subr.mxu0 0.0
        %2677 = vmatpush1.xpose.msra.mxu0 0.0
        %2678 = vmatprep.subr.mxu0 0.0
        %2679 = vmatpush1.xpose.msra.mxu0 0.0
        %2680 = vmatprep.subr.mxu0 0.0
        %2681 = vmatpush1.xpose.msra.mxu0 0.0
        %2682 = vmatprep.subr.mxu0 0.0
        %2683 = vmatpush1.xpose.msra.mxu0 0.0
        %2684 = vmatprep.subr.mxu0 0.0
        %2685 = vmatpush1.xpose.msra.mxu0 0.0
        %2686 = vmatprep.subr.mxu0 0.0
        %2687 = vmatpush1.xpose.msra.mxu0 0.0
        %2688 = vmatprep.subr.mxu0 0.0
        %2689 = vmatpush1.xpose.msra.mxu0 0.0
        %2690 = vmatprep.subr.mxu0 0.0
        %2691 = vmatpush1.xpose.msra.mxu0 0.0
        %2692 = vmatprep.subr.mxu0 0.0
        %2693 = vmatpush1.xpose.msra.mxu0 0.0
        %2694 = vmatprep.subr.mxu0 0.0
        %2695 = vmatpush1.xpose.msra.mxu0 0.0
        %2696 = vmatprep.subr.mxu0 0.0
        %2697 = vmatpush1.xpose.msra.mxu0 0.0
        %2698 = vmatprep.subr.mxu0 0.0
        %2699 = vmatpush1.xpose.msra.mxu0 0.0
        %2700 = vmatprep.subr.mxu0 0.0
        %2701 = vmatpush1.xpose.msra.mxu0 0.0
        %2702 = vmatprep.subr.mxu0 0.0
        %2703 = vmatpush1.xpose.msra.mxu0 0.0
        %2704 = vmatprep.subr.mxu0 0.0
        %2705 = vmatpush1.xpose.msra.mxu0 0.0
        %2706 = vmatprep.subr.mxu0 0.0
        %2707 = vmatpush1.xpose.msra.mxu0 0.0
        %2708 = vmatprep.subr.mxu0 0.0
        %2709 = vmatpush1.xpose.msra.mxu0 0.0
        %2710 = vmatprep.subr.mxu0 0.0
        %2711 = vmatpush1.xpose.msra.mxu0 0.0
        %2712 = vmatprep.subr.mxu0 0.0
        %2713 = vmatpush1.xpose.msra.mxu0 0.0
        %2714 = vmatprep.subr.mxu0 0.0
        %2715 = vmatpush1.xpose.msra.mxu0 0.0
        %2716 = vmatprep.subr.mxu0 0.0
        %2717 = vmatpush1.xpose.msra.mxu0 0.0
        %2718 = vmatprep.subr.mxu0 0.0
        %2719 = vmatpush1.xpose.msra.mxu0 0.0
        %2720 = vmatprep.subr.mxu0 0.0
        %2721 = vmatpush1.xpose.msra.mxu0 0.0
        %2722 = vmatprep.mubr.f32.mxu0 0.0
        %2723 = vmatmul.mubr.f32.gmra.mrb[0].mxu0 %v2577
        %v2724 = vpop.f32.mrb[0].mxu0
        %v2725 = vadd.f32 0.0, %v2724
        %v2726 = vpop.f32.mrb[0].mxu0
        %2727 = vdwg.mxu0
        %vm2728 = vcmask 60416
        %v2729 = vsel %vm2728, %v2649, -inf
        %2730 = vmax.xlane.f32.xlu0 %v2729
        %v2731 = vpop.xlane.xlu0 %2730
        %vm2732 = vcmask 125952
        %v2733 = vsel %vm2732, %v2725, -inf
        %2734 = vmax.xlane.f32.xlu0 %v2733
        %v2735 = vpop.xlane.xlu0 %2734
        %v2736 = vmax.f32 %v2731, %v2735
        %v2737 = vsub.f32 %v2649, %v2736
        %v2738 = vmul.f32 %v2737, 1.442695
        %v2739 = vpow.pop %v2738
        %v2740 = vsub.f32 %v2725, %v2736
        %v2741 = vmul.f32 %v2740, 1.442695
        %v2742 = vpow.pop %v2741
        %v2743 = vsel %vm2728, %v2739, 0.0
        %2744 = vadd.xlane.f32.xlu0 %v2743
        %v2745 = vpop.xlane.xlu0 %2744
        %v2746 = vsel %vm2732, %v2742, 0.0
        %2747 = vadd.xlane.f32.xlu0 %v2746
        %v2748 = vpop.xlane.xlu0 %2747
        %v2749 = vadd.f32 %v2745, %v2748
        %v2750 = vrcp.pop %v2749
        %v2752 = vsel %vm1406, %v2742, 0
        %2754 = vmatprep.subr.mxu0 0.0
        %2755 = vmatpush1.msra.mxu0 %v2568
        %2756 = vmatprep.subr.mxu0 0.0
        %2757 = vmatpush1.msra.mxu0 %v2573
        %2758 = vmatprep.subr.mxu0 0.0
        %2759 = vmatpush1.msra.mxu0 0.0
        %2760 = vmatprep.subr.mxu0 0.0
        %2761 = vmatpush1.msra.mxu0 0.0
        %2762 = vmatprep.subr.mxu0 0.0
        %2763 = vmatpush1.msra.mxu0 0.0
        %2764 = vmatprep.subr.mxu0 0.0
        %2765 = vmatpush1.msra.mxu0 0.0
        %2766 = vmatprep.subr.mxu0 0.0
        %2767 = vmatpush1.msra.mxu0 0.0
        %2768 = vmatprep.subr.mxu0 0.0
        %2769 = vmatpush1.msra.mxu0 0.0
        %2770 = vmatprep.subr.mxu0 0.0
        %2771 = vmatpush1.msra.mxu0 0.0
        %2772 = vmatprep.subr.mxu0 0.0
        %2773 = vmatpush1.msra.mxu0 0.0
        %2774 = vmatprep.subr.mxu0 0.0
        %2775 = vmatpush1.msra.mxu0 0.0
        %2776 = vmatprep.subr.mxu0 0.0
        %2777 = vmatpush1.msra.mxu0 0.0
        %2778 = vmatprep.subr.mxu0 0.0
        %2779 = vmatpush1.msra.mxu0 0.0
        %2780 = vmatprep.subr.mxu0 0.0
        %2781 = vmatpush1.msra.mxu0 0.0
        %2782 = vmatprep.subr.mxu0 0.0
        %2783 = vmatpush1.msra.mxu0 0.0
        %2784 = vmatprep.subr.mxu0 0.0
        %2785 = vmatpush1.msra.mxu0 0.0
        %2786 = vmatprep.subr.mxu0 0.0
        %2787 = vmatpush1.msra.mxu0 0.0
        %2788 = vmatprep.subr.mxu0 0.0
        %2789 = vmatpush1.msra.mxu0 0.0
        %2790 = vmatprep.subr.mxu0 0.0
        %2791 = vmatpush1.msra.mxu0 0.0
        %2792 = vmatprep.subr.mxu0 0.0
        %2793 = vmatpush1.msra.mxu0 0.0
        %2794 = vmatprep.subr.mxu0 0.0
        %2795 = vmatpush1.msra.mxu0 0.0
        %2796 = vmatprep.subr.mxu0 0.0
        %2797 = vmatpush1.msra.mxu0 0.0
        %2798 = vmatprep.subr.mxu0 0.0
        %2799 = vmatpush1.msra.mxu0 0.0
        %2800 = vmatprep.subr.mxu0 0.0
        %2801 = vmatpush1.msra.mxu0 0.0
        %2802 = vmatprep.subr.mxu0 0.0
        %2803 = vmatpush1.msra.mxu0 0.0
        %2804 = vmatprep.subr.mxu0 0.0
        %2805 = vmatpush1.msra.mxu0 0.0
        %2806 = vmatprep.subr.mxu0 0.0
        %2807 = vmatpush1.msra.mxu0 0.0
        %2808 = vmatprep.subr.mxu0 0.0
        %2809 = vmatpush1.msra.mxu0 0.0
        %2810 = vmatprep.subr.mxu0 0.0
        %2811 = vmatpush1.msra.mxu0 0.0
        %2812 = vmatprep.subr.mxu0 0.0
        %2813 = vmatpush1.msra.mxu0 0.0
        %2814 = vmatprep.subr.mxu0 0.0
        %2815 = vmatpush1.msra.mxu0 0.0
        %2816 = vmatprep.subr.mxu0 0.0
        %2817 = vmatpush1.msra.mxu0 0.0
        %2818 = vmatprep.mubr.f32.mxu0 0.0
        %2819 = vmatmul.mubr.f32.gmra.mrb[0].mxu0 %v2752
        %v2820 = vpop.f32.mrb[0].mxu0
        %v2821 = vadd.f32 0.0, %v2820
        %v2822 = vpop.f32.mrb[0].mxu0
        %2823 = vdwg.mxu0
        %v2825 = vsel %vm944, %v2739, 0
        %2827 = vmatprep.subr.mxu0 0.0
        %2828 = vmatpush1.msra.mxu0 %v2492
        %2829 = vmatprep.subr.mxu0 0.0
        %2830 = vmatpush1.msra.mxu0 0.0
        %2831 = vmatprep.subr.mxu0 0.0
        %2832 = vmatpush1.msra.mxu0 0.0
        %2833 = vmatprep.subr.mxu0 0.0
        %2834 = vmatpush1.msra.mxu0 0.0
        %2835 = vmatprep.subr.mxu0 0.0
        %2836 = vmatpush1.msra.mxu0 0.0
        %2837 = vmatprep.subr.mxu0 0.0
        %2838 = vmatpush1.msra.mxu0 0.0
        %2839 = vmatprep.subr.mxu0 0.0
        %2840 = vmatpush1.msra.mxu0 0.0
        %2841 = vmatprep.subr.mxu0 0.0
        %2842 = vmatpush1.msra.mxu0 0.0
        %2843 = vmatprep.subr.mxu0 0.0
        %2844 = vmatpush1.msra.mxu0 0.0
        %2845 = vmatprep.subr.mxu0 0.0
        %2846 = vmatpush1.msra.mxu0 0.0
        %2847 = vmatprep.subr.mxu0 0.0
        %2848 = vmatpush1.msra.mxu0 0.0
        %2849 = vmatprep.subr.mxu0 0.0
        %2850 = vmatpush1.msra.mxu0 0.0
        %2851 = vmatprep.subr.mxu0 0.0
        %2852 = vmatpush1.msra.mxu0 0.0
        %2853 = vmatprep.subr.mxu0 0.0
        %2854 = vmatpush1.msra.mxu0 0.0
        %2855 = vmatprep.subr.mxu0 0.0
        %2856 = vmatpush1.msra.mxu0 0.0
        %2857 = vmatprep.subr.mxu0 0.0
        %2858 = vmatpush1.msra.mxu0 0.0
        %2859 = vmatprep.subr.mxu0 0.0
        %2860 = vmatpush1.msra.mxu0 0.0
        %2861 = vmatprep.subr.mxu0 0.0
        %2862 = vmatpush1.msra.mxu0 0.0
        %2863 = vmatprep.subr.mxu0 0.0
        %2864 = vmatpush1.msra.mxu0 0.0
        %2865 = vmatprep.subr.mxu0 0.0
        %2866 = vmatpush1.msra.mxu0 0.0
        %2867 = vmatprep.subr.mxu0 0.0
        %2868 = vmatpush1.msra.mxu0 0.0
        %2869 = vmatprep.subr.mxu0 0.0
        %2870 = vmatpush1.msra.mxu0 0.0
        %2871 = vmatprep.subr.mxu0 0.0
        %2872 = vmatpush1.msra.mxu0 0.0
        %2873 = vmatprep.subr.mxu0 0.0
        %2874 = vmatpush1.msra.mxu0 0.0
        %2875 = vmatprep.subr.mxu0 0.0
        %2876 = vmatpush1.msra.mxu0 0.0
        %2877 = vmatprep.subr.mxu0 0.0
        %2878 = vmatpush1.msra.mxu0 0.0
        %2879 = vmatprep.subr.mxu0 0.0
        %2880 = vmatpush1.msra.mxu0 0.0
        %2881 = vmatprep.subr.mxu0 0.0
        %2882 = vmatpush1.msra.mxu0 0.0
        %2883 = vmatprep.subr.mxu0 0.0
        %2884 = vmatpush1.msra.mxu0 0.0
        %2885 = vmatprep.subr.mxu0 0.0
        %2886 = vmatpush1.msra.mxu0 0.0
        %2887 = vmatprep.subr.mxu0 0.0
        %2888 = vmatpush1.msra.mxu0 0.0
        %2889 = vmatprep.subr.mxu0 0.0
        %2890 = vmatpush1.msra.mxu0 0.0
        %2891 = vmatprep.mubr.f32.mxu0 0.0
        %2892 = vmatmul.mubr.f32.gmra.mrb[0].mxu0 %v2825
        %v2893 = vpop.f32.mrb[0].mxu0
        %v2894 = vadd.f32 %v2821, %v2893
        %v2895 = vpop.f32.mrb[0].mxu0
        %2896 = vdwg.mxu0
        %v2897 = vmul.f32 %v2894, %v2750
        %s2898 = scalar_lea.vmem [#allocation10], 192
        %v2899 = vld [vmem:[%s2898] sm:$0xff]
        %v2900 = vld [vmem:[%s2898 + $0x8] sm:$0xff]
        %v2901 = vld [vmem:[%s2898 + $0x10] sm:$0xff]
        %v2902 = vld [vmem:[%s2898 + $0x18] sm:$0xff]
        %v2903 = vld [vmem:[%s2898 + $0x20] sm:$0xff]
        %v2904 = vld [vmem:[%s2898 + $0x28] sm:$0xff]
        %v2905 = vld [vmem:[%s2898 + $0x30] sm:$0xff]
        %v2906 = vld [vmem:[%s2898 + $0x38] sm:$0xff]
        %s2907 = scalar_lea.vmem %s8, 3
        %v2908 = vld [vmem:[%s2907] sm:$0x1]
        %v2910 = vlaneseq
        %v2911 = vshrl.u32 %v2910, 7
        %v2912 = vsub.s32 0, %v2911
        %v2913 = vrot.slane %v2908, %v2912
        %v2916 = vsel %vm867, %v2897, 0
        %2918 = vmatprep.subr.mxu0 0.0
        %2919 = vmatpush1.msra.mxu0 %v2899
        %2920 = vmatprep.subr.mxu0 0.0
        %2921 = vmatpush1.msra.mxu0 %v2900
        %2922 = vmatprep.subr.mxu0 0.0
        %2923 = vmatpush1.msra.mxu0 %v2901
        %2924 = vmatprep.subr.mxu0 0.0
        %2925 = vmatpush1.msra.mxu0 %v2902
        %2926 = vmatprep.subr.mxu0 0.0
        %2927 = vmatpush1.msra.mxu0 %v2903
        %2928 = vmatprep.subr.mxu0 0.0
        %2929 = vmatpush1.msra.mxu0 %v2904
        %2930 = vmatprep.subr.mxu0 0.0
        %2931 = vmatpush1.msra.mxu0 %v2905
        %2932 = vmatprep.subr.mxu0 0.0
        %2933 = vmatpush1.msra.mxu0 %v2906
        %2934 = vmatprep.subr.mxu0 0.0
        %2935 = vmatpush1.msra.mxu0 0.0
        %2936 = vmatprep.subr.mxu0 0.0
        %2937 = vmatpush1.msra.mxu0 0.0
        %2938 = vmatprep.subr.mxu0 0.0
        %2939 = vmatpush1.msra.mxu0 0.0
        %2940 = vmatprep.subr.mxu0 0.0
        %2941 = vmatpush1.msra.mxu0 0.0
        %2942 = vmatprep.subr.mxu0 0.0
        %2943 = vmatpush1.msra.mxu0 0.0
        %2944 = vmatprep.subr.mxu0 0.0
        %2945 = vmatpush1.msra.mxu0 0.0
        %2946 = vmatprep.subr.mxu0 0.0
        %2947 = vmatpush1.msra.mxu0 0.0
        %2948 = vmatprep.subr.mxu0 0.0
        %2949 = vmatpush1.msra.mxu0 0.0
        %2950 = vmatprep.subr.mxu0 0.0
        %2951 = vmatpush1.msra.mxu0 0.0
        %2952 = vmatprep.subr.mxu0 0.0
        %2953 = vmatpush1.msra.mxu0 0.0
        %2954 = vmatprep.subr.mxu0 0.0
        %2955 = vmatpush1.msra.mxu0 0.0
        %2956 = vmatprep.subr.mxu0 0.0
        %2957 = vmatpush1.msra.mxu0 0.0
        %2958 = vmatprep.subr.mxu0 0.0
        %2959 = vmatpush1.msra.mxu0 0.0
        %2960 = vmatprep.subr.mxu0 0.0
        %2961 = vmatpush1.msra.mxu0 0.0
        %2962 = vmatprep.subr.mxu0 0.0
        %2963 = vmatpush1.msra.mxu0 0.0
        %2964 = vmatprep.subr.mxu0 0.0
        %2965 = vmatpush1.msra.mxu0 0.0
        %2966 = vmatprep.subr.mxu0 0.0
        %2967 = vmatpush1.msra.mxu0 0.0
        %2968 = vmatprep.subr.mxu0 0.0
        %2969 = vmatpush1.msra.mxu0 0.0
        %2970 = vmatprep.subr.mxu0 0.0
        %2971 = vmatpush1.msra.mxu0 0.0
        %2972 = vmatprep.subr.mxu0 0.0
        %2973 = vmatpush1.msra.mxu0 0.0
        %2974 = vmatprep.subr.mxu0 0.0
        %2975 = vmatpush1.msra.mxu0 0.0
        %2976 = vmatprep.subr.mxu0 0.0
        %2977 = vmatpush1.msra.mxu0 0.0
        %2978 = vmatprep.subr.mxu0 0.0
        %2979 = vmatpush1.msra.mxu0 0.0
        %2980 = vmatprep.subr.mxu0 0.0
        %2981 = vmatpush1.msra.mxu0 0.0
        %2982 = vmatprep.mubr.f32.mxu0 0.0
        %2983 = vmatmul.mubr.f32.gmra.mrb[0].mxu0 %v2916
        %v2984 = vpop.f32.mrb[0].mxu0
        %v2985 = vadd.f32 %v2913, %v2984
        %v2986 = vpop.f32.mrb[0].mxu0
        %2987 = vdwg.mxu0
        %vm2988 = vcmask 257024
        %v2989 = vsel %vm2988, %v2985, 0.0
        %2990 = vadd.xlane.f32.xlu0 %v2989
        %v2991 = vpop.xlane.xlu0 %2990
        %v2992 = vmul.f32 %v2991, %v1120
        %v2993 = vsub.f32 %v2985, %v2992
        %v2994 = vmul.f32 %v2993, %v2993
        %v2995 = vsel %vm2988, %v2994, 0.0
        %2996 = vadd.xlane.f32.xlu0 %v2995
        %v2997 = vpop.xlane.xlu0 %2996
        %v2998 = vmul.f32 %v2997, %v1120
        %v2999 = vadd.f32 %v2998, 1e-05
        %v3000 = vrsqrt.pop %v2999
        %v3001 = vmul.f32 %v2993, %v3000
        %s3002 = scalar_lea.vmem %s9, 4
        %v3003 = vld [vmem:[%s3002] sm:$0x1]
        %v3005 = vlaneseq
        %v3006 = vshrl.u32 %v3005, 7
        %v3007 = vsub.s32 0, %v3006
        %v3008 = vrot.slane %v3003, %v3007
        %v3010 = vmul.f32 %v3001, %v3008
        %s3011 = scalar_lea.vmem %s10, 4
        %v3012 = vld [vmem:[%s3011] sm:$0x1]
        %v3014 = vlaneseq
        %v3015 = vshrl.u32 %v3014, 7
        %v3016 = vsub.s32 0, %v3015
        %v3017 = vrot.slane %v3012, %v3016
        %v3019 = vadd.f32 %v3010, %v3017
        %3020 = vst.msk [vmem:[%s678] sm:$0xff] %vm712, %v1818
        %3021 = vst.msk [vmem:[%s685] sm:$0xff] %vm712, %v2324
        %3022 = vst.msk [vmem:[%s685 + $0x8] sm:$0xff] %vm712, %v2325
        %3023 = vst.msk [vmem:[%s692] sm:$0xf] %vm2988, %v3019
        %s3024 = sand.u32 %s381, 1
        %s3025 = scalar_lea.sflag [#allocation4], %s3024
        %s3026 = sand.u32 %s381, 1
        %s3027 = smul.addr %s3026, 8
        %s3028 = scalar_lea.vmem [#allocation13], %s3027
        %s3029 = sand.u32 %s43, 1
        %s3030 = scalar_lea.sflag [#allocation15], %s3029
        %s3031 = sand.u32 %s407, 1
        %s3032 = smul.addr %s3031, 16
        %s3033 = scalar_lea.vmem [#allocation14], %s3032
        %s3034 = sand.u32 %s43, 1
        %s3035 = scalar_lea.sflag [#allocation15], %s3034
        %s3036 = sand.u32 %s433, 1
        %s3037 = smul.addr %s3036, 4
        %s3038 = scalar_lea.vmem [#allocation16], %s3037
        // Predicated region
        $region105: #{two_way_attention_block.1} parent=79 // pred_check
          %p3039 = pneg %p391
        $region106: #{two_way_attention_block.1} parent=79 // pred_check_branch
          %3041 = sbr.rel (%p3039) target = $region108
        $region107: #{two_way_attention_block.1} parent=79 // pred_region
          %s3043 = ssub.s32 128, 128
          %3044 = vsyncadd %s3025, %s3043
          %s3045 = smul.addr %s43, 128
          %s3046 = scalar_lea.hbm %s15, %s3045
          %s3048 = sshll.u32 %s3028, 4
          %s3049 = int_to_ptr.vmem [resolvable:$true] %s3048
          %3051 = dma.vmem_to_hbm [thread:$0]  %s3049, 128, %s3046, %s3025
        $region108: #{two_way_attention_block.1} parent=79 // pred_fallthru
          _
        // Predicated region
        $region109: #{two_way_attention_block.1} parent=79 // pred_check
          %p3052 = pneg %p417
        $region110: #{two_way_attention_block.1} parent=79 // pred_check_branch
          %3054 = sbr.rel (%p3052) target = $region112
        $region111: #{two_way_attention_block.1} parent=79 // pred_region
          %s3056 = ssub.s32 256, 256
          %3057 = vsyncadd %s3030, %s3056
          %s3058 = smul.addr %s43, 2
          %s3059 = smul.addr %s3058, 128
          %s3060 = scalar_lea.hbm %s16, %s3059
          %s3061 = sshll.u32 %s3033, 4
          %s3062 = int_to_ptr.vmem [resolvable:$true] %s3061
          %3067 = dma.vmem_to_hbm [thread:$0]  %s3062, 256, %s3060, %s3030, 128, 128, 8
        $region112: #{two_way_attention_block.1} parent=79 // pred_fallthru
          _
        // Predicated region
        $region113: #{two_way_attention_block.1} parent=79 // pred_check
          %p3068 = pneg %p443
        $region114: #{two_way_attention_block.1} parent=79 // pred_check_branch
          %3070 = sbr.rel (%p3068) target = $region116
        $region115: #{two_way_attention_block.1} parent=79 // pred_region
          %s3072 = ssub.s32 64, 64
          %3073 = vsyncadd %s3035, %s3072
          %s3074 = smul.addr %s43, 64
          %s3075 = scalar_lea.hbm %s17, %s3074
          %s3077 = sshll.u32 %s3038, 4
          %s3078 = int_to_ptr.vmem [resolvable:$true] %s3077
          %3080 = dma.vmem_to_hbm [thread:$0]  %s3078, 64, %s3075, %s3035
        $region116: #{two_way_attention_block.1} parent=79 // pred_fallthru
          _
      $region80: #{two_way_attention_block.1} parent=5 // pred_fallthru
        _
      %p3081 = scmp.le.s32.totalorder 2, %s38
      // Predicated region
      $region117: #{two_way_attention_block.1} parent=5 // pred_check
        %p3082 = pneg %p3081
      $region118: #{two_way_attention_block.1} parent=5 // pred_check_branch
        %3084 = sbr.rel (%p3082) target = $region120
      $region119: #{two_way_attention_block.1} parent=5 // pred_region
        %s3085 = ssub.s32 %s38, 2
        // Predicated region
        $region121: #{two_way_attention_block.1} parent=119 // pred_check
          %p3086 = pneg %p397
        $region122: #{two_way_attention_block.1} parent=119 // pred_check_branch
          %3088 = sbr.rel (%p3086) target = $region124
        $region123: #{two_way_attention_block.1} parent=119 // pred_region
          %s3089 = sand.u32 %s382, 1
          %s3090 = scalar_lea.sflag [#allocation4], %s3089
          %s3091 = sand.u32 %s382, 1
          %s3092 = smul.addr %s3091, 8
          %s3093 = scalar_lea.vmem [#allocation13], %s3092
          %3094 = dma.done %s3090, 128
        $region124: #{two_way_attention_block.1} parent=119 // pred_fallthru
          _
        // Predicated region
        $region125: #{two_way_attention_block.1} parent=119 // pred_check
          %p3095 = pneg %p423
        $region126: #{two_way_attention_block.1} parent=119 // pred_check_branch
          %3097 = sbr.rel (%p3095) target = $region128
        $region127: #{two_way_attention_block.1} parent=119 // pred_region
          %s3098 = sand.u32 %s44, 1
          %s3099 = scalar_lea.sflag [#allocation15], %s3098
          %s3100 = sand.u32 %s408, 1
          %s3101 = smul.addr %s3100, 16
          %s3102 = scalar_lea.vmem [#allocation14], %s3101
          %3103 = dma.done %s3099, 256
        $region128: #{two_way_attention_block.1} parent=119 // pred_fallthru
          _
        // Predicated region
        $region129: #{two_way_attention_block.1} parent=119 // pred_check
          %p3104 = pneg %p449
        $region130: #{two_way_attention_block.1} parent=119 // pred_check_branch
          %3106 = sbr.rel (%p3104) target = $region132
        $region131: #{two_way_attention_block.1} parent=119 // pred_region
          %s3107 = sand.u32 %s44, 1
          %s3108 = scalar_lea.sflag [#allocation15], %s3107
          %s3109 = sand.u32 %s434, 1
          %s3110 = smul.addr %s3109, 4
          %s3111 = scalar_lea.vmem [#allocation16], %s3110
          %3112 = dma.done %s3108, 64
        $region132: #{two_way_attention_block.1} parent=119 // pred_fallthru
          _
      $region120: #{two_way_attention_block.1} parent=5 // pred_fallthru
        _
    $region6: #{two_way_attention_block.1} parent=1 // loop_footer
      %s42 = sadd.s32 1, %s38
    $region7: #{two_way_attention_block.1} parent=1 // loop_footer_branch
      %37 = sbr.rel target = $region3
    $region8: #{two_way_attention_block.1} parent=1 // loop_exit
      _
    %3113 = vsyncpa [#allocation3], 1
    %s3114 = scalar_lea.sflag [#allocation3], 1
    %3115 = vsyncpa %s3114, 1
    %3116 = vsyncpa [#allocation6], 1
    %s3117 = scalar_lea.sflag [#allocation6], 1
    %3118 = vsyncpa %s3117, 1
    %3119 = vsyncpa [#allocation9], 1
    %3120 = vsyncpa [#allocation12], 1
    %3121 = vsyncpa [#allocation4], 1
    %s3122 = scalar_lea.sflag [#allocation4], 1
    %3123 = vsyncpa %s3122, 1
    %3124 = vsyncpa [#allocation15], 1
    %s3125 = scalar_lea.sflag [#allocation15], 1
    %3126 = vsyncpa %s3125, 1

</llo_original>
